<compile_context>
chip_gen: v5e
topology: v5e:2x2
jax: 0.10.0
libtpu: 0.0.40
codegen_flags: <defaults>
</compile_context>

<pallas_src>
import functools
import math

import jax
import jax.numpy as jnp
from jax import lax
from jax.experimental import pallas as pl
from jax.experimental.pallas import tpu as pltpu


# ------------------------------- fused kernel ------------------------------- #

def _fused_vgg_kernel(x_ref, w1c_ref, b1c_ref, w2c_ref, b2c_ref,
                      w1p_ref, b1l_ref, w2l_ref, b2l_ref, out_ref,
                      sca_ref, scb_ref, scc_ref, scd_ref,
                      *, H1, W1, C0, C1, C2, D1, NC, M1, M2, mult):
    f32 = jnp.float32
    Hp1, Wp1 = H1 + 2, W1 + 2
    F1 = Hp1 * Wp1
    H2, W2 = H1 // 2, W1 // 2
    Hp2, Wp2 = H2 + 2, W2 + 2
    F2 = Hp2 * Wp2
    H3, W3 = H2 // 2, W2 // 2
    Hp3, Wp3 = H3 + 2, W3 + 2

    # ---- conv1 (3x3, pad=1) + bias + ReLU over the whole padded frame -------
    acc1 = jnp.zeros((F1, C1), f32)
    for kh in range(3):
        for kw in range(3):
            off = (kh - 1) * Wp1 + (kw - 1)
            patch = x_ref[pl.ds(M1 + off, F1), :]              # (F1, C0)
            acc1 = acc1 + jnp.dot(patch, w1c_ref[kh * 3 + kw],
                                  preferred_element_type=f32)
    sca_ref[...] = jnp.maximum(acc1 + b1c_ref[...], 0.0)       # (F1, C1)

    # ---- maxpool 2x2/2 -> padded frame2 (zeros supply conv2's padding) ------
    scb_ref[...] = jnp.zeros_like(scb_ref)
    for h2 in range(H2):
        base = (2 * h2 + 1) * Wp1 + 1
        r00 = sca_ref[pl.ds(base,           W2, stride=2), :]
        r01 = sca_ref[pl.ds(base + 1,       W2, stride=2), :]
        r10 = sca_ref[pl.ds(base + Wp1,     W2, stride=2), :]
        r11 = sca_ref[pl.ds(base + Wp1 + 1, W2, stride=2), :]
        pooled = jnp.maximum(jnp.maximum(r00, r01), jnp.maximum(r10, r11))
        scb_ref[pl.ds(M2 + (h2 + 1) * Wp2 + 1, W2), :] = pooled

    # ---- conv2 (3x3, pad=1) + bias + ReLU ------------------------------------
    acc2 = jnp.zeros((F2, C2), f32)
    for kh in range(3):
        for kw in range(3):
            off = (kh - 1) * Wp2 + (kw - 1)
            patch = scb_ref[pl.ds(M2 + off, F2), :]            # (F2, C1)
            acc2 = acc2 + jnp.dot(patch, w2c_ref[kh * 3 + kw],
                                  preferred_element_type=f32)
    scc_ref[...] = jnp.maximum(acc2 + b2c_ref[...], 0.0)       # (F2, C2)

    # ---- maxpool 2x2/2 -> padded frame3 -------------------------------------
    scd_ref[...] = jnp.zeros_like(scd_ref)
    for h3 in range(H3):
        base = (2 * h3 + 1) * Wp2 + 1
        r00 = scc_ref[pl.ds(base,           W3, stride=2), :]
        r01 = scc_ref[pl.ds(base + 1,       W3, stride=2), :]
        r10 = scc_ref[pl.ds(base + Wp2,     W3, stride=2), :]
        r11 = scc_ref[pl.ds(base + Wp2 + 1, W3, stride=2), :]
        pooled = jnp.maximum(jnp.maximum(r00, r01), jnp.maximum(r10, r11))
        scd_ref[pl.ds((h3 + 1) * Wp3 + 1, W3), :] = pooled

    # ---- adaptive avgpool (2x2) + flatten folded into linear1 (via w1p) -----
    kh3, kw3 = H3 // 2, W3 // 2
    inv = 1.0 / float(kh3 * kw3)
    y1 = b1l_ref[...]                                           # (1, D1)
    for i in range(2):
        for j in range(2):
            s = i * 2 + j
            acc = jnp.zeros((1, C2), f32)
            for di in range(kh3):
                for dj in range(kw3):
                    r = (i * kh3 + di + 1) * Wp3 + (j * kw3 + dj + 1)
                    acc = acc + scd_ref[pl.ds(r, 1), :]
            y1 = y1 + jnp.dot(acc * inv, w1p_ref[s],
                              preferred_element_type=f32)
    y1 = jnp.maximum(y1, 0.0)

    # ---- linear2 + output scaling (self.mult) --------------------------------
    y2 = jnp.dot(y1, w2l_ref[...], preferred_element_type=f32) + b2l_ref[...]
    out_ref[...] = (mult * y2).astype(out_ref.dtype)


# --------------------------------- wrapper ---------------------------------- #

def classifier_copy_vgg_forward(x, params, mult=2.0):
    """x: (B, C0, H, W) NCHW float32.  Returns (B, n_classes)."""
    B, C0, H1, W1 = x.shape
    C1 = params["wc1"].shape[0]
    C2 = params["wc2"].shape[0]
    D1 = params["wl1"].shape[0]
    NC = params["wl2"].shape[0]
    assert H1 % 8 == 0 and W1 % 8 == 0, "needs two 2x2 pools + even 2x2 adaptive bins"
    assert params["wl1"].shape[1] == C2 * 4

    Hp1, Wp1 = H1 + 2, W1 + 2
    F1 = Hp1 * Wp1
    H2, W2 = H1 // 2, W1 // 2
    Hp2, Wp2 = H2 + 2, W2 + 2
    F2 = Hp2 * Wp2
    H3, W3 = H2 // 2, W2 // 2
    Hp3, Wp3 = H3 + 2, W3 + 2
    F3 = Hp3 * Wp3
    M1 = ((Wp1 + 1 + 7) // 8) * 8      # window-load margin (>= Wp1+1, 8-aligned)
    M2 = ((Wp2 + 1 + 7) // 8) * 8

    # NCHW -> zero-padded, flattened "frame" layout (B, M1+F1+M1, C0); channels on lanes.
    xt = jnp.transpose(x, (0, 2, 3, 1))
    xp = jnp.pad(xt, ((0, 0), (1, 1), (1, 1), (0, 0)))
    xf = jnp.pad(xp.reshape(B, F1, C0), ((0, 0), (M1, M1), (0, 0)))

    # One-time weight relayout (layout plumbing only; torch semantics preserved).
    w1c = jnp.transpose(params["wc1"], (2, 3, 1, 0)).reshape(9, C0, C1)
    b1c = params["bc1"].reshape(1, C1)
    w2c = jnp.transpose(params["wc2"], (2, 3, 1, 0)).reshape(9, C1, C2)
    b2c = params["bc2"].reshape(1, C2)
    # torch flatten order is c*4 + (i*2+j): fold the permutation into the FC weight.
    w1p = jnp.transpose(params["wl1"].reshape(D1, C2, 4), (2, 1, 0))   # (4, C2, D1)
    b1l = params["bl1"].reshape(1, D1)
    w2l = params["wl2"].T                                              # (D1, NC)
    b2l = params["bl2"].reshape(1, NC)

    kern = functools.partial(
        _fused_vgg_kernel, H1=H1, W1=W1, C0=C0, C1=C1, C2=C2, D1=D1, NC=NC,
        M1=M1, M2=M2, mult=float(mult))

    out = pl.pallas_call(
        kern,
        out_shape=jax.ShapeDtypeStruct((B, 1, NC), jnp.float32),
        grid=(B,),
        in_specs=[
            pl.BlockSpec((None, F1 + 2 * M1, C0), lambda b: (b, 0, 0)),
            pl.BlockSpec((9, C0, C1), lambda b: (0, 0, 0)),
            pl.BlockSpec((1, C1), lambda b: (0, 0)),
            pl.BlockSpec((9, C1, C2), lambda b: (0, 0, 0)),
            pl.BlockSpec((1, C2), lambda b: (0, 0)),
            pl.BlockSpec((4, C2, D1), lambda b: (0, 0, 0)),
            pl.BlockSpec((1, D1), lambda b: (0, 0)),
            pl.BlockSpec((D1, NC), lambda b: (0, 0)),
            pl.BlockSpec((1, NC), lambda b: (0, 0)),
        ],
        out_specs=pl.BlockSpec((None, 1, NC), lambda b: (b, 0, 0)),
        scratch_shapes=[
            pltpu.VMEM((F1, C1), jnp.float32),               # conv1 output frame
            pltpu.VMEM((M2 + F2 + M2, C1), jnp.float32),     # pooled frame2 (+margins)
            pltpu.VMEM((F2, C2), jnp.float32),               # conv2 output frame
            pltpu.VMEM((F3, C2), jnp.float32),               # pooled frame3
        ],
        compiler_params=pltpu.CompilerParams(
            dimension_semantics=("parallel",)),
    )(xf, w1c, b1c, w2c, b2c, w1p, b1l, w2l, b2l)
    return out.reshape(B, NC)


# ----------------------------- pure-JAX reference --------------------------- #

def reference_forward(x, params, mult=2.0):
    hp = lax.Precision.HIGHEST
    y = lax.conv_general_dilated(
        x, params["wc1"], (1, 1), ((1, 1), (1, 1)),
        dimension_numbers=("NCHW", "OIHW", "NCHW"), precision=hp)
    y = jnp.maximum(y + params["bc1"][None, :, None, None], 0.0)
    y = lax.reduce_window(y, -jnp.inf, lax.max, (1, 1, 2, 2), (1, 1, 2, 2), "VALID")
    y = lax.conv_general_dilated(
        y, params["wc2"], (1, 1), ((1, 1), (1, 1)),
        dimension_numbers=("NCHW", "OIHW", "NCHW"), precision=hp)
    y = jnp.maximum(y + params["bc2"][None, :, None, None], 0.0)
    y = lax.reduce_window(y, -jnp.inf, lax.max, (1, 1, 2, 2), (1, 1, 2, 2), "VALID")
    # AdaptiveAvgPool2d((2,2)) on an evenly divisible input = avg pool k=s=H/2
    k = y.shape[2] // 2
    y = lax.reduce_window(y, 0.0, lax.add, (1, 1, k, k), (1, 1, k, k), "VALID") / float(k * k)
    flat = y.reshape(y.shape[0], -1)
    y1 = jnp.maximum(jnp.dot(flat, params["wl1"].T, precision=hp) + params["bl1"], 0.0)
    y2 = jnp.dot(y1, params["wl2"].T, precision=hp) + params["bl2"]
    return mult * y2


# ---------------------------- parameter construction ------------------------ #

def init_params(key, C0, C1, C2, D1, NC):
    ks = jax.random.split(key, 8)

    def u(k, shape, fan_in):
        b = 1.0 / math.sqrt(fan_in)
        return jax.random.uniform(k, shape, jnp.float32, -b, b)

    return {
        "wc1": u(ks[0], (C1, C0, 3, 3), C0 * 9),   # torch Conv2d weight (O,I,kh,kw)
        "bc1": u(ks[1], (C1,), C0 * 9),
        "wc2": u(ks[2], (C2, C1, 3, 3), C1 * 9),
        "bc2": u(ks[3], (C2,), C1 * 9),
        "wl1": u(ks[4], (D1, C2 * 4), C2 * 4),     # torch Linear weight (out, in)
        "bl1": u(ks[5], (D1,), C2 * 4),
        "wl2": u(ks[6], (NC, D1), D1),
        "bl2": u(ks[7], (NC,), D1),
    }


# ------------------------------------ main ----------------------------------- #

if __name__ == "__main__":
    key = jax.random.PRNGKey(0)
    kx, kp = jax.random.split(key)

    # Pruned copy of a small VGG-ish source model (start_idx=1, keep=1/2, mult=2):
    # conv widths 16->8, 32->16; hidden FC 32->16; final FC keeps n_classes=10.
    B, C0, H, W = 2, 3, 16, 16
    C1, C2 = 8, 16
    D1, NC = 16, 10
    mult = 2.0

    x = jax.random.normal(kx, (B, C0, H, W), jnp.float32)
    params = init_params(kp, C0, C1, C2, D1, NC)

    out = jax.block_until_ready(classifier_copy_vgg_forward(x, params, mult=mult))
    assert out.shape == (B, NC), out.shape

    ref = jax.block_until_ready(reference_forward(x, params, mult=mult))
    err = float(jnp.max(jnp.abs(out - ref)))
    assert jnp.allclose(out, ref, atol=2e-3, rtol=2e-3), err

    print("KERNEL_OK")
</pallas_src>

<mosaic_0001>
module attributes {stable_mosaic.version = 11 : i64} {
  func.func @_fused_vgg_kernel(%arg0: i32, %arg1: memref<1x372x3xf32, #tpu.memory_space<vmem>>, %arg2: memref<9x3x8xf32, #tpu.memory_space<vmem>>, %arg3: memref<1x8xf32, #tpu.memory_space<vmem>>, %arg4: memref<9x8x16xf32, #tpu.memory_space<vmem>>, %arg5: memref<1x16xf32, #tpu.memory_space<vmem>>, %arg6: memref<4x16x16xf32, #tpu.memory_space<vmem>>, %arg7: memref<1x16xf32, #tpu.memory_space<vmem>>, %arg8: memref<16x10xf32, #tpu.memory_space<vmem>>, %arg9: memref<1x10xf32, #tpu.memory_space<vmem>>, %arg10: memref<1x1x10xf32, #tpu.memory_space<vmem>>, %arg11: memref<324x8xf32, #tpu.memory_space<vmem>>, %arg12: memref<132x8xf32, #tpu.memory_space<vmem>>, %arg13: memref<100x16xf32, #tpu.memory_space<vmem>>, %arg14: memref<36x16xf32, #tpu.memory_space<vmem>>) attributes {dimension_semantics = [#tpu.dimension_semantics<parallel>], iteration_bounds = array<i64: 2>, scalar_prefetch = 0 : i64, scratch_operands = 4 : i64, tpu.core_type = #tpu.core_type<tc>, window_params = [{transform_indices = @transform_0, window_bounds = array<i64: 1, 372, 3>}, {pipeline_mode = #tpu.pipeline_mode<synchronous>, transform_indices = @transform_1, window_bounds = array<i64: 9, 3, 8>}, {pipeline_mode = #tpu.pipeline_mode<synchronous>, transform_indices = @transform_2, window_bounds = array<i64: 1, 8>}, {pipeline_mode = #tpu.pipeline_mode<synchronous>, transform_indices = @transform_3, window_bounds = array<i64: 9, 8, 16>}, {pipeline_mode = #tpu.pipeline_mode<synchronous>, transform_indices = @transform_4, window_bounds = array<i64: 1, 16>}, {pipeline_mode = #tpu.pipeline_mode<synchronous>, transform_indices = @transform_5, window_bounds = array<i64: 4, 16, 16>}, {pipeline_mode = #tpu.pipeline_mode<synchronous>, transform_indices = @transform_6, window_bounds = array<i64: 1, 16>}, {pipeline_mode = #tpu.pipeline_mode<synchronous>, transform_indices = @transform_7, window_bounds = array<i64: 16, 10>}, {pipeline_mode = #tpu.pipeline_mode<synchronous>, transform_indices = @transform_8, window_bounds = array<i64: 1, 10>}, {transform_indices = @transform_9, window_bounds = array<i64: 1, 1, 10>}]} {
    %cst = arith.constant 0.000000e+00 : f32
    %0 = vector.broadcast %cst : f32 to vector<324x8xf32>
    %c0 = arith.constant 0 : index
    %c5 = arith.constant 5 : index
    %c0_0 = arith.constant 0 : index
    %1 = vector.load %arg1[%c0, %c5, %c0_0] : memref<1x372x3xf32, #tpu.memory_space<vmem>>, vector<1x324x3xf32>
    %2 = vector.shape_cast %1 : vector<1x324x3xf32> to vector<324x3xf32>
    %c0_1 = arith.constant 0 : index
    %c0_2 = arith.constant 0 : index
    %c0_3 = arith.constant 0 : index
    %3 = vector.load %arg2[%c0_1, %c0_2, %c0_3] : memref<9x3x8xf32, #tpu.memory_space<vmem>>, vector<1x3x8xf32>
    %4 = vector.shape_cast %3 : vector<1x3x8xf32> to vector<3x8xf32>
    %cst_4 = arith.constant dense<0.000000e+00> : vector<324x8xf32>
    %5 = tpu.matmul %2, %4, %cst_4 {dimension_numbers = #tpu.dot_dimension_numbers<[1], [0], [0], [1], [0, 0, 1, 1], [], []>} : vector<324x3xf32>, vector<3x8xf32>, vector<324x8xf32> -> vector<324x8xf32>
    %6 = arith.addf %0, %5 : vector<324x8xf32>
    %c0_5 = arith.constant 0 : index
    %c6 = arith.constant 6 : index
    %c0_6 = arith.constant 0 : index
    %7 = vector.load %arg1[%c0_5, %c6, %c0_6] : memref<1x372x3xf32, #tpu.memory_space<vmem>>, vector<1x324x3xf32>
    %8 = vector.shape_cast %7 : vector<1x324x3xf32> to vector<324x3xf32>
    %c1 = arith.constant 1 : index
    %c0_7 = arith.constant 0 : index
    %c0_8 = arith.constant 0 : index
    %9 = vector.load %arg2[%c1, %c0_7, %c0_8] : memref<9x3x8xf32, #tpu.memory_space<vmem>>, vector<1x3x8xf32>
    %10 = vector.shape_cast %9 : vector<1x3x8xf32> to vector<3x8xf32>
    %cst_9 = arith.constant dense<0.000000e+00> : vector<324x8xf32>
    %11 = tpu.matmul %8, %10, %cst_9 {dimension_numbers = #tpu.dot_dimension_numbers<[1], [0], [0], [1], [0, 0, 1, 1], [], []>} : vector<324x3xf32>, vector<3x8xf32>, vector<324x8xf32> -> vector<324x8xf32>
    %12 = arith.addf %6, %11 : vector<324x8xf32>
    %c0_10 = arith.constant 0 : index
    %c7 = arith.constant 7 : index
    %c0_11 = arith.constant 0 : index
    %13 = vector.load %arg1[%c0_10, %c7, %c0_11] : memref<1x372x3xf32, #tpu.memory_space<vmem>>, vector<1x324x3xf32>
    %14 = vector.shape_cast %13 : vector<1x324x3xf32> to vector<324x3xf32>
    %c2 = arith.constant 2 : index
    %c0_12 = arith.constant 0 : index
    %c0_13 = arith.constant 0 : index
    %15 = vector.load %arg2[%c2, %c0_12, %c0_13] : memref<9x3x8xf32, #tpu.memory_space<vmem>>, vector<1x3x8xf32>
    %16 = vector.shape_cast %15 : vector<1x3x8xf32> to vector<3x8xf32>
    %cst_14 = arith.constant dense<0.000000e+00> : vector<324x8xf32>
    %17 = tpu.matmul %14, %16, %cst_14 {dimension_numbers = #tpu.dot_dimension_numbers<[1], [0], [0], [1], [0, 0, 1, 1], [], []>} : vector<324x3xf32>, vector<3x8xf32>, vector<324x8xf32> -> vector<324x8xf32>
    %18 = arith.addf %12, %17 : vector<324x8xf32>
    %c0_15 = arith.constant 0 : index
    %c23 = arith.constant 23 : index
    %c0_16 = arith.constant 0 : index
    %19 = vector.load %arg1[%c0_15, %c23, %c0_16] : memref<1x372x3xf32, #tpu.memory_space<vmem>>, vector<1x324x3xf32>
    %20 = vector.shape_cast %19 : vector<1x324x3xf32> to vector<324x3xf32>
    %c3 = arith.constant 3 : index
    %c0_17 = arith.constant 0 : index
    %c0_18 = arith.constant 0 : index
    %21 = vector.load %arg2[%c3, %c0_17, %c0_18] : memref<9x3x8xf32, #tpu.memory_space<vmem>>, vector<1x3x8xf32>
    %22 = vector.shape_cast %21 : vector<1x3x8xf32> to vector<3x8xf32>
    %cst_19 = arith.constant dense<0.000000e+00> : vector<324x8xf32>
    %23 = tpu.matmul %20, %22, %cst_19 {dimension_numbers = #tpu.dot_dimension_numbers<[1], [0], [0], [1], [0, 0, 1, 1], [], []>} : vector<324x3xf32>, vector<3x8xf32>, vector<324x8xf32> -> vector<324x8xf32>
    %24 = arith.addf %18, %23 : vector<324x8xf32>
    %c0_20 = arith.constant 0 : index
    %c24 = arith.constant 24 : index
    %c0_21 = arith.constant 0 : index
    %25 = vector.load %arg1[%c0_20, %c24, %c0_21] : memref<1x372x3xf32, #tpu.memory_space<vmem>>, vector<1x324x3xf32>
    %26 = vector.shape_cast %25 : vector<1x324x3xf32> to vector<324x3xf32>
    %c4 = arith.constant 4 : index
    %c0_22 = arith.constant 0 : index
    %c0_23 = arith.constant 0 : index
    %27 = vector.load %arg2[%c4, %c0_22, %c0_23] : memref<9x3x8xf32, #tpu.memory_space<vmem>>, vector<1x3x8xf32>
    %28 = vector.shape_cast %27 : vector<1x3x8xf32> to vector<3x8xf32>
    %cst_24 = arith.constant dense<0.000000e+00> : vector<324x8xf32>
    %29 = tpu.matmul %26, %28, %cst_24 {dimension_numbers = #tpu.dot_dimension_numbers<[1], [0], [0], [1], [0, 0, 1, 1], [], []>} : vector<324x3xf32>, vector<3x8xf32>, vector<324x8xf32> -> vector<324x8xf32>
    %30 = arith.addf %24, %29 : vector<324x8xf32>
    %c0_25 = arith.constant 0 : index
    %c25 = arith.constant 25 : index
    %c0_26 = arith.constant 0 : index
    %31 = vector.load %arg1[%c0_25, %c25, %c0_26] : memref<1x372x3xf32, #tpu.memory_space<vmem>>, vector<1x324x3xf32>
    %32 = vector.shape_cast %31 : vector<1x324x3xf32> to vector<324x3xf32>
    %c5_27 = arith.constant 5 : index
    %c0_28 = arith.constant 0 : index
    %c0_29 = arith.constant 0 : index
    %33 = vector.load %arg2[%c5_27, %c0_28, %c0_29] : memref<9x3x8xf32, #tpu.memory_space<vmem>>, vector<1x3x8xf32>
    %34 = vector.shape_cast %33 : vector<1x3x8xf32> to vector<3x8xf32>
    %cst_30 = arith.constant dense<0.000000e+00> : vector<324x8xf32>
    %35 = tpu.matmul %32, %34, %cst_30 {dimension_numbers = #tpu.dot_dimension_numbers<[1], [0], [0], [1], [0, 0, 1, 1], [], []>} : vector<324x3xf32>, vector<3x8xf32>, vector<324x8xf32> -> vector<324x8xf32>
    %36 = arith.addf %30, %35 : vector<324x8xf32>
    %c0_31 = arith.constant 0 : index
    %c41 = arith.constant 41 : index
    %c0_32 = arith.constant 0 : index
    %37 = vector.load %arg1[%c0_31, %c41, %c0_32] : memref<1x372x3xf32, #tpu.memory_space<vmem>>, vector<1x324x3xf32>
    %38 = vector.shape_cast %37 : vector<1x324x3xf32> to vector<324x3xf32>
    %c6_33 = arith.constant 6 : index
    %c0_34 = arith.constant 0 : index
    %c0_35 = arith.constant 0 : index
    %39 = vector.load %arg2[%c6_33, %c0_34, %c0_35] : memref<9x3x8xf32, #tpu.memory_space<vmem>>, vector<1x3x8xf32>
    %40 = vector.shape_cast %39 : vector<1x3x8xf32> to vector<3x8xf32>
    %cst_36 = arith.constant dense<0.000000e+00> : vector<324x8xf32>
    %41 = tpu.matmul %38, %40, %cst_36 {dimension_numbers = #tpu.dot_dimension_numbers<[1], [0], [0], [1], [0, 0, 1, 1], [], []>} : vector<324x3xf32>, vector<3x8xf32>, vector<324x8xf32> -> vector<324x8xf32>
    %42 = arith.addf %36, %41 : vector<324x8xf32>
    %c0_37 = arith.constant 0 : index
    %c42 = arith.constant 42 : index
    %c0_38 = arith.constant 0 : index
    %43 = vector.load %arg1[%c0_37, %c42, %c0_38] : memref<1x372x3xf32, #tpu.memory_space<vmem>>, vector<1x324x3xf32>
    %44 = vector.shape_cast %43 : vector<1x324x3xf32> to vector<324x3xf32>
    %c7_39 = arith.constant 7 : index
    %c0_40 = arith.constant 0 : index
    %c0_41 = arith.constant 0 : index
    %45 = vector.load %arg2[%c7_39, %c0_40, %c0_41] : memref<9x3x8xf32, #tpu.memory_space<vmem>>, vector<1x3x8xf32>
    %46 = vector.shape_cast %45 : vector<1x3x8xf32> to vector<3x8xf32>
    %cst_42 = arith.constant dense<0.000000e+00> : vector<324x8xf32>
    %47 = tpu.matmul %44, %46, %cst_42 {dimension_numbers = #tpu.dot_dimension_numbers<[1], [0], [0], [1], [0, 0, 1, 1], [], []>} : vector<324x3xf32>, vector<3x8xf32>, vector<324x8xf32> -> vector<324x8xf32>
    %48 = arith.addf %42, %47 : vector<324x8xf32>
    %c0_43 = arith.constant 0 : index
    %c43 = arith.constant 43 : index
    %c0_44 = arith.constant 0 : index
    %49 = vector.load %arg1[%c0_43, %c43, %c0_44] : memref<1x372x3xf32, #tpu.memory_space<vmem>>, vector<1x324x3xf32>
    %50 = vector.shape_cast %49 : vector<1x324x3xf32> to vector<324x3xf32>
    %c8 = arith.constant 8 : index
    %c0_45 = arith.constant 0 : index
    %c0_46 = arith.constant 0 : index
    %51 = vector.load %arg2[%c8, %c0_45, %c0_46] : memref<9x3x8xf32, #tpu.memory_space<vmem>>, vector<1x3x8xf32>
    %52 = vector.shape_cast %51 : vector<1x3x8xf32> to vector<3x8xf32>
    %cst_47 = arith.constant dense<0.000000e+00> : vector<324x8xf32>
    %53 = tpu.matmul %50, %52, %cst_47 {dimension_numbers = #tpu.dot_dimension_numbers<[1], [0], [0], [1], [0, 0, 1, 1], [], []>} : vector<324x3xf32>, vector<3x8xf32>, vector<324x8xf32> -> vector<324x8xf32>
    %54 = arith.addf %48, %53 : vector<324x8xf32>
    %c0_48 = arith.constant 0 : index
    %c0_49 = arith.constant 0 : index
    %55 = vector.load %arg3[%c0_48, %c0_49] : memref<1x8xf32, #tpu.memory_space<vmem>>, vector<1x8xf32>
    %56 = vector.broadcast %55 : vector<1x8xf32> to vector<324x8xf32>
    %57 = arith.addf %54, %56 : vector<324x8xf32>
    %cst_50 = arith.constant 0.000000e+00 : f32
    %58 = vector.broadcast %cst_50 : f32 to vector<324x8xf32>
    %59 = arith.maximumf %57, %58 : vector<324x8xf32>
    %c0_51 = arith.constant 0 : index
    %c0_52 = arith.constant 0 : index
    %60 = vector.load %arg11[%c0_51, %c0_52] : memref<324x8xf32, #tpu.memory_space<vmem>>, vector<324x8xf32>
    tpu.vector_store %arg11[%c0_51, %c0_52], %59 {strides = array<i32>} : memref<324x8xf32, #tpu.memory_space<vmem>>, vector<324x8xf32>,
    %cst_53 = arith.constant 0.000000e+00 : f32
    %61 = vector.broadcast %cst_53 : f32 to vector<132x8xf32>
    %c0_54 = arith.constant 0 : index
    %c0_55 = arith.constant 0 : index
    %62 = vector.load %arg12[%c0_54, %c0_55] : memref<132x8xf32, #tpu.memory_space<vmem>>, vector<132x8xf32>
    tpu.vector_store %arg12[%c0_54, %c0_55], %61 {strides = array<i32>} : memref<132x8xf32, #tpu.memory_space<vmem>>, vector<132x8xf32>,
    %c19 = arith.constant 19 : index
    %c0_56 = arith.constant 0 : index
    %63 = tpu.strided_load %arg11[%c19, %c0_56] {strides = array<i32: 2, 1>} : memref<324x8xf32, #tpu.memory_space<vmem>>, vector<8x8xf32>
    %c20 = arith.constant 20 : index
    %c0_57 = arith.constant 0 : index
    %64 = tpu.strided_load %arg11[%c20, %c0_57] {strides = array<i32: 2, 1>} : memref<324x8xf32, #tpu.memory_space<vmem>>, vector<8x8xf32>
    %c37 = arith.constant 37 : index
    %c0_58 = arith.constant 0 : index
    %65 = tpu.strided_load %arg11[%c37, %c0_58] {strides = array<i32: 2, 1>} : memref<324x8xf32, #tpu.memory_space<vmem>>, vector<8x8xf32>
    %c38 = arith.constant 38 : index
    %c0_59 = arith.constant 0 : index
    %66 = tpu.strided_load %arg11[%c38, %c0_59] {strides = array<i32: 2, 1>} : memref<324x8xf32, #tpu.memory_space<vmem>>, vector<8x8xf32>
    %67 = arith.maximumf %63, %64 : vector<8x8xf32>
    %68 = arith.maximumf %65, %66 : vector<8x8xf32>
    %69 = arith.maximumf %67, %68 : vector<8x8xf32>
    %c27 = arith.constant 27 : index
    %c0_60 = arith.constant 0 : index
    %70 = vector.load %arg12[%c27, %c0_60] : memref<132x8xf32, #tpu.memory_space<vmem>>, vector<8x8xf32>
    tpu.vector_store %arg12[%c27, %c0_60], %69 {strides = array<i32>} : memref<132x8xf32, #tpu.memory_space<vmem>>, vector<8x8xf32>,
    %c55 = arith.constant 55 : index
    %c0_61 = arith.constant 0 : index
    %71 = tpu.strided_load %arg11[%c55, %c0_61] {strides = array<i32: 2, 1>} : memref<324x8xf32, #tpu.memory_space<vmem>>, vector<8x8xf32>
    %c56 = arith.constant 56 : index
    %c0_62 = arith.constant 0 : index
    %72 = tpu.strided_load %arg11[%c56, %c0_62] {strides = array<i32: 2, 1>} : memref<324x8xf32, #tpu.memory_space<vmem>>, vector<8x8xf32>
    %c73 = arith.constant 73 : index
    %c0_63 = arith.constant 0 : index
    %73 = tpu.strided_load %arg11[%c73, %c0_63] {strides = array<i32: 2, 1>} : memref<324x8xf32, #tpu.memory_space<vmem>>, vector<8x8xf32>
    %c74 = arith.constant 74 : index
    %c0_64 = arith.constant 0 : index
    %74 = tpu.strided_load %arg11[%c74, %c0_64] {strides = array<i32: 2, 1>} : memref<324x8xf32, #tpu.memory_space<vmem>>, vector<8x8xf32>
    %75 = arith.maximumf %71, %72 : vector<8x8xf32>
    %76 = arith.maximumf %73, %74 : vector<8x8xf32>
    %77 = arith.maximumf %75, %76 : vector<8x8xf32>
    %c37_65 = arith.constant 37 : index
    %c0_66 = arith.constant 0 : index
    %78 = vector.load %arg12[%c37_65, %c0_66] : memref<132x8xf32, #tpu.memory_space<vmem>>, vector<8x8xf32>
    tpu.vector_store %arg12[%c37_65, %c0_66], %77 {strides = array<i32>} : memref<132x8xf32, #tpu.memory_space<vmem>>, vector<8x8xf32>,
    %c91 = arith.constant 91 : index
    %c0_67 = arith.constant 0 : index
    %79 = tpu.strided_load %arg11[%c91, %c0_67] {strides = array<i32: 2, 1>} : memref<324x8xf32, #tpu.memory_space<vmem>>, vector<8x8xf32>
    %c92 = arith.constant 92 : index
    %c0_68 = arith.constant 0 : index
    %80 = tpu.strided_load %arg11[%c92, %c0_68] {strides = array<i32: 2, 1>} : memref<324x8xf32, #tpu.memory_space<vmem>>, vector<8x8xf32>
    %c109 = arith.constant 109 : index
    %c0_69 = arith.constant 0 : index
    %81 = tpu.strided_load %arg11[%c109, %c0_69] {strides = array<i32: 2, 1>} : memref<324x8xf32, #tpu.memory_space<vmem>>, vector<8x8xf32>
    %c110 = arith.constant 110 : index
    %c0_70 = arith.constant 0 : index
    %82 = tpu.strided_load %arg11[%c110, %c0_70] {strides = array<i32: 2, 1>} : memref<324x8xf32, #tpu.memory_space<vmem>>, vector<8x8xf32>
    %83 = arith.maximumf %79, %80 : vector<8x8xf32>
    %84 = arith.maximumf %81, %82 : vector<8x8xf32>
    %85 = arith.maximumf %83, %84 : vector<8x8xf32>
    %c47 = arith.constant 47 : index
    %c0_71 = arith.constant 0 : index
    %86 = vector.load %arg12[%c47, %c0_71] : memref<132x8xf32, #tpu.memory_space<vmem>>, vector<8x8xf32>
    tpu.vector_store %arg12[%c47, %c0_71], %85 {strides = array<i32>} : memref<132x8xf32, #tpu.memory_space<vmem>>, vector<8x8xf32>,
    %c127 = arith.constant 127 : index
    %c0_72 = arith.constant 0 : index
    %87 = tpu.strided_load %arg11[%c127, %c0_72] {strides = array<i32: 2, 1>} : memref<324x8xf32, #tpu.memory_space<vmem>>, vector<8x8xf32>
    %c128 = arith.constant 128 : index
    %c0_73 = arith.constant 0 : index
    %88 = tpu.strided_load %arg11[%c128, %c0_73] {strides = array<i32: 2, 1>} : memref<324x8xf32, #tpu.memory_space<vmem>>, vector<8x8xf32>
    %c145 = arith.constant 145 : index
    %c0_74 = arith.constant 0 : index
    %89 = tpu.strided_load %arg11[%c145, %c0_74] {strides = array<i32: 2, 1>} : memref<324x8xf32, #tpu.memory_space<vmem>>, vector<8x8xf32>
    %c146 = arith.constant 146 : index
    %c0_75 = arith.constant 0 : index
    %90 = tpu.strided_load %arg11[%c146, %c0_75] {strides = array<i32: 2, 1>} : memref<324x8xf32, #tpu.memory_space<vmem>>, vector<8x8xf32>
    %91 = arith.maximumf %87, %88 : vector<8x8xf32>
    %92 = arith.maximumf %89, %90 : vector<8x8xf32>
    %93 = arith.maximumf %91, %92 : vector<8x8xf32>
    %c57 = arith.constant 57 : index
    %c0_76 = arith.constant 0 : index
    %94 = vector.load %arg12[%c57, %c0_76] : memref<132x8xf32, #tpu.memory_space<vmem>>, vector<8x8xf32>
    tpu.vector_store %arg12[%c57, %c0_76], %93 {strides = array<i32>} : memref<132x8xf32, #tpu.memory_space<vmem>>, vector<8x8xf32>,
    %c163 = arith.constant 163 : index
    %c0_77 = arith.constant 0 : index
    %95 = tpu.strided_load %arg11[%c163, %c0_77] {strides = array<i32: 2, 1>} : memref<324x8xf32, #tpu.memory_space<vmem>>, vector<8x8xf32>
    %c164 = arith.constant 164 : index
    %c0_78 = arith.constant 0 : index
    %96 = tpu.strided_load %arg11[%c164, %c0_78] {strides = array<i32: 2, 1>} : memref<324x8xf32, #tpu.memory_space<vmem>>, vector<8x8xf32>
    %c181 = arith.constant 181 : index
    %c0_79 = arith.constant 0 : index
    %97 = tpu.strided_load %arg11[%c181, %c0_79] {strides = array<i32: 2, 1>} : memref<324x8xf32, #tpu.memory_space<vmem>>, vector<8x8xf32>
    %c182 = arith.constant 182 : index
    %c0_80 = arith.constant 0 : index
    %98 = tpu.strided_load %arg11[%c182, %c0_80] {strides = array<i32: 2, 1>} : memref<324x8xf32, #tpu.memory_space<vmem>>, vector<8x8xf32>
    %99 = arith.maximumf %95, %96 : vector<8x8xf32>
    %100 = arith.maximumf %97, %98 : vector<8x8xf32>
    %101 = arith.maximumf %99, %100 : vector<8x8xf32>
    %c67 = arith.constant 67 : index
    %c0_81 = arith.constant 0 : index
    %102 = vector.load %arg12[%c67, %c0_81] : memref<132x8xf32, #tpu.memory_space<vmem>>, vector<8x8xf32>
    tpu.vector_store %arg12[%c67, %c0_81], %101 {strides = array<i32>} : memref<132x8xf32, #tpu.memory_space<vmem>>, vector<8x8xf32>,
    %c199 = arith.constant 199 : index
    %c0_82 = arith.constant 0 : index
    %103 = tpu.strided_load %arg11[%c199, %c0_82] {strides = array<i32: 2, 1>} : memref<324x8xf32, #tpu.memory_space<vmem>>, vector<8x8xf32>
    %c200 = arith.constant 200 : index
    %c0_83 = arith.constant 0 : index
    %104 = tpu.strided_load %arg11[%c200, %c0_83] {strides = array<i32: 2, 1>} : memref<324x8xf32, #tpu.memory_space<vmem>>, vector<8x8xf32>
    %c217 = arith.constant 217 : index
    %c0_84 = arith.constant 0 : index
    %105 = tpu.strided_load %arg11[%c217, %c0_84] {strides = array<i32: 2, 1>} : memref<324x8xf32, #tpu.memory_space<vmem>>, vector<8x8xf32>
    %c218 = arith.constant 218 : index
    %c0_85 = arith.constant 0 : index
    %106 = tpu.strided_load %arg11[%c218, %c0_85] {strides = array<i32: 2, 1>} : memref<324x8xf32, #tpu.memory_space<vmem>>, vector<8x8xf32>
    %107 = arith.maximumf %103, %104 : vector<8x8xf32>
    %108 = arith.maximumf %105, %106 : vector<8x8xf32>
    %109 = arith.maximumf %107, %108 : vector<8x8xf32>
    %c77 = arith.constant 77 : index
    %c0_86 = arith.constant 0 : index
    %110 = vector.load %arg12[%c77, %c0_86] : memref<132x8xf32, #tpu.memory_space<vmem>>, vector<8x8xf32>
    tpu.vector_store %arg12[%c77, %c0_86], %109 {strides = array<i32>} : memref<132x8xf32, #tpu.memory_space<vmem>>, vector<8x8xf32>,
    %c235 = arith.constant 235 : index
    %c0_87 = arith.constant 0 : index
    %111 = tpu.strided_load %arg11[%c235, %c0_87] {strides = array<i32: 2, 1>} : memref<324x8xf32, #tpu.memory_space<vmem>>, vector<8x8xf32>
    %c236 = arith.constant 236 : index
    %c0_88 = arith.constant 0 : index
    %112 = tpu.strided_load %arg11[%c236, %c0_88] {strides = array<i32: 2, 1>} : memref<324x8xf32, #tpu.memory_space<vmem>>, vector<8x8xf32>
    %c253 = arith.constant 253 : index
    %c0_89 = arith.constant 0 : index
    %113 = tpu.strided_load %arg11[%c253, %c0_89] {strides = array<i32: 2, 1>} : memref<324x8xf32, #tpu.memory_space<vmem>>, vector<8x8xf32>
    %c254 = arith.constant 254 : index
    %c0_90 = arith.constant 0 : index
    %114 = tpu.strided_load %arg11[%c254, %c0_90] {strides = array<i32: 2, 1>} : memref<324x8xf32, #tpu.memory_space<vmem>>, vector<8x8xf32>
    %115 = arith.maximumf %111, %112 : vector<8x8xf32>
    %116 = arith.maximumf %113, %114 : vector<8x8xf32>
    %117 = arith.maximumf %115, %116 : vector<8x8xf32>
    %c87 = arith.constant 87 : index
    %c0_91 = arith.constant 0 : index
    %118 = vector.load %arg12[%c87, %c0_91] : memref<132x8xf32, #tpu.memory_space<vmem>>, vector<8x8xf32>
    tpu.vector_store %arg12[%c87, %c0_91], %117 {strides = array<i32>} : memref<132x8xf32, #tpu.memory_space<vmem>>, vector<8x8xf32>,
    %c271 = arith.constant 271 : index
    %c0_92 = arith.constant 0 : index
    %119 = tpu.strided_load %arg11[%c271, %c0_92] {strides = array<i32: 2, 1>} : memref<324x8xf32, #tpu.memory_space<vmem>>, vector<8x8xf32>
    %c272 = arith.constant 272 : index
    %c0_93 = arith.constant 0 : index
    %120 = tpu.strided_load %arg11[%c272, %c0_93] {strides = array<i32: 2, 1>} : memref<324x8xf32, #tpu.memory_space<vmem>>, vector<8x8xf32>
    %c289 = arith.constant 289 : index
    %c0_94 = arith.constant 0 : index
    %121 = tpu.strided_load %arg11[%c289, %c0_94] {strides = array<i32: 2, 1>} : memref<324x8xf32, #tpu.memory_space<vmem>>, vector<8x8xf32>
    %c290 = arith.constant 290 : index
    %c0_95 = arith.constant 0 : index
    %122 = tpu.strided_load %arg11[%c290, %c0_95] {strides = array<i32: 2, 1>} : memref<324x8xf32, #tpu.memory_space<vmem>>, vector<8x8xf32>
    %123 = arith.maximumf %119, %120 : vector<8x8xf32>
    %124 = arith.maximumf %121, %122 : vector<8x8xf32>
    %125 = arith.maximumf %123, %124 : vector<8x8xf32>
    %c97 = arith.constant 97 : index
    %c0_96 = arith.constant 0 : index
    %126 = vector.load %arg12[%c97, %c0_96] : memref<132x8xf32, #tpu.memory_space<vmem>>, vector<8x8xf32>
    tpu.vector_store %arg12[%c97, %c0_96], %125 {strides = array<i32>} : memref<132x8xf32, #tpu.memory_space<vmem>>, vector<8x8xf32>,
    %cst_97 = arith.constant 0.000000e+00 : f32
    %127 = vector.broadcast %cst_97 : f32 to vector<100x16xf32>
    %c5_98 = arith.constant 5 : index
    %c0_99 = arith.constant 0 : index
    %128 = vector.load %arg12[%c5_98, %c0_99] : memref<132x8xf32, #tpu.memory_space<vmem>>, vector<100x8xf32>
    %c0_100 = arith.constant 0 : index
    %c0_101 = arith.constant 0 : index
    %c0_102 = arith.constant 0 : index
    %129 = vector.load %arg4[%c0_100, %c0_101, %c0_102] : memref<9x8x16xf32, #tpu.memory_space<vmem>>, vector<1x8x16xf32>
    %130 = vector.shape_cast %129 : vector<1x8x16xf32> to vector<8x16xf32>
    %cst_103 = arith.constant dense<0.000000e+00> : vector<100x16xf32>
    %131 = tpu.matmul %128, %130, %cst_103 {dimension_numbers = #tpu.dot_dimension_numbers<[1], [0], [0], [1], [0, 0, 1, 1], [], []>} : vector<100x8xf32>, vector<8x16xf32>, vector<100x16xf32> -> vector<100x16xf32>
    %132 = arith.addf %127, %131 : vector<100x16xf32>
    %c6_104 = arith.constant 6 : index
    %c0_105 = arith.constant 0 : index
    %133 = vector.load %arg12[%c6_104, %c0_105] : memref<132x8xf32, #tpu.memory_space<vmem>>, vector<100x8xf32>
    %c1_106 = arith.constant 1 : index
    %c0_107 = arith.constant 0 : index
    %c0_108 = arith.constant 0 : index
    %134 = vector.load %arg4[%c1_106, %c0_107, %c0_108] : memref<9x8x16xf32, #tpu.memory_space<vmem>>, vector<1x8x16xf32>
    %135 = vector.shape_cast %134 : vector<1x8x16xf32> to vector<8x16xf32>
    %cst_109 = arith.constant dense<0.000000e+00> : vector<100x16xf32>
    %136 = tpu.matmul %133, %135, %cst_109 {dimension_numbers = #tpu.dot_dimension_numbers<[1], [0], [0], [1], [0, 0, 1, 1], [], []>} : vector<100x8xf32>, vector<8x16xf32>, vector<100x16xf32> -> vector<100x16xf32>
    %137 = arith.addf %132, %136 : vector<100x16xf32>
    %c7_110 = arith.constant 7 : index
    %c0_111 = arith.constant 0 : index
    %138 = vector.load %arg12[%c7_110, %c0_111] : memref<132x8xf32, #tpu.memory_space<vmem>>, vector<100x8xf32>
    %c2_112 = arith.constant 2 : index
    %c0_113 = arith.constant 0 : index
    %c0_114 = arith.constant 0 : index
    %139 = vector.load %arg4[%c2_112, %c0_113, %c0_114] : memref<9x8x16xf32, #tpu.memory_space<vmem>>, vector<1x8x16xf32>
    %140 = vector.shape_cast %139 : vector<1x8x16xf32> to vector<8x16xf32>
    %cst_115 = arith.constant dense<0.000000e+00> : vector<100x16xf32>
    %141 = tpu.matmul %138, %140, %cst_115 {dimension_numbers = #tpu.dot_dimension_numbers<[1], [0], [0], [1], [0, 0, 1, 1], [], []>} : vector<100x8xf32>, vector<8x16xf32>, vector<100x16xf32> -> vector<100x16xf32>
    %142 = arith.addf %137, %141 : vector<100x16xf32>
    %c15 = arith.constant 15 : index
    %c0_116 = arith.constant 0 : index
    %143 = vector.load %arg12[%c15, %c0_116] : memref<132x8xf32, #tpu.memory_space<vmem>>, vector<100x8xf32>
    %c3_117 = arith.constant 3 : index
    %c0_118 = arith.constant 0 : index
    %c0_119 = arith.constant 0 : index
    %144 = vector.load %arg4[%c3_117, %c0_118, %c0_119] : memref<9x8x16xf32, #tpu.memory_space<vmem>>, vector<1x8x16xf32>
    %145 = vector.shape_cast %144 : vector<1x8x16xf32> to vector<8x16xf32>
    %cst_120 = arith.constant dense<0.000000e+00> : vector<100x16xf32>
    %146 = tpu.matmul %143, %145, %cst_120 {dimension_numbers = #tpu.dot_dimension_numbers<[1], [0], [0], [1], [0, 0, 1, 1], [], []>} : vector<100x8xf32>, vector<8x16xf32>, vector<100x16xf32> -> vector<100x16xf32>
    %147 = arith.addf %142, %146 : vector<100x16xf32>
    %c16 = arith.constant 16 : index
    %c0_121 = arith.constant 0 : index
    %148 = vector.load %arg12[%c16, %c0_121] : memref<132x8xf32, #tpu.memory_space<vmem>>, vector<100x8xf32>
    %c4_122 = arith.constant 4 : index
    %c0_123 = arith.constant 0 : index
    %c0_124 = arith.constant 0 : index
    %149 = vector.load %arg4[%c4_122, %c0_123, %c0_124] : memref<9x8x16xf32, #tpu.memory_space<vmem>>, vector<1x8x16xf32>
    %150 = vector.shape_cast %149 : vector<1x8x16xf32> to vector<8x16xf32>
    %cst_125 = arith.constant dense<0.000000e+00> : vector<100x16xf32>
    %151 = tpu.matmul %148, %150, %cst_125 {dimension_numbers = #tpu.dot_dimension_numbers<[1], [0], [0], [1], [0, 0, 1, 1], [], []>} : vector<100x8xf32>, vector<8x16xf32>, vector<100x16xf32> -> vector<100x16xf32>
    %152 = arith.addf %147, %151 : vector<100x16xf32>
    %c17 = arith.constant 17 : index
    %c0_126 = arith.constant 0 : index
    %153 = vector.load %arg12[%c17, %c0_126] : memref<132x8xf32, #tpu.memory_space<vmem>>, vector<100x8xf32>
    %c5_127 = arith.constant 5 : index
    %c0_128 = arith.constant 0 : index
    %c0_129 = arith.constant 0 : index
    %154 = vector.load %arg4[%c5_127, %c0_128, %c0_129] : memref<9x8x16xf32, #tpu.memory_space<vmem>>, vector<1x8x16xf32>
    %155 = vector.shape_cast %154 : vector<1x8x16xf32> to vector<8x16xf32>
    %cst_130 = arith.constant dense<0.000000e+00> : vector<100x16xf32>
    %156 = tpu.matmul %153, %155, %cst_130 {dimension_numbers = #tpu.dot_dimension_numbers<[1], [0], [0], [1], [0, 0, 1, 1], [], []>} : vector<100x8xf32>, vector<8x16xf32>, vector<100x16xf32> -> vector<100x16xf32>
    %157 = arith.addf %152, %156 : vector<100x16xf32>
    %c25_131 = arith.constant 25 : index
    %c0_132 = arith.constant 0 : index
    %158 = vector.load %arg12[%c25_131, %c0_132] : memref<132x8xf32, #tpu.memory_space<vmem>>, vector<100x8xf32>
    %c6_133 = arith.constant 6 : index
    %c0_134 = arith.constant 0 : index
    %c0_135 = arith.constant 0 : index
    %159 = vector.load %arg4[%c6_133, %c0_134, %c0_135] : memref<9x8x16xf32, #tpu.memory_space<vmem>>, vector<1x8x16xf32>
    %160 = vector.shape_cast %159 : vector<1x8x16xf32> to vector<8x16xf32>
    %cst_136 = arith.constant dense<0.000000e+00> : vector<100x16xf32>
    %161 = tpu.matmul %158, %160, %cst_136 {dimension_numbers = #tpu.dot_dimension_numbers<[1], [0], [0], [1], [0, 0, 1, 1], [], []>} : vector<100x8xf32>, vector<8x16xf32>, vector<100x16xf32> -> vector<100x16xf32>
    %162 = arith.addf %157, %161 : vector<100x16xf32>
    %c26 = arith.constant 26 : index
    %c0_137 = arith.constant 0 : index
    %163 = vector.load %arg12[%c26, %c0_137] : memref<132x8xf32, #tpu.memory_space<vmem>>, vector<100x8xf32>
    %c7_138 = arith.constant 7 : index
    %c0_139 = arith.constant 0 : index
    %c0_140 = arith.constant 0 : index
    %164 = vector.load %arg4[%c7_138, %c0_139, %c0_140] : memref<9x8x16xf32, #tpu.memory_space<vmem>>, vector<1x8x16xf32>
    %165 = vector.shape_cast %164 : vector<1x8x16xf32> to vector<8x16xf32>
    %cst_141 = arith.constant dense<0.000000e+00> : vector<100x16xf32>
    %166 = tpu.matmul %163, %165, %cst_141 {dimension_numbers = #tpu.dot_dimension_numbers<[1], [0], [0], [1], [0, 0, 1, 1], [], []>} : vector<100x8xf32>, vector<8x16xf32>, vector<100x16xf32> -> vector<100x16xf32>
    %167 = arith.addf %162, %166 : vector<100x16xf32>
    %c27_142 = arith.constant 27 : index
    %c0_143 = arith.constant 0 : index
    %168 = vector.load %arg12[%c27_142, %c0_143] : memref<132x8xf32, #tpu.memory_space<vmem>>, vector<100x8xf32>
    %c8_144 = arith.constant 8 : index
    %c0_145 = arith.constant 0 : index
    %c0_146 = arith.constant 0 : index
    %169 = vector.load %arg4[%c8_144, %c0_145, %c0_146] : memref<9x8x16xf32, #tpu.memory_space<vmem>>, vector<1x8x16xf32>
    %170 = vector.shape_cast %169 : vector<1x8x16xf32> to vector<8x16xf32>
    %cst_147 = arith.constant dense<0.000000e+00> : vector<100x16xf32>
    %171 = tpu.matmul %168, %170, %cst_147 {dimension_numbers = #tpu.dot_dimension_numbers<[1], [0], [0], [1], [0, 0, 1, 1], [], []>} : vector<100x8xf32>, vector<8x16xf32>, vector<100x16xf32> -> vector<100x16xf32>
    %172 = arith.addf %167, %171 : vector<100x16xf32>
    %c0_148 = arith.constant 0 : index
    %c0_149 = arith.constant 0 : index
    %173 = vector.load %arg5[%c0_148, %c0_149] : memref<1x16xf32, #tpu.memory_space<vmem>>, vector<1x16xf32>
    %174 = vector.broadcast %173 : vector<1x16xf32> to vector<100x16xf32>
    %175 = arith.addf %172, %174 : vector<100x16xf32>
    %cst_150 = arith.constant 0.000000e+00 : f32
    %176 = vector.broadcast %cst_150 : f32 to vector<100x16xf32>
    %177 = arith.maximumf %175, %176 : vector<100x16xf32>
    %c0_151 = arith.constant 0 : index
    %c0_152 = arith.constant 0 : index
    %178 = vector.load %arg13[%c0_151, %c0_152] : memref<100x16xf32, #tpu.memory_space<vmem>>, vector<100x16xf32>
    tpu.vector_store %arg13[%c0_151, %c0_152], %177 {strides = array<i32>} : memref<100x16xf32, #tpu.memory_space<vmem>>, vector<100x16xf32>,
    %cst_153 = arith.constant 0.000000e+00 : f32
    %179 = vector.broadcast %cst_153 : f32 to vector<36x16xf32>
    %c0_154 = arith.constant 0 : index
    %c0_155 = arith.constant 0 : index
    %180 = vector.load %arg14[%c0_154, %c0_155] : memref<36x16xf32, #tpu.memory_space<vmem>>, vector<36x16xf32>
    tpu.vector_store %arg14[%c0_154, %c0_155], %179 {strides = array<i32>} : memref<36x16xf32, #tpu.memory_space<vmem>>, vector<36x16xf32>,
    %c11 = arith.constant 11 : index
    %c0_156 = arith.constant 0 : index
    %181 = tpu.strided_load %arg13[%c11, %c0_156] {strides = array<i32: 2, 1>} : memref<100x16xf32, #tpu.memory_space<vmem>>, vector<4x16xf32>
    %c12 = arith.constant 12 : index
    %c0_157 = arith.constant 0 : index
    %182 = tpu.strided_load %arg13[%c12, %c0_157] {strides = array<i32: 2, 1>} : memref<100x16xf32, #tpu.memory_space<vmem>>, vector<4x16xf32>
    %c21 = arith.constant 21 : index
    %c0_158 = arith.constant 0 : index
    %183 = tpu.strided_load %arg13[%c21, %c0_158] {strides = array<i32: 2, 1>} : memref<100x16xf32, #tpu.memory_space<vmem>>, vector<4x16xf32>
    %c22 = arith.constant 22 : index
    %c0_159 = arith.constant 0 : index
    %184 = tpu.strided_load %arg13[%c22, %c0_159] {strides = array<i32: 2, 1>} : memref<100x16xf32, #tpu.memory_space<vmem>>, vector<4x16xf32>
    %185 = arith.maximumf %181, %182 : vector<4x16xf32>
    %186 = arith.maximumf %183, %184 : vector<4x16xf32>
    %187 = arith.maximumf %185, %186 : vector<4x16xf32>
    %c7_160 = arith.constant 7 : index
    %c0_161 = arith.constant 0 : index
    %188 = vector.load %arg14[%c7_160, %c0_161] : memref<36x16xf32, #tpu.memory_space<vmem>>, vector<4x16xf32>
    tpu.vector_store %arg14[%c7_160, %c0_161], %187 {strides = array<i32>} : memref<36x16xf32, #tpu.memory_space<vmem>>, vector<4x16xf32>,
    %c31 = arith.constant 31 : index
    %c0_162 = arith.constant 0 : index
    %189 = tpu.strided_load %arg13[%c31, %c0_162] {strides = array<i32: 2, 1>} : memref<100x16xf32, #tpu.memory_space<vmem>>, vector<4x16xf32>
    %c32 = arith.constant 32 : index
    %c0_163 = arith.constant 0 : index
    %190 = tpu.strided_load %arg13[%c32, %c0_163] {strides = array<i32: 2, 1>} : memref<100x16xf32, #tpu.memory_space<vmem>>, vector<4x16xf32>
    %c41_164 = arith.constant 41 : index
    %c0_165 = arith.constant 0 : index
    %191 = tpu.strided_load %arg13[%c41_164, %c0_165] {strides = array<i32: 2, 1>} : memref<100x16xf32, #tpu.memory_space<vmem>>, vector<4x16xf32>
    %c42_166 = arith.constant 42 : index
    %c0_167 = arith.constant 0 : index
    %192 = tpu.strided_load %arg13[%c42_166, %c0_167] {strides = array<i32: 2, 1>} : memref<100x16xf32, #tpu.memory_space<vmem>>, vector<4x16xf32>
    %193 = arith.maximumf %189, %190 : vector<4x16xf32>
    %194 = arith.maximumf %191, %192 : vector<4x16xf32>
    %195 = arith.maximumf %193, %194 : vector<4x16xf32>
    %c13 = arith.constant 13 : index
    %c0_168 = arith.constant 0 : index
    %196 = vector.load %arg14[%c13, %c0_168] : memref<36x16xf32, #tpu.memory_space<vmem>>, vector<4x16xf32>
    tpu.vector_store %arg14[%c13, %c0_168], %195 {strides = array<i32>} : memref<36x16xf32, #tpu.memory_space<vmem>>, vector<4x16xf32>,
    %c51 = arith.constant 51 : index
    %c0_169 = arith.constant 0 : index
    %197 = tpu.strided_load %arg13[%c51, %c0_169] {strides = array<i32: 2, 1>} : memref<100x16xf32, #tpu.memory_space<vmem>>, vector<4x16xf32>
    %c52 = arith.constant 52 : index
    %c0_170 = arith.constant 0 : index
    %198 = tpu.strided_load %arg13[%c52, %c0_170] {strides = array<i32: 2, 1>} : memref<100x16xf32, #tpu.memory_space<vmem>>, vector<4x16xf32>
    %c61 = arith.constant 61 : index
    %c0_171 = arith.constant 0 : index
    %199 = tpu.strided_load %arg13[%c61, %c0_171] {strides = array<i32: 2, 1>} : memref<100x16xf32, #tpu.memory_space<vmem>>, vector<4x16xf32>
    %c62 = arith.constant 62 : index
    %c0_172 = arith.constant 0 : index
    %200 = tpu.strided_load %arg13[%c62, %c0_172] {strides = array<i32: 2, 1>} : memref<100x16xf32, #tpu.memory_space<vmem>>, vector<4x16xf32>
    %201 = arith.maximumf %197, %198 : vector<4x16xf32>
    %202 = arith.maximumf %199, %200 : vector<4x16xf32>
    %203 = arith.maximumf %201, %202 : vector<4x16xf32>
    %c19_173 = arith.constant 19 : index
    %c0_174 = arith.constant 0 : index
    %204 = vector.load %arg14[%c19_173, %c0_174] : memref<36x16xf32, #tpu.memory_space<vmem>>, vector<4x16xf32>
    tpu.vector_store %arg14[%c19_173, %c0_174], %203 {strides = array<i32>} : memref<36x16xf32, #tpu.memory_space<vmem>>, vector<4x16xf32>,
    %c71 = arith.constant 71 : index
    %c0_175 = arith.constant 0 : index
    %205 = tpu.strided_load %arg13[%c71, %c0_175] {strides = array<i32: 2, 1>} : memref<100x16xf32, #tpu.memory_space<vmem>>, vector<4x16xf32>
    %c72 = arith.constant 72 : index
    %c0_176 = arith.constant 0 : index
    %206 = tpu.strided_load %arg13[%c72, %c0_176] {strides = array<i32: 2, 1>} : memref<100x16xf32, #tpu.memory_space<vmem>>, vector<4x16xf32>
    %c81 = arith.constant 81 : index
    %c0_177 = arith.constant 0 : index
    %207 = tpu.strided_load %arg13[%c81, %c0_177] {strides = array<i32: 2, 1>} : memref<100x16xf32, #tpu.memory_space<vmem>>, vector<4x16xf32>
    %c82 = arith.constant 82 : index
    %c0_178 = arith.constant 0 : index
    %208 = tpu.strided_load %arg13[%c82, %c0_178] {strides = array<i32: 2, 1>} : memref<100x16xf32, #tpu.memory_space<vmem>>, vector<4x16xf32>
    %209 = arith.maximumf %205, %206 : vector<4x16xf32>
    %210 = arith.maximumf %207, %208 : vector<4x16xf32>
    %211 = arith.maximumf %209, %210 : vector<4x16xf32>
    %c25_179 = arith.constant 25 : index
    %c0_180 = arith.constant 0 : index
    %212 = vector.load %arg14[%c25_179, %c0_180] : memref<36x16xf32, #tpu.memory_space<vmem>>, vector<4x16xf32>
    tpu.vector_store %arg14[%c25_179, %c0_180], %211 {strides = array<i32>} : memref<36x16xf32, #tpu.memory_space<vmem>>, vector<4x16xf32>,
    %c0_181 = arith.constant 0 : index
    %c0_182 = arith.constant 0 : index
    %213 = vector.load %arg7[%c0_181, %c0_182] : memref<1x16xf32, #tpu.memory_space<vmem>>, vector<1x16xf32>
    %cst_183 = arith.constant 0.000000e+00 : f32
    %214 = vector.broadcast %cst_183 : f32 to vector<1x16xf32>
    %c7_184 = arith.constant 7 : index
    %c0_185 = arith.constant 0 : index
    %215 = vector.load %arg14[%c7_184, %c0_185] : memref<36x16xf32, #tpu.memory_space<vmem>>, vector<1x16xf32>
    %216 = arith.addf %214, %215 : vector<1x16xf32>
    %c8_186 = arith.constant 8 : index
    %c0_187 = arith.constant 0 : index
    %217 = vector.load %arg14[%c8_186, %c0_187] : memref<36x16xf32, #tpu.memory_space<vmem>>, vector<1x16xf32>
    %218 = arith.addf %216, %217 : vector<1x16xf32>
    %c13_188 = arith.constant 13 : index
    %c0_189 = arith.constant 0 : index
    %219 = vector.load %arg14[%c13_188, %c0_189] : memref<36x16xf32, #tpu.memory_space<vmem>>, vector<1x16xf32>
    %220 = arith.addf %218, %219 : vector<1x16xf32>
    %c14 = arith.constant 14 : index
    %c0_190 = arith.constant 0 : index
    %221 = vector.load %arg14[%c14, %c0_190] : memref<36x16xf32, #tpu.memory_space<vmem>>, vector<1x16xf32>
    %222 = arith.addf %220, %221 : vector<1x16xf32>
    %cst_191 = arith.constant 2.500000e-01 : f32
    %223 = vector.broadcast %cst_191 : f32 to vector<1x16xf32>
    %224 = arith.mulf %222, %223 : vector<1x16xf32>
    %c0_192 = arith.constant 0 : index
    %c0_193 = arith.constant 0 : index
    %c0_194 = arith.constant 0 : index
    %225 = vector.load %arg6[%c0_192, %c0_193, %c0_194] : memref<4x16x16xf32, #tpu.memory_space<vmem>>, vector<1x16x16xf32>
    %226 = vector.shape_cast %225 : vector<1x16x16xf32> to vector<16x16xf32>
    %cst_195 = arith.constant dense<0.000000e+00> : vector<1x16xf32>
    %227 = tpu.matmul %224, %226, %cst_195 {dimension_numbers = #tpu.dot_dimension_numbers<[1], [0], [0], [1], [0, 0, 1, 1], [], []>} : vector<1x16xf32>, vector<16x16xf32>, vector<1x16xf32> -> vector<1x16xf32>
    %228 = arith.addf %213, %227 : vector<1x16xf32>
    %cst_196 = arith.constant 0.000000e+00 : f32
    %229 = vector.broadcast %cst_196 : f32 to vector<1x16xf32>
    %c9 = arith.constant 9 : index
    %c0_197 = arith.constant 0 : index
    %230 = vector.load %arg14[%c9, %c0_197] : memref<36x16xf32, #tpu.memory_space<vmem>>, vector<1x16xf32>
    %231 = arith.addf %229, %230 : vector<1x16xf32>
    %c10 = arith.constant 10 : index
    %c0_198 = arith.constant 0 : index
    %232 = vector.load %arg14[%c10, %c0_198] : memref<36x16xf32, #tpu.memory_space<vmem>>, vector<1x16xf32>
    %233 = arith.addf %231, %232 : vector<1x16xf32>
    %c15_199 = arith.constant 15 : index
    %c0_200 = arith.constant 0 : index
    %234 = vector.load %arg14[%c15_199, %c0_200] : memref<36x16xf32, #tpu.memory_space<vmem>>, vector<1x16xf32>
    %235 = arith.addf %233, %234 : vector<1x16xf32>
    %c16_201 = arith.constant 16 : index
    %c0_202 = arith.constant 0 : index
    %236 = vector.load %arg14[%c16_201, %c0_202] : memref<36x16xf32, #tpu.memory_space<vmem>>, vector<1x16xf32>
    %237 = arith.addf %235, %236 : vector<1x16xf32>
    %cst_203 = arith.constant 2.500000e-01 : f32
    %238 = vector.broadcast %cst_203 : f32 to vector<1x16xf32>
    %239 = arith.mulf %237, %238 : vector<1x16xf32>
    %c1_204 = arith.constant 1 : index
    %c0_205 = arith.constant 0 : index
    %c0_206 = arith.constant 0 : index
    %240 = vector.load %arg6[%c1_204, %c0_205, %c0_206] : memref<4x16x16xf32, #tpu.memory_space<vmem>>, vector<1x16x16xf32>
    %241 = vector.shape_cast %240 : vector<1x16x16xf32> to vector<16x16xf32>
    %cst_207 = arith.constant dense<0.000000e+00> : vector<1x16xf32>
    %242 = tpu.matmul %239, %241, %cst_207 {dimension_numbers = #tpu.dot_dimension_numbers<[1], [0], [0], [1], [0, 0, 1, 1], [], []>} : vector<1x16xf32>, vector<16x16xf32>, vector<1x16xf32> -> vector<1x16xf32>
    %243 = arith.addf %228, %242 : vector<1x16xf32>
    %cst_208 = arith.constant 0.000000e+00 : f32
    %244 = vector.broadcast %cst_208 : f32 to vector<1x16xf32>
    %c19_209 = arith.constant 19 : index
    %c0_210 = arith.constant 0 : index
    %245 = vector.load %arg14[%c19_209, %c0_210] : memref<36x16xf32, #tpu.memory_space<vmem>>, vector<1x16xf32>
    %246 = arith.addf %244, %245 : vector<1x16xf32>
    %c20_211 = arith.constant 20 : index
    %c0_212 = arith.constant 0 : index
    %247 = vector.load %arg14[%c20_211, %c0_212] : memref<36x16xf32, #tpu.memory_space<vmem>>, vector<1x16xf32>
    %248 = arith.addf %246, %247 : vector<1x16xf32>
    %c25_213 = arith.constant 25 : index
    %c0_214 = arith.constant 0 : index
    %249 = vector.load %arg14[%c25_213, %c0_214] : memref<36x16xf32, #tpu.memory_space<vmem>>, vector<1x16xf32>
    %250 = arith.addf %248, %249 : vector<1x16xf32>
    %c26_215 = arith.constant 26 : index
    %c0_216 = arith.constant 0 : index
    %251 = vector.load %arg14[%c26_215, %c0_216] : memref<36x16xf32, #tpu.memory_space<vmem>>, vector<1x16xf32>
    %252 = arith.addf %250, %251 : vector<1x16xf32>
    %cst_217 = arith.constant 2.500000e-01 : f32
    %253 = vector.broadcast %cst_217 : f32 to vector<1x16xf32>
    %254 = arith.mulf %252, %253 : vector<1x16xf32>
    %c2_218 = arith.constant 2 : index
    %c0_219 = arith.constant 0 : index
    %c0_220 = arith.constant 0 : index
    %255 = vector.load %arg6[%c2_218, %c0_219, %c0_220] : memref<4x16x16xf32, #tpu.memory_space<vmem>>, vector<1x16x16xf32>
    %256 = vector.shape_cast %255 : vector<1x16x16xf32> to vector<16x16xf32>
    %cst_221 = arith.constant dense<0.000000e+00> : vector<1x16xf32>
    %257 = tpu.matmul %254, %256, %cst_221 {dimension_numbers = #tpu.dot_dimension_numbers<[1], [0], [0], [1], [0, 0, 1, 1], [], []>} : vector<1x16xf32>, vector<16x16xf32>, vector<1x16xf32> -> vector<1x16xf32>
    %258 = arith.addf %243, %257 : vector<1x16xf32>
    %cst_222 = arith.constant 0.000000e+00 : f32
    %259 = vector.broadcast %cst_222 : f32 to vector<1x16xf32>
    %c21_223 = arith.constant 21 : index
    %c0_224 = arith.constant 0 : index
    %260 = vector.load %arg14[%c21_223, %c0_224] : memref<36x16xf32, #tpu.memory_space<vmem>>, vector<1x16xf32>
    %261 = arith.addf %259, %260 : vector<1x16xf32>
    %c22_225 = arith.constant 22 : index
    %c0_226 = arith.constant 0 : index
    %262 = vector.load %arg14[%c22_225, %c0_226] : memref<36x16xf32, #tpu.memory_space<vmem>>, vector<1x16xf32>
    %263 = arith.addf %261, %262 : vector<1x16xf32>
    %c27_227 = arith.constant 27 : index
    %c0_228 = arith.constant 0 : index
    %264 = vector.load %arg14[%c27_227, %c0_228] : memref<36x16xf32, #tpu.memory_space<vmem>>, vector<1x16xf32>
    %265 = arith.addf %263, %264 : vector<1x16xf32>
    %c28 = arith.constant 28 : index
    %c0_229 = arith.constant 0 : index
    %266 = vector.load %arg14[%c28, %c0_229] : memref<36x16xf32, #tpu.memory_space<vmem>>, vector<1x16xf32>
    %267 = arith.addf %265, %266 : vector<1x16xf32>
    %cst_230 = arith.constant 2.500000e-01 : f32
    %268 = vector.broadcast %cst_230 : f32 to vector<1x16xf32>
    %269 = arith.mulf %267, %268 : vector<1x16xf32>
    %c3_231 = arith.constant 3 : index
    %c0_232 = arith.constant 0 : index
    %c0_233 = arith.constant 0 : index
    %270 = vector.load %arg6[%c3_231, %c0_232, %c0_233] : memref<4x16x16xf32, #tpu.memory_space<vmem>>, vector<1x16x16xf32>
    %271 = vector.shape_cast %270 : vector<1x16x16xf32> to vector<16x16xf32>
    %cst_234 = arith.constant dense<0.000000e+00> : vector<1x16xf32>
    %272 = tpu.matmul %269, %271, %cst_234 {dimension_numbers = #tpu.dot_dimension_numbers<[1], [0], [0], [1], [0, 0, 1, 1], [], []>} : vector<1x16xf32>, vector<16x16xf32>, vector<1x16xf32> -> vector<1x16xf32>
    %273 = arith.addf %258, %272 : vector<1x16xf32>
    %cst_235 = arith.constant 0.000000e+00 : f32
    %274 = vector.broadcast %cst_235 : f32 to vector<1x16xf32>
    %275 = arith.maximumf %273, %274 : vector<1x16xf32>
    %c0_236 = arith.constant 0 : index
    %c0_237 = arith.constant 0 : index
    %276 = vector.load %arg8[%c0_236, %c0_237] : memref<16x10xf32, #tpu.memory_space<vmem>>, vector<16x10xf32>
    %cst_238 = arith.constant dense<0.000000e+00> : vector<1x10xf32>
    %277 = tpu.matmul %275, %276, %cst_238 {dimension_numbers = #tpu.dot_dimension_numbers<[1], [0], [0], [1], [0, 0, 1, 1], [], []>} : vector<1x16xf32>, vector<16x10xf32>, vector<1x10xf32> -> vector<1x10xf32>
    %c0_239 = arith.constant 0 : index
    %c0_240 = arith.constant 0 : index
    %278 = vector.load %arg9[%c0_239, %c0_240] : memref<1x10xf32, #tpu.memory_space<vmem>>, vector<1x10xf32>
    %279 = arith.addf %277, %278 : vector<1x10xf32>
    %cst_241 = arith.constant 2.000000e+00 : f32
    %280 = vector.broadcast %cst_241 : f32 to vector<1x10xf32>
    %281 = arith.mulf %280, %279 : vector<1x10xf32>
    %c0_242 = arith.constant 0 : index
    %c0_243 = arith.constant 0 : index
    %c0_244 = arith.constant 0 : index
    %282 = vector.load %arg10[%c0_242, %c0_243, %c0_244] : memref<1x1x10xf32, #tpu.memory_space<vmem>>, vector<1x1x10xf32>
    %283 = vector.shape_cast %282 : vector<1x1x10xf32> to vector<1x10xf32>
    %284 = vector.shape_cast %281 : vector<1x10xf32> to vector<1x1x10xf32>
    tpu.vector_store %arg10[%c0_242, %c0_243, %c0_244], %284 {strides = array<i32>} : memref<1x1x10xf32, #tpu.memory_space<vmem>>, vector<1x1x10xf32>,
    return
  }
  func.func @transform_0(%arg0: i32) -> (i32, i32, i32) {
    %c0_i32 = arith.constant 0 : i32
    %c0_i32_0 = arith.constant 0 : i32
    %c0_i32_1 = arith.constant 0 : i32
    return %arg0, %c0_i32, %c0_i32_0 : i32, i32, i32
  }
  func.func @transform_1(%arg0: i32) -> (i32, i32, i32) {
    %c0_i32 = arith.constant 0 : i32
    %c0_i32_0 = arith.constant 0 : i32
    %c0_i32_1 = arith.constant 0 : i32
    %c0_i32_2 = arith.constant 0 : i32
    return %c0_i32, %c0_i32_0, %c0_i32_1 : i32, i32, i32
  }
  func.func @transform_2(%arg0: i32) -> (i32, i32) {
    %c0_i32 = arith.constant 0 : i32
    %c0_i32_0 = arith.constant 0 : i32
    %c0_i32_1 = arith.constant 0 : i32
    return %c0_i32, %c0_i32_0 : i32, i32
  }
  func.func @transform_3(%arg0: i32) -> (i32, i32, i32) {
    %c0_i32 = arith.constant 0 : i32
    %c0_i32_0 = arith.constant 0 : i32
    %c0_i32_1 = arith.constant 0 : i32
    %c0_i32_2 = arith.constant 0 : i32
    return %c0_i32, %c0_i32_0, %c0_i32_1 : i32, i32, i32
  }
  func.func @transform_4(%arg0: i32) -> (i32, i32) {
    %c0_i32 = arith.constant 0 : i32
    %c0_i32_0 = arith.constant 0 : i32
    %c0_i32_1 = arith.constant 0 : i32
    return %c0_i32, %c0_i32_0 : i32, i32
  }
  func.func @transform_5(%arg0: i32) -> (i32, i32, i32) {
    %c0_i32 = arith.constant 0 : i32
    %c0_i32_0 = arith.constant 0 : i32
    %c0_i32_1 = arith.constant 0 : i32
    %c0_i32_2 = arith.constant 0 : i32
    return %c0_i32, %c0_i32_0, %c0_i32_1 : i32, i32, i32
  }
  func.func @transform_6(%arg0: i32) -> (i32, i32) {
    %c0_i32 = arith.constant 0 : i32
    %c0_i32_0 = arith.constant 0 : i32
    %c0_i32_1 = arith.constant 0 : i32
    return %c0_i32, %c0_i32_0 : i32, i32
  }
  func.func @transform_7(%arg0: i32) -> (i32, i32) {
    %c0_i32 = arith.constant 0 : i32
    %c0_i32_0 = arith.constant 0 : i32
    %c0_i32_1 = arith.constant 0 : i32
    return %c0_i32, %c0_i32_0 : i32, i32
  }
  func.func @transform_8(%arg0: i32) -> (i32, i32) {
    %c0_i32 = arith.constant 0 : i32
    %c0_i32_0 = arith.constant 0 : i32
    %c0_i32_1 = arith.constant 0 : i32
    return %c0_i32, %c0_i32_0 : i32, i32
  }
  func.func @transform_9(%arg0: i32) -> (i32, i32, i32) {
    %c0_i32 = arith.constant 0 : i32
    %c0_i32_0 = arith.constant 0 : i32
    %c0_i32_1 = arith.constant 0 : i32
    return %arg0, %c0_i32, %c0_i32_0 : i32, i32, i32
  }
}

</mosaic_0001>

<llo_original>
// kernel: tpu_custom_call.1
$region0: #{tpu_custom_call.1}
  #allocation0 [shape = 'u32[]', space=smem, size = 0x4, offset = 0x4, fixed_abs, tag = 'smem constant byte address 0x4 - core index']
  #allocation1 [shape = 'u32[72,128]{1,0:T(1,128)}', space=vmem, size = 0x9000, scoped, tag = 'internal scratch']
  #allocation2 [shape = 'f32[324,8]{1,0:T(8,128)}', space=vmem, size = 0x29000, scoped, tag = 'scratch operand']
  #allocation3 [shape = 'f32[132,8]{1,0:T(8,128)}', space=vmem, size = 0x11000, scoped, tag = 'scratch operand']
  #allocation4 [shape = 'f32[100,16]{1,0:T(8,128)}', space=vmem, size = 0xd000, scoped, tag = 'scratch operand']
  #allocation5 [shape = 'f32[36,16]{1,0:T(8,128)}', space=vmem, size = 0x5000, scoped, tag = 'scratch operand']
  %s0 = inlined_call_operand.vmem [shape: f32[2,372,3], index: 0, kind: input, shape index: {}]
  %s1 = inlined_call_operand.vmem [shape: f32[9,3,8], index: 1, kind: input, shape index: {}]
  %s2 = inlined_call_operand.vmem [shape: f32[1,8], index: 2, kind: input, shape index: {}]
  %s3 = inlined_call_operand.vmem [shape: f32[9,8,16], index: 3, kind: input, shape index: {}]
  %s4 = inlined_call_operand.vmem [shape: f32[1,16], index: 4, kind: input, shape index: {}]
  %s5 = inlined_call_operand.vmem [shape: f32[4,16,16], index: 5, kind: input, shape index: {}]
  %s6 = inlined_call_operand.vmem [shape: f32[1,16], index: 6, kind: input, shape index: {}]
  %s7 = inlined_call_operand.vmem [shape: f32[16,10], index: 7, kind: input, shape index: {}]
  %s8 = inlined_call_operand.vmem [shape: f32[1,10], index: 8, kind: input, shape index: {}]
  %s9 = inlined_call_operand.hbm [shape: f32[2,1,10], index: 9, kind: output, shape index: {}]
  %s10 = sld [smem:[#allocation0]]
  $region69: #{tpu_custom_call.1} parent=0
    _
  %s12 = ssub.s32 1, %s10
  %s13 = scalar_select 0, %s12, %s10
  $region1: #{tpu_custom_call.1} parent=0
    #allocation6 [shape = 'u8[1024]{0}', space=vmem, size = 0x400, scoped, tag = 'output window, operand 0']
    #allocation7 [shape = 's32[2]{0}', space=sflag, size = 0x8, scoped, tag = 'scoped memory for tpu_custom_call.1']
    %14 = vsyncpa [#allocation7], 0
    %s15 = scalar_lea.sflag [#allocation7], 1
    %16 = vsyncpa %s15, 0
    loop: start=0, step=1, limit=4
    $region2: #{tpu_custom_call.1} parent=1 // loop_pre_header
      _
    $region3: #{tpu_custom_call.1} parent=1 // loop_header
      %s18 = sphi 0, %s22
      %p19 = scmp.ge.s32.totalorder %s18, 4
      %s28 = sphi 0, %s30
      %s31 = sphi 0, %s28
      %s32 = sphi 0, %s31
      %s48 = sphi 0, %s32
      %s52 = sphi 0, %s52
      %s54 = sphi 0, %s52
      %s55 = sphi 0, %s54
      %s69 = sphi 0, %s55
      %s73 = sphi 0, %s73
      %s75 = sphi 0, %s73
      %s76 = sphi 0, %s75
      %s90 = sphi 0, %s76
      %s94 = sphi 0, %s94
      %s96 = sphi 0, %s94
      %s97 = sphi 0, %s96
      %s111 = sphi 0, %s97
      %s115 = sphi 0, %s115
      %s117 = sphi 0, %s115
      %s118 = sphi 0, %s117
      %s132 = sphi 0, %s118
      %s136 = sphi 0, %s136
      %s138 = sphi 0, %s136
      %s139 = sphi 0, %s138
      %s153 = sphi 0, %s139
      %s157 = sphi 0, %s157
      %s159 = sphi 0, %s157
      %s160 = sphi 0, %s159
      %s174 = sphi 0, %s160
      %s178 = sphi 0, %s178
      %s180 = sphi 0, %s178
      %s181 = sphi 0, %s180
      %s195 = sphi 0, %s181
      %s199 = sphi 0, %s199
      %s201 = sphi 0, %s199
      %s202 = sphi 0, %s201
      %s216 = sphi 0, %s202
      %s222 = sphi 0, %s224
      %s225 = sphi 0, %s222
      %s226 = sphi 0, %s225
      %s242 = sphi 0, %s226
    $region4: #{tpu_custom_call.1} parent=1 // loop_header_branch
      %21 = sbr.rel (%p19) target = $region8
    $region5: #{tpu_custom_call.1} parent=1 // loop_body
      %s23 = ssub.s32 %s18, 1
      %s24 = ssub.s32 %s18, 2
      %s25 = sadd.s32 %s18, 1
      %s26 = ssub.s32 %s18, %s25
      %p27 = scmp.eq.s32.totalorder %s26, 0
      %s29 = sadd.s32 %s28, 1
      %s30 = scalar_select %p27, %s28, %s29
      %p33 = pneg %p27
      %p34 = scmp.eq.s32.totalorder %s18, 1
      %p35 = por %p33, %p34
      %p36 = scmp.ne.s32.totalorder %s28, %s31
      %p37 = scmp.eq.s32.totalorder %s18, 0
      %p38 = por %p36, %p37
      %p39 = scmp.ne.s32.totalorder %s28, %s31
      %p40 = scmp.eq.s32.totalorder %s23, 1
      %p41 = por %p39, %p40
      %p42 = scmp.ne.s32.totalorder %s31, %s32
      %p43 = scmp.eq.s32.totalorder %s23, 0
      %p44 = por %p42, %p43
      %p45 = scmp.ne.s32.totalorder %s31, %s32
      %p46 = scmp.eq.s32.totalorder %s24, 1
      %p47 = por %p45, %p46
      %p49 = scmp.ne.s32.totalorder %s32, %s48
      %p50 = scmp.eq.s32.totalorder %s24, 0
      %p51 = por %p49, %p50
      %s53 = sadd.s32 %s52, 1
      %p56 = scmp.eq.s32.totalorder %s18, 1
      %p57 = scmp.ne.s32.totalorder %s52, %s54
      %p58 = scmp.eq.s32.totalorder %s18, 0
      %p59 = por %p57, %p58
      %p60 = scmp.ne.s32.totalorder %s52, %s54
      %p61 = scmp.eq.s32.totalorder %s23, 1
      %p62 = por %p60, %p61
      %p63 = scmp.ne.s32.totalorder %s54, %s55
      %p64 = scmp.eq.s32.totalorder %s23, 0
      %p65 = por %p63, %p64
      %p66 = scmp.ne.s32.totalorder %s54, %s55
      %p67 = scmp.eq.s32.totalorder %s24, 1
      %p68 = por %p66, %p67
      %p70 = scmp.ne.s32.totalorder %s55, %s69
      %p71 = scmp.eq.s32.totalorder %s24, 0
      %p72 = por %p70, %p71
      %s74 = sadd.s32 %s73, 1
      %p77 = scmp.eq.s32.totalorder %s18, 1
      %p78 = scmp.ne.s32.totalorder %s73, %s75
      %p79 = scmp.eq.s32.totalorder %s18, 0
      %p80 = por %p78, %p79
      %p81 = scmp.ne.s32.totalorder %s73, %s75
      %p82 = scmp.eq.s32.totalorder %s23, 1
      %p83 = por %p81, %p82
      %p84 = scmp.ne.s32.totalorder %s75, %s76
      %p85 = scmp.eq.s32.totalorder %s23, 0
      %p86 = por %p84, %p85
      %p87 = scmp.ne.s32.totalorder %s75, %s76
      %p88 = scmp.eq.s32.totalorder %s24, 1
      %p89 = por %p87, %p88
      %p91 = scmp.ne.s32.totalorder %s76, %s90
      %p92 = scmp.eq.s32.totalorder %s24, 0
      %p93 = por %p91, %p92
      %s95 = sadd.s32 %s94, 1
      %p98 = scmp.eq.s32.totalorder %s18, 1
      %p99 = scmp.ne.s32.totalorder %s94, %s96
      %p100 = scmp.eq.s32.totalorder %s18, 0
      %p101 = por %p99, %p100
      %p102 = scmp.ne.s32.totalorder %s94, %s96
      %p103 = scmp.eq.s32.totalorder %s23, 1
      %p104 = por %p102, %p103
      %p105 = scmp.ne.s32.totalorder %s96, %s97
      %p106 = scmp.eq.s32.totalorder %s23, 0
      %p107 = por %p105, %p106
      %p108 = scmp.ne.s32.totalorder %s96, %s97
      %p109 = scmp.eq.s32.totalorder %s24, 1
      %p110 = por %p108, %p109
      %p112 = scmp.ne.s32.totalorder %s97, %s111
      %p113 = scmp.eq.s32.totalorder %s24, 0
      %p114 = por %p112, %p113
      %s116 = sadd.s32 %s115, 1
      %p119 = scmp.eq.s32.totalorder %s18, 1
      %p120 = scmp.ne.s32.totalorder %s115, %s117
      %p121 = scmp.eq.s32.totalorder %s18, 0
      %p122 = por %p120, %p121
      %p123 = scmp.ne.s32.totalorder %s115, %s117
      %p124 = scmp.eq.s32.totalorder %s23, 1
      %p125 = por %p123, %p124
      %p126 = scmp.ne.s32.totalorder %s117, %s118
      %p127 = scmp.eq.s32.totalorder %s23, 0
      %p128 = por %p126, %p127
      %p129 = scmp.ne.s32.totalorder %s117, %s118
      %p130 = scmp.eq.s32.totalorder %s24, 1
      %p131 = por %p129, %p130
      %p133 = scmp.ne.s32.totalorder %s118, %s132
      %p134 = scmp.eq.s32.totalorder %s24, 0
      %p135 = por %p133, %p134
      %s137 = sadd.s32 %s136, 1
      %p140 = scmp.eq.s32.totalorder %s18, 1
      %p141 = scmp.ne.s32.totalorder %s136, %s138
      %p142 = scmp.eq.s32.totalorder %s18, 0
      %p143 = por %p141, %p142
      %p144 = scmp.ne.s32.totalorder %s136, %s138
      %p145 = scmp.eq.s32.totalorder %s23, 1
      %p146 = por %p144, %p145
      %p147 = scmp.ne.s32.totalorder %s138, %s139
      %p148 = scmp.eq.s32.totalorder %s23, 0
      %p149 = por %p147, %p148
      %p150 = scmp.ne.s32.totalorder %s138, %s139
      %p151 = scmp.eq.s32.totalorder %s24, 1
      %p152 = por %p150, %p151
      %p154 = scmp.ne.s32.totalorder %s139, %s153
      %p155 = scmp.eq.s32.totalorder %s24, 0
      %p156 = por %p154, %p155
      %s158 = sadd.s32 %s157, 1
      %p161 = scmp.eq.s32.totalorder %s18, 1
      %p162 = scmp.ne.s32.totalorder %s157, %s159
      %p163 = scmp.eq.s32.totalorder %s18, 0
      %p164 = por %p162, %p163
      %p165 = scmp.ne.s32.totalorder %s157, %s159
      %p166 = scmp.eq.s32.totalorder %s23, 1
      %p167 = por %p165, %p166
      %p168 = scmp.ne.s32.totalorder %s159, %s160
      %p169 = scmp.eq.s32.totalorder %s23, 0
      %p170 = por %p168, %p169
      %p171 = scmp.ne.s32.totalorder %s159, %s160
      %p172 = scmp.eq.s32.totalorder %s24, 1
      %p173 = por %p171, %p172
      %p175 = scmp.ne.s32.totalorder %s160, %s174
      %p176 = scmp.eq.s32.totalorder %s24, 0
      %p177 = por %p175, %p176
      %s179 = sadd.s32 %s178, 1
      %p182 = scmp.eq.s32.totalorder %s18, 1
      %p183 = scmp.ne.s32.totalorder %s178, %s180
      %p184 = scmp.eq.s32.totalorder %s18, 0
      %p185 = por %p183, %p184
      %p186 = scmp.ne.s32.totalorder %s178, %s180
      %p187 = scmp.eq.s32.totalorder %s23, 1
      %p188 = por %p186, %p187
      %p189 = scmp.ne.s32.totalorder %s180, %s181
      %p190 = scmp.eq.s32.totalorder %s23, 0
      %p191 = por %p189, %p190
      %p192 = scmp.ne.s32.totalorder %s180, %s181
      %p193 = scmp.eq.s32.totalorder %s24, 1
      %p194 = por %p192, %p193
      %p196 = scmp.ne.s32.totalorder %s181, %s195
      %p197 = scmp.eq.s32.totalorder %s24, 0
      %p198 = por %p196, %p197
      %s200 = sadd.s32 %s199, 1
      %p203 = scmp.eq.s32.totalorder %s18, 1
      %p204 = scmp.ne.s32.totalorder %s199, %s201
      %p205 = scmp.eq.s32.totalorder %s18, 0
      %p206 = por %p204, %p205
      %p207 = scmp.ne.s32.totalorder %s199, %s201
      %p208 = scmp.eq.s32.totalorder %s23, 1
      %p209 = por %p207, %p208
      %p210 = scmp.ne.s32.totalorder %s201, %s202
      %p211 = scmp.eq.s32.totalorder %s23, 0
      %p212 = por %p210, %p211
      %p213 = scmp.ne.s32.totalorder %s201, %s202
      %p214 = scmp.eq.s32.totalorder %s24, 1
      %p215 = por %p213, %p214
      %p217 = scmp.ne.s32.totalorder %s202, %s216
      %p218 = scmp.eq.s32.totalorder %s24, 0
      %p219 = por %p217, %p218
      %s220 = ssub.s32 %s18, %s25
      %p221 = scmp.eq.s32.totalorder %s220, 0
      %s223 = sadd.s32 %s222, 1
      %s224 = scalar_select %p221, %s222, %s223
      %p227 = pneg %p221
      %p228 = scmp.eq.s32.totalorder %s18, 1
      %p229 = por %p227, %p228
      %p230 = scmp.ne.s32.totalorder %s222, %s225
      %p231 = scmp.eq.s32.totalorder %s18, 0
      %p232 = por %p230, %p231
      %p233 = scmp.ne.s32.totalorder %s222, %s225
      %p234 = scmp.eq.s32.totalorder %s23, 1
      %p235 = por %p233, %p234
      %p236 = scmp.ne.s32.totalorder %s225, %s226
      %p237 = scmp.eq.s32.totalorder %s23, 0
      %p238 = por %p236, %p237
      %p239 = scmp.ne.s32.totalorder %s225, %s226
      %p240 = scmp.eq.s32.totalorder %s24, 1
      %p241 = por %p239, %p240
      %p243 = scmp.ne.s32.totalorder %s226, %s242
      %p244 = scmp.eq.s32.totalorder %s24, 0
      %p245 = por %p243, %p244
      %p246 = scmp.le.s32.totalorder 1, %s18
      %p247 = scmp.lt.s32.totalorder %s18, 3
      %p248 = pnand %p246, %p247
      %p249 = pneg %p248
      // Predicated region
      $region9: #{tpu_custom_call.1} parent=5 // pred_check
        _
      $region10: #{tpu_custom_call.1} parent=5 // pred_check_branch
        %251 = sbr.rel (%p248) target = $region12
      $region11: #{tpu_custom_call.1} parent=5 // pred_region
        %s252 = ssub.s32 %s18, 1
        // Predicated region
        $region13: #{tpu_custom_call.1} parent=11 // pred_check
          %p253 = pneg %p65
        $region14: #{tpu_custom_call.1} parent=11 // pred_check_branch
          %255 = sbr.rel (%p253) target = $region16
        $region15: #{tpu_custom_call.1} parent=11 // pred_region
          _
        $region16: #{tpu_custom_call.1} parent=11 // pred_fallthru
          _
        // Predicated region
        $region17: #{tpu_custom_call.1} parent=11 // pred_check
          %p256 = pneg %p86
        $region18: #{tpu_custom_call.1} parent=11 // pred_check_branch
          %258 = sbr.rel (%p256) target = $region20
        $region19: #{tpu_custom_call.1} parent=11 // pred_region
          _
        $region20: #{tpu_custom_call.1} parent=11 // pred_fallthru
          _
        // Predicated region
        $region21: #{tpu_custom_call.1} parent=11 // pred_check
          %p259 = pneg %p107
        $region22: #{tpu_custom_call.1} parent=11 // pred_check_branch
          %261 = sbr.rel (%p259) target = $region24
        $region23: #{tpu_custom_call.1} parent=11 // pred_region
          _
        $region24: #{tpu_custom_call.1} parent=11 // pred_fallthru
          _
        // Predicated region
        $region25: #{tpu_custom_call.1} parent=11 // pred_check
          %p262 = pneg %p128
        $region26: #{tpu_custom_call.1} parent=11 // pred_check_branch
          %264 = sbr.rel (%p262) target = $region28
        $region27: #{tpu_custom_call.1} parent=11 // pred_region
          _
        $region28: #{tpu_custom_call.1} parent=11 // pred_fallthru
          _
        // Predicated region
        $region29: #{tpu_custom_call.1} parent=11 // pred_check
          %p265 = pneg %p149
        $region30: #{tpu_custom_call.1} parent=11 // pred_check_branch
          %267 = sbr.rel (%p265) target = $region32
        $region31: #{tpu_custom_call.1} parent=11 // pred_region
          _
        $region32: #{tpu_custom_call.1} parent=11 // pred_fallthru
          _
        // Predicated region
        $region33: #{tpu_custom_call.1} parent=11 // pred_check
          %p268 = pneg %p170
        $region34: #{tpu_custom_call.1} parent=11 // pred_check_branch
          %270 = sbr.rel (%p268) target = $region36
        $region35: #{tpu_custom_call.1} parent=11 // pred_region
          _
        $region36: #{tpu_custom_call.1} parent=11 // pred_fallthru
          _
        // Predicated region
        $region37: #{tpu_custom_call.1} parent=11 // pred_check
          %p271 = pneg %p191
        $region38: #{tpu_custom_call.1} parent=11 // pred_check_branch
          %273 = sbr.rel (%p271) target = $region40
        $region39: #{tpu_custom_call.1} parent=11 // pred_region
          _
        $region40: #{tpu_custom_call.1} parent=11 // pred_fallthru
          _
        // Predicated region
        $region41: #{tpu_custom_call.1} parent=11 // pred_check
          %p274 = pneg %p212
        $region42: #{tpu_custom_call.1} parent=11 // pred_check_branch
          %276 = sbr.rel (%p274) target = $region44
        $region43: #{tpu_custom_call.1} parent=11 // pred_region
          _
        $region44: #{tpu_custom_call.1} parent=11 // pred_fallthru
          _
      $region12: #{tpu_custom_call.1} parent=5 // pred_fallthru
        _
      %p277 = scmp.lt.s32.totalorder %s18, 2
      // Predicated region
      $region45: #{tpu_custom_call.1} parent=5 // pred_check
        %p278 = pneg %p277
      $region46: #{tpu_custom_call.1} parent=5 // pred_check_branch
        %280 = sbr.rel (%p278) target = $region48
      $region47: #{tpu_custom_call.1} parent=5 // pred_region
        // Predicated region
        $region49: #{tpu_custom_call.1} parent=47 // pred_check
          %p281 = pneg %p38
        $region50: #{tpu_custom_call.1} parent=47 // pred_check_branch
          %283 = sbr.rel (%p281) target = $region52
        $region51: #{tpu_custom_call.1} parent=47 // pred_region
          %p284 = scmp.lt.s32.totalorder %s18, 1
          %s285 = scalar_select %p284, %s18, 1
          %s286 = smul.addr %s285, 47
          %s287 = smul.addr %s286, 8
          %s288 = scalar_lea.vmem %s0, %s287
        $region52: #{tpu_custom_call.1} parent=47 // pred_fallthru
          _
      $region48: #{tpu_custom_call.1} parent=5 // pred_fallthru
        _
      %p289 = scmp.le.s32.totalorder 1, %s18
      %p290 = scmp.lt.s32.totalorder %s18, 3
      %p291 = pnand %p289, %p290
      %p292 = pneg %p291
      // Predicated region
      $region53: #{tpu_custom_call.1} parent=5 // pred_check
        _
      $region54: #{tpu_custom_call.1} parent=5 // pred_check_branch
        %294 = sbr.rel (%p291) target = $region56
      $region55: #{tpu_custom_call.1} parent=5 // pred_region
        %s295 = ssub.s32 %s18, 1
        %p296 = scmp.lt.s32.totalorder %s23, 1
        %s297 = scalar_select %p296, %s23, 1
        %s298 = smul.addr %s297, 47
        %s299 = smul.addr %s298, 8
        %s300 = scalar_lea.vmem %s0, %s299
        %p301 = pneg %p44
        %p302 = pneg %p41
        %p303 = pneg %p65
        %p304 = pneg %p62
        %p305 = pneg %p86
        %p306 = pneg %p83
        %p307 = pneg %p107
        %p308 = pneg %p104
        %p309 = pneg %p128
        %p310 = pneg %p125
        %p311 = pneg %p149
        %p312 = pneg %p146
        %p313 = pneg %p170
        %p314 = pneg %p167
        %p315 = pneg %p191
        %p316 = pneg %p188
        %p317 = pneg %p212
        %p318 = pneg %p209
        %p319 = pneg %p238
        %p320 = pneg %p235
        %s321 = sand.u32 %s225, 1
        %s322 = scalar_lea.sflag [#allocation7], %s321
        %s323 = sand.u32 %s225, 1
        %s324 = scalar_lea.vmem [#allocation6], %s323
        %p325 = scmp.lt.s32.totalorder %s23, 1
        %s326 = scalar_select %p325, %s23, 1
        %s327 = smul.addr %s326, 47
        %s328 = smul.addr %s327, 8
        %s329 = scalar_lea.vmem %s0, %s328
        %v330 = vld [vmem:[%s329 + $0x5] sm:$0xff]
        %v331 = vld [vmem:[%s329 + $0xd] sm:$0xff]
        %v332 = vld [vmem:[%s329 + $0x15] sm:$0xff]
        %v333 = vld [vmem:[%s329 + $0x1d] sm:$0xff]
        %v334 = vld [vmem:[%s329 + $0x25] sm:$0xff]
        %v335 = vld [vmem:[%s329 + $0x2d] sm:$0xff]
        %v336 = vld [vmem:[%s329 + $0x35] sm:$0xff]
        %v337 = vld [vmem:[%s329 + $0x3d] sm:$0xff]
        %v338 = vld [vmem:[%s329 + $0x45] sm:$0xff]
        %v339 = vld [vmem:[%s329 + $0x4d] sm:$0xff]
        %v340 = vld [vmem:[%s329 + $0x55] sm:$0xff]
        %v341 = vld [vmem:[%s329 + $0x5d] sm:$0xff]
        %v342 = vld [vmem:[%s329 + $0x65] sm:$0xff]
        %v343 = vld [vmem:[%s329 + $0x6d] sm:$0xff]
        %v344 = vld [vmem:[%s329 + $0x75] sm:$0xff]
        %v345 = vld [vmem:[%s329 + $0x7d] sm:$0xff]
        %v346 = vld [vmem:[%s329 + $0x85] sm:$0xff]
        %v347 = vld [vmem:[%s329 + $0x8d] sm:$0xff]
        %v348 = vld [vmem:[%s329 + $0x95] sm:$0xff]
        %v349 = vld [vmem:[%s329 + $0x9d] sm:$0xff]
        %v350 = vld [vmem:[%s329 + $0xa5] sm:$0xff]
        %v351 = vld [vmem:[%s329 + $0xad] sm:$0xff]
        %v352 = vld [vmem:[%s329 + $0xb5] sm:$0xff]
        %v353 = vld [vmem:[%s329 + $0xbd] sm:$0xff]
        %v354 = vld [vmem:[%s329 + $0xc5] sm:$0xff]
        %v355 = vld [vmem:[%s329 + $0xcd] sm:$0xff]
        %v356 = vld [vmem:[%s329 + $0xd5] sm:$0xff]
        %v357 = vld [vmem:[%s329 + $0xdd] sm:$0xff]
        %v358 = vld [vmem:[%s329 + $0xe5] sm:$0xff]
        %v359 = vld [vmem:[%s329 + $0xed] sm:$0xff]
        %v360 = vld [vmem:[%s329 + $0xf5] sm:$0xff]
        %v361 = vld [vmem:[%s329 + $0xfd] sm:$0xff]
        %v362 = vld [vmem:[%s329 + $0x105] sm:$0xff]
        %v363 = vld [vmem:[%s329 + $0x10d] sm:$0xff]
        %v364 = vld [vmem:[%s329 + $0x115] sm:$0xff]
        %v365 = vld [vmem:[%s329 + $0x11d] sm:$0xff]
        %v366 = vld [vmem:[%s329 + $0x125] sm:$0xff]
        %v367 = vld [vmem:[%s329 + $0x12d] sm:$0xff]
        %v368 = vld [vmem:[%s329 + $0x135] sm:$0xff]
        %v369 = vld [vmem:[%s329 + $0x13d] sm:$0xff]
        %v370 = vld [vmem:[%s329 + $0x145] sm:$0xf]
        %v371 = vld [vmem:[%s1] sm:$0x7]
        %v372 = vld [vmem:[%s329 + $0x6] sm:$0xff]
        %v373 = vld [vmem:[%s329 + $0xe] sm:$0xff]
        %v374 = vld [vmem:[%s329 + $0x16] sm:$0xff]
        %v375 = vld [vmem:[%s329 + $0x1e] sm:$0xff]
        %v376 = vld [vmem:[%s329 + $0x26] sm:$0xff]
        %v377 = vld [vmem:[%s329 + $0x2e] sm:$0xff]
        %v378 = vld [vmem:[%s329 + $0x36] sm:$0xff]
        %v379 = vld [vmem:[%s329 + $0x3e] sm:$0xff]
        %v380 = vld [vmem:[%s329 + $0x46] sm:$0xff]
        %v381 = vld [vmem:[%s329 + $0x4e] sm:$0xff]
        %v382 = vld [vmem:[%s329 + $0x56] sm:$0xff]
        %v383 = vld [vmem:[%s329 + $0x5e] sm:$0xff]
        %v384 = vld [vmem:[%s329 + $0x66] sm:$0xff]
        %v385 = vld [vmem:[%s329 + $0x6e] sm:$0xff]
        %v386 = vld [vmem:[%s329 + $0x76] sm:$0xff]
        %v387 = vld [vmem:[%s329 + $0x7e] sm:$0xff]
        %v388 = vld [vmem:[%s329 + $0x86] sm:$0xff]
        %v389 = vld [vmem:[%s329 + $0x8e] sm:$0xff]
        %v390 = vld [vmem:[%s329 + $0x96] sm:$0xff]
        %v391 = vld [vmem:[%s329 + $0x9e] sm:$0xff]
        %v392 = vld [vmem:[%s329 + $0xa6] sm:$0xff]
        %v393 = vld [vmem:[%s329 + $0xae] sm:$0xff]
        %v394 = vld [vmem:[%s329 + $0xb6] sm:$0xff]
        %v395 = vld [vmem:[%s329 + $0xbe] sm:$0xff]
        %v396 = vld [vmem:[%s329 + $0xc6] sm:$0xff]
        %v397 = vld [vmem:[%s329 + $0xce] sm:$0xff]
        %v398 = vld [vmem:[%s329 + $0xd6] sm:$0xff]
        %v399 = vld [vmem:[%s329 + $0xde] sm:$0xff]
        %v400 = vld [vmem:[%s329 + $0xe6] sm:$0xff]
        %v401 = vld [vmem:[%s329 + $0xee] sm:$0xff]
        %v402 = vld [vmem:[%s329 + $0xf6] sm:$0xff]
        %v403 = vld [vmem:[%s329 + $0xfe] sm:$0xff]
        %v404 = vld [vmem:[%s329 + $0x106] sm:$0xff]
        %v405 = vld [vmem:[%s329 + $0x10e] sm:$0xff]
        %v406 = vld [vmem:[%s329 + $0x116] sm:$0xff]
        %v407 = vld [vmem:[%s329 + $0x11e] sm:$0xff]
        %v408 = vld [vmem:[%s329 + $0x126] sm:$0xff]
        %v409 = vld [vmem:[%s329 + $0x12e] sm:$0xff]
        %v410 = vld [vmem:[%s329 + $0x136] sm:$0xff]
        %v411 = vld [vmem:[%s329 + $0x13e] sm:$0xff]
        %v412 = vld [vmem:[%s329 + $0x146] sm:$0xf]
        %s413 = scalar_lea.vmem %s1, 4
        %v414 = vld [vmem:[%s413] sm:$0x7]
        %vm415 = vcmask 23552
        %v417 = vsel %vm415, %v372, 0
        %v420 = vsel %vm415, %v373, 0
        %v423 = vsel %vm415, %v374, 0
        %v426 = vsel %vm415, %v375, 0
        %v429 = vsel %vm415, %v376, 0
        %v432 = vsel %vm415, %v377, 0
        %v435 = vsel %vm415, %v378, 0
        %v438 = vsel %vm415, %v379, 0
        %v441 = vsel %vm415, %v380, 0
        %v444 = vsel %vm415, %v381, 0
        %v447 = vsel %vm415, %v382, 0
        %v450 = vsel %vm415, %v383, 0
        %v453 = vsel %vm415, %v384, 0
        %v456 = vsel %vm415, %v385, 0
        %v459 = vsel %vm415, %v386, 0
        %v462 = vsel %vm415, %v387, 0
        %v465 = vsel %vm415, %v388, 0
        %v468 = vsel %vm415, %v389, 0
        %v471 = vsel %vm415, %v390, 0
        %v474 = vsel %vm415, %v391, 0
        %v477 = vsel %vm415, %v392, 0
        %v480 = vsel %vm415, %v393, 0
        %v483 = vsel %vm415, %v394, 0
        %v486 = vsel %vm415, %v395, 0
        %v489 = vsel %vm415, %v396, 0
        %v492 = vsel %vm415, %v397, 0
        %v495 = vsel %vm415, %v398, 0
        %v498 = vsel %vm415, %v399, 0
        %v501 = vsel %vm415, %v400, 0
        %v504 = vsel %vm415, %v401, 0
        %v507 = vsel %vm415, %v402, 0
        %v510 = vsel %vm415, %v403, 0
        %v513 = vsel %vm415, %v404, 0
        %v516 = vsel %vm415, %v405, 0
        %v519 = vsel %vm415, %v406, 0
        %v522 = vsel %vm415, %v407, 0
        %v525 = vsel %vm415, %v408, 0
        %v528 = vsel %vm415, %v409, 0
        %v531 = vsel %vm415, %v410, 0
        %v534 = vsel %vm415, %v411, 0
        %v537 = vsel %vm415, %v412, 0
        %vm539 = vcmask 1042432
        %v541 = vsel %vm539, %v414, 0
        %543 = vmatpush.msra.mxu0 0.0
        %544 = vmatpush.msra.mxu0 0.0
        %545 = vmatpush.msra.mxu0 0.0
        %546 = vmatpush.msra.mxu0 0.0
        %547 = vmatpush.msra.mxu0 0.0
        %548 = vmatpush.msra.mxu0 0.0
        %549 = vmatpush.msra.mxu0 0.0
        %550 = vmatpush.msra.mxu0 0.0
        %551 = vmatpush.msra.mxu0 0.0
        %552 = vmatpush.msra.mxu0 0.0
        %553 = vmatpush.msra.mxu0 0.0
        %554 = vmatpush.msra.mxu0 0.0
        %555 = vmatpush.msra.mxu0 0.0
        %556 = vmatpush.msra.mxu0 0.0
        %557 = vmatpush.msra.mxu0 0.0
        %558 = vmatpush.msra.mxu0 %v541
        %559 = vmatmul.f32.gmra.mxu0 %v417
        %v560 = vpop.f32.mrf.mxu0
        %v561 = vadd.f32 0.0, %v560
        %562 = vmatmul.f32.gmra.mxu0 %v420
        %v563 = vpop.f32.mrf.mxu0
        %v564 = vadd.f32 0.0, %v563
        %565 = vmatmul.f32.gmra.mxu0 %v423
        %v566 = vpop.f32.mrf.mxu0
        %v567 = vadd.f32 0.0, %v566
        %568 = vmatmul.f32.gmra.mxu0 %v426
        %v569 = vpop.f32.mrf.mxu0
        %v570 = vadd.f32 0.0, %v569
        %571 = vmatmul.f32.gmra.mxu0 %v429
        %v572 = vpop.f32.mrf.mxu0
        %v573 = vadd.f32 0.0, %v572
        %574 = vmatmul.f32.gmra.mxu0 %v432
        %v575 = vpop.f32.mrf.mxu0
        %v576 = vadd.f32 0.0, %v575
        %577 = vmatmul.f32.gmra.mxu0 %v435
        %v578 = vpop.f32.mrf.mxu0
        %v579 = vadd.f32 0.0, %v578
        %580 = vmatmul.f32.gmra.mxu0 %v438
        %v581 = vpop.f32.mrf.mxu0
        %v582 = vadd.f32 0.0, %v581
        %583 = vmatmul.f32.gmra.mxu0 %v441
        %v584 = vpop.f32.mrf.mxu0
        %v585 = vadd.f32 0.0, %v584
        %586 = vmatmul.f32.gmra.mxu0 %v444
        %v587 = vpop.f32.mrf.mxu0
        %v588 = vadd.f32 0.0, %v587
        %589 = vmatmul.f32.gmra.mxu0 %v447
        %v590 = vpop.f32.mrf.mxu0
        %v591 = vadd.f32 0.0, %v590
        %592 = vmatmul.f32.gmra.mxu0 %v450
        %v593 = vpop.f32.mrf.mxu0
        %v594 = vadd.f32 0.0, %v593
        %595 = vmatmul.f32.gmra.mxu0 %v453
        %v596 = vpop.f32.mrf.mxu0
        %v597 = vadd.f32 0.0, %v596
        %598 = vmatmul.f32.gmra.mxu0 %v456
        %v599 = vpop.f32.mrf.mxu0
        %v600 = vadd.f32 0.0, %v599
        %601 = vmatmul.f32.gmra.mxu0 %v459
        %v602 = vpop.f32.mrf.mxu0
        %v603 = vadd.f32 0.0, %v602
        %604 = vmatmul.f32.gmra.mxu0 %v462
        %v605 = vpop.f32.mrf.mxu0
        %v606 = vadd.f32 0.0, %v605
        %607 = vmatmul.f32.gmra.mxu0 %v465
        %v608 = vpop.f32.mrf.mxu0
        %v609 = vadd.f32 0.0, %v608
        %610 = vmatmul.f32.gmra.mxu0 %v468
        %v611 = vpop.f32.mrf.mxu0
        %v612 = vadd.f32 0.0, %v611
        %613 = vmatmul.f32.gmra.mxu0 %v471
        %v614 = vpop.f32.mrf.mxu0
        %v615 = vadd.f32 0.0, %v614
        %616 = vmatmul.f32.gmra.mxu0 %v474
        %v617 = vpop.f32.mrf.mxu0
        %v618 = vadd.f32 0.0, %v617
        %619 = vmatmul.f32.gmra.mxu0 %v477
        %v620 = vpop.f32.mrf.mxu0
        %v621 = vadd.f32 0.0, %v620
        %622 = vmatmul.f32.gmra.mxu0 %v480
        %v623 = vpop.f32.mrf.mxu0
        %v624 = vadd.f32 0.0, %v623
        %625 = vmatmul.f32.gmra.mxu0 %v483
        %v626 = vpop.f32.mrf.mxu0
        %v627 = vadd.f32 0.0, %v626
        %628 = vmatmul.f32.gmra.mxu0 %v486
        %v629 = vpop.f32.mrf.mxu0
        %v630 = vadd.f32 0.0, %v629
        %631 = vmatmul.f32.gmra.mxu0 %v489
        %v632 = vpop.f32.mrf.mxu0
        %v633 = vadd.f32 0.0, %v632
        %634 = vmatmul.f32.gmra.mxu0 %v492
        %v635 = vpop.f32.mrf.mxu0
        %v636 = vadd.f32 0.0, %v635
        %637 = vmatmul.f32.gmra.mxu0 %v495
        %v638 = vpop.f32.mrf.mxu0
        %v639 = vadd.f32 0.0, %v638
        %640 = vmatmul.f32.gmra.mxu0 %v498
        %v641 = vpop.f32.mrf.mxu0
        %v642 = vadd.f32 0.0, %v641
        %643 = vmatmul.f32.gmra.mxu0 %v501
        %v644 = vpop.f32.mrf.mxu0
        %v645 = vadd.f32 0.0, %v644
        %646 = vmatmul.f32.gmra.mxu0 %v504
        %v647 = vpop.f32.mrf.mxu0
        %v648 = vadd.f32 0.0, %v647
        %649 = vmatmul.f32.gmra.mxu0 %v507
        %v650 = vpop.f32.mrf.mxu0
        %v651 = vadd.f32 0.0, %v650
        %652 = vmatmul.f32.gmra.mxu0 %v510
        %v653 = vpop.f32.mrf.mxu0
        %v654 = vadd.f32 0.0, %v653
        %655 = vmatmul.f32.gmra.mxu0 %v513
        %v656 = vpop.f32.mrf.mxu0
        %v657 = vadd.f32 0.0, %v656
        %658 = vmatmul.f32.gmra.mxu0 %v516
        %v659 = vpop.f32.mrf.mxu0
        %v660 = vadd.f32 0.0, %v659
        %661 = vmatmul.f32.gmra.mxu0 %v519
        %v662 = vpop.f32.mrf.mxu0
        %v663 = vadd.f32 0.0, %v662
        %664 = vmatmul.f32.gmra.mxu0 %v522
        %v665 = vpop.f32.mrf.mxu0
        %v666 = vadd.f32 0.0, %v665
        %667 = vmatmul.f32.gmra.mxu0 %v525
        %v668 = vpop.f32.mrf.mxu0
        %v669 = vadd.f32 0.0, %v668
        %670 = vmatmul.f32.gmra.mxu0 %v528
        %v671 = vpop.f32.mrf.mxu0
        %v672 = vadd.f32 0.0, %v671
        %673 = vmatmul.f32.gmra.mxu0 %v531
        %v674 = vpop.f32.mrf.mxu0
        %v675 = vadd.f32 0.0, %v674
        %676 = vmatmul.f32.gmra.mxu0 %v534
        %v677 = vpop.f32.mrf.mxu0
        %v678 = vadd.f32 0.0, %v677
        %679 = vmatmul.f32.gmra.mxu0 %v537
        %v680 = vpop.f32.mrf.mxu0
        %v681 = vadd.f32 0.0, %v680
        %682 = vdwg.mxu0
        %v684 = vsel %vm415, %v330, 0
        %v687 = vsel %vm415, %v331, 0
        %v690 = vsel %vm415, %v332, 0
        %v693 = vsel %vm415, %v333, 0
        %v696 = vsel %vm415, %v334, 0
        %v699 = vsel %vm415, %v335, 0
        %v702 = vsel %vm415, %v336, 0
        %v705 = vsel %vm415, %v337, 0
        %v708 = vsel %vm415, %v338, 0
        %v711 = vsel %vm415, %v339, 0
        %v714 = vsel %vm415, %v340, 0
        %v717 = vsel %vm415, %v341, 0
        %v720 = vsel %vm415, %v342, 0
        %v723 = vsel %vm415, %v343, 0
        %v726 = vsel %vm415, %v344, 0
        %v729 = vsel %vm415, %v345, 0
        %v732 = vsel %vm415, %v346, 0
        %v735 = vsel %vm415, %v347, 0
        %v738 = vsel %vm415, %v348, 0
        %v741 = vsel %vm415, %v349, 0
        %v744 = vsel %vm415, %v350, 0
        %v747 = vsel %vm415, %v351, 0
        %v750 = vsel %vm415, %v352, 0
        %v753 = vsel %vm415, %v353, 0
        %v756 = vsel %vm415, %v354, 0
        %v759 = vsel %vm415, %v355, 0
        %v762 = vsel %vm415, %v356, 0
        %v765 = vsel %vm415, %v357, 0
        %v768 = vsel %vm415, %v358, 0
        %v771 = vsel %vm415, %v359, 0
        %v774 = vsel %vm415, %v360, 0
        %v777 = vsel %vm415, %v361, 0
        %v780 = vsel %vm415, %v362, 0
        %v783 = vsel %vm415, %v363, 0
        %v786 = vsel %vm415, %v364, 0
        %v789 = vsel %vm415, %v365, 0
        %v792 = vsel %vm415, %v366, 0
        %v795 = vsel %vm415, %v367, 0
        %v798 = vsel %vm415, %v368, 0
        %v801 = vsel %vm415, %v369, 0
        %v804 = vsel %vm415, %v370, 0
        %v807 = vsel %vm539, %v371, 0
        %809 = vmatpush.msra.mxu0 0.0
        %810 = vmatpush.msra.mxu0 0.0
        %811 = vmatpush.msra.mxu0 0.0
        %812 = vmatpush.msra.mxu0 0.0
        %813 = vmatpush.msra.mxu0 0.0
        %814 = vmatpush.msra.mxu0 0.0
        %815 = vmatpush.msra.mxu0 0.0
        %816 = vmatpush.msra.mxu0 0.0
        %817 = vmatpush.msra.mxu0 0.0
        %818 = vmatpush.msra.mxu0 0.0
        %819 = vmatpush.msra.mxu0 0.0
        %820 = vmatpush.msra.mxu0 0.0
        %821 = vmatpush.msra.mxu0 0.0
        %822 = vmatpush.msra.mxu0 0.0
        %823 = vmatpush.msra.mxu0 0.0
        %824 = vmatpush.msra.mxu0 %v807
        %825 = vmatmul.f32.gmra.mxu0 %v684
        %v826 = vpop.f32.mrf.mxu0
        %v827 = vadd.f32 %v561, %v826
        %828 = vmatmul.f32.gmra.mxu0 %v687
        %v829 = vpop.f32.mrf.mxu0
        %v830 = vadd.f32 %v564, %v829
        %831 = vmatmul.f32.gmra.mxu0 %v690
        %v832 = vpop.f32.mrf.mxu0
        %v833 = vadd.f32 %v567, %v832
        %834 = vmatmul.f32.gmra.mxu0 %v693
        %v835 = vpop.f32.mrf.mxu0
        %v836 = vadd.f32 %v570, %v835
        %837 = vmatmul.f32.gmra.mxu0 %v696
        %v838 = vpop.f32.mrf.mxu0
        %v839 = vadd.f32 %v573, %v838
        %840 = vmatmul.f32.gmra.mxu0 %v699
        %v841 = vpop.f32.mrf.mxu0
        %v842 = vadd.f32 %v576, %v841
        %843 = vmatmul.f32.gmra.mxu0 %v702
        %v844 = vpop.f32.mrf.mxu0
        %v845 = vadd.f32 %v579, %v844
        %846 = vmatmul.f32.gmra.mxu0 %v705
        %v847 = vpop.f32.mrf.mxu0
        %v848 = vadd.f32 %v582, %v847
        %849 = vmatmul.f32.gmra.mxu0 %v708
        %v850 = vpop.f32.mrf.mxu0
        %v851 = vadd.f32 %v585, %v850
        %852 = vmatmul.f32.gmra.mxu0 %v711
        %v853 = vpop.f32.mrf.mxu0
        %v854 = vadd.f32 %v588, %v853
        %855 = vmatmul.f32.gmra.mxu0 %v714
        %v856 = vpop.f32.mrf.mxu0
        %v857 = vadd.f32 %v591, %v856
        %858 = vmatmul.f32.gmra.mxu0 %v717
        %v859 = vpop.f32.mrf.mxu0
        %v860 = vadd.f32 %v594, %v859
        %861 = vmatmul.f32.gmra.mxu0 %v720
        %v862 = vpop.f32.mrf.mxu0
        %v863 = vadd.f32 %v597, %v862
        %864 = vmatmul.f32.gmra.mxu0 %v723
        %v865 = vpop.f32.mrf.mxu0
        %v866 = vadd.f32 %v600, %v865
        %867 = vmatmul.f32.gmra.mxu0 %v726
        %v868 = vpop.f32.mrf.mxu0
        %v869 = vadd.f32 %v603, %v868
        %870 = vmatmul.f32.gmra.mxu0 %v729
        %v871 = vpop.f32.mrf.mxu0
        %v872 = vadd.f32 %v606, %v871
        %873 = vmatmul.f32.gmra.mxu0 %v732
        %v874 = vpop.f32.mrf.mxu0
        %v875 = vadd.f32 %v609, %v874
        %876 = vmatmul.f32.gmra.mxu0 %v735
        %v877 = vpop.f32.mrf.mxu0
        %v878 = vadd.f32 %v612, %v877
        %879 = vmatmul.f32.gmra.mxu0 %v738
        %v880 = vpop.f32.mrf.mxu0
        %v881 = vadd.f32 %v615, %v880
        %882 = vmatmul.f32.gmra.mxu0 %v741
        %v883 = vpop.f32.mrf.mxu0
        %v884 = vadd.f32 %v618, %v883
        %885 = vmatmul.f32.gmra.mxu0 %v744
        %v886 = vpop.f32.mrf.mxu0
        %v887 = vadd.f32 %v621, %v886
        %888 = vmatmul.f32.gmra.mxu0 %v747
        %v889 = vpop.f32.mrf.mxu0
        %v890 = vadd.f32 %v624, %v889
        %891 = vmatmul.f32.gmra.mxu0 %v750
        %v892 = vpop.f32.mrf.mxu0
        %v893 = vadd.f32 %v627, %v892
        %894 = vmatmul.f32.gmra.mxu0 %v753
        %v895 = vpop.f32.mrf.mxu0
        %v896 = vadd.f32 %v630, %v895
        %897 = vmatmul.f32.gmra.mxu0 %v756
        %v898 = vpop.f32.mrf.mxu0
        %v899 = vadd.f32 %v633, %v898
        %900 = vmatmul.f32.gmra.mxu0 %v759
        %v901 = vpop.f32.mrf.mxu0
        %v902 = vadd.f32 %v636, %v901
        %903 = vmatmul.f32.gmra.mxu0 %v762
        %v904 = vpop.f32.mrf.mxu0
        %v905 = vadd.f32 %v639, %v904
        %906 = vmatmul.f32.gmra.mxu0 %v765
        %v907 = vpop.f32.mrf.mxu0
        %v908 = vadd.f32 %v642, %v907
        %909 = vmatmul.f32.gmra.mxu0 %v768
        %v910 = vpop.f32.mrf.mxu0
        %v911 = vadd.f32 %v645, %v910
        %912 = vmatmul.f32.gmra.mxu0 %v771
        %v913 = vpop.f32.mrf.mxu0
        %v914 = vadd.f32 %v648, %v913
        %915 = vmatmul.f32.gmra.mxu0 %v774
        %v916 = vpop.f32.mrf.mxu0
        %v917 = vadd.f32 %v651, %v916
        %918 = vmatmul.f32.gmra.mxu0 %v777
        %v919 = vpop.f32.mrf.mxu0
        %v920 = vadd.f32 %v654, %v919
        %921 = vmatmul.f32.gmra.mxu0 %v780
        %v922 = vpop.f32.mrf.mxu0
        %v923 = vadd.f32 %v657, %v922
        %924 = vmatmul.f32.gmra.mxu0 %v783
        %v925 = vpop.f32.mrf.mxu0
        %v926 = vadd.f32 %v660, %v925
        %927 = vmatmul.f32.gmra.mxu0 %v786
        %v928 = vpop.f32.mrf.mxu0
        %v929 = vadd.f32 %v663, %v928
        %930 = vmatmul.f32.gmra.mxu0 %v789
        %v931 = vpop.f32.mrf.mxu0
        %v932 = vadd.f32 %v666, %v931
        %933 = vmatmul.f32.gmra.mxu0 %v792
        %v934 = vpop.f32.mrf.mxu0
        %v935 = vadd.f32 %v669, %v934
        %936 = vmatmul.f32.gmra.mxu0 %v795
        %v937 = vpop.f32.mrf.mxu0
        %v938 = vadd.f32 %v672, %v937
        %939 = vmatmul.f32.gmra.mxu0 %v798
        %v940 = vpop.f32.mrf.mxu0
        %v941 = vadd.f32 %v675, %v940
        %942 = vmatmul.f32.gmra.mxu0 %v801
        %v943 = vpop.f32.mrf.mxu0
        %v944 = vadd.f32 %v678, %v943
        %945 = vmatmul.f32.gmra.mxu0 %v804
        %v946 = vpop.f32.mrf.mxu0
        %v947 = vadd.f32 %v681, %v946
        %948 = vdwg.mxu0
        %v949 = vld [vmem:[%s329 + $0x7] sm:$0xff]
        %v950 = vld [vmem:[%s329 + $0xf] sm:$0xff]
        %v951 = vld [vmem:[%s329 + $0x17] sm:$0xff]
        %v952 = vld [vmem:[%s329 + $0x1f] sm:$0xff]
        %v953 = vld [vmem:[%s329 + $0x27] sm:$0xff]
        %v954 = vld [vmem:[%s329 + $0x2f] sm:$0xff]
        %v955 = vld [vmem:[%s329 + $0x37] sm:$0xff]
        %v956 = vld [vmem:[%s329 + $0x3f] sm:$0xff]
        %v957 = vld [vmem:[%s329 + $0x47] sm:$0xff]
        %v958 = vld [vmem:[%s329 + $0x4f] sm:$0xff]
        %v959 = vld [vmem:[%s329 + $0x57] sm:$0xff]
        %v960 = vld [vmem:[%s329 + $0x5f] sm:$0xff]
        %v961 = vld [vmem:[%s329 + $0x67] sm:$0xff]
        %v962 = vld [vmem:[%s329 + $0x6f] sm:$0xff]
        %v963 = vld [vmem:[%s329 + $0x77] sm:$0xff]
        %v964 = vld [vmem:[%s329 + $0x7f] sm:$0xff]
        %v965 = vld [vmem:[%s329 + $0x87] sm:$0xff]
        %v966 = vld [vmem:[%s329 + $0x8f] sm:$0xff]
        %v967 = vld [vmem:[%s329 + $0x97] sm:$0xff]
        %v968 = vld [vmem:[%s329 + $0x9f] sm:$0xff]
        %v969 = vld [vmem:[%s329 + $0xa7] sm:$0xff]
        %v970 = vld [vmem:[%s329 + $0xaf] sm:$0xff]
        %v971 = vld [vmem:[%s329 + $0xb7] sm:$0xff]
        %v972 = vld [vmem:[%s329 + $0xbf] sm:$0xff]
        %v973 = vld [vmem:[%s329 + $0xc7] sm:$0xff]
        %v974 = vld [vmem:[%s329 + $0xcf] sm:$0xff]
        %v975 = vld [vmem:[%s329 + $0xd7] sm:$0xff]
        %v976 = vld [vmem:[%s329 + $0xdf] sm:$0xff]
        %v977 = vld [vmem:[%s329 + $0xe7] sm:$0xff]
        %v978 = vld [vmem:[%s329 + $0xef] sm:$0xff]
        %v979 = vld [vmem:[%s329 + $0xf7] sm:$0xff]
        %v980 = vld [vmem:[%s329 + $0xff] sm:$0xff]
        %v981 = vld [vmem:[%s329 + $0x107] sm:$0xff]
        %v982 = vld [vmem:[%s329 + $0x10f] sm:$0xff]
        %v983 = vld [vmem:[%s329 + $0x117] sm:$0xff]
        %v984 = vld [vmem:[%s329 + $0x11f] sm:$0xff]
        %v985 = vld [vmem:[%s329 + $0x127] sm:$0xff]
        %v986 = vld [vmem:[%s329 + $0x12f] sm:$0xff]
        %v987 = vld [vmem:[%s329 + $0x137] sm:$0xff]
        %v988 = vld [vmem:[%s329 + $0x13f] sm:$0xff]
        %v989 = vld [vmem:[%s329 + $0x147] sm:$0xf]
        %s990 = scalar_lea.vmem %s1, 8
        %v991 = vld [vmem:[%s990] sm:$0x7]
        %v993 = vsel %vm415, %v949, 0
        %v996 = vsel %vm415, %v950, 0
        %v999 = vsel %vm415, %v951, 0
        %v1002 = vsel %vm415, %v952, 0
        %v1005 = vsel %vm415, %v953, 0
        %v1008 = vsel %vm415, %v954, 0
        %v1011 = vsel %vm415, %v955, 0
        %v1014 = vsel %vm415, %v956, 0
        %v1017 = vsel %vm415, %v957, 0
        %v1020 = vsel %vm415, %v958, 0
        %v1023 = vsel %vm415, %v959, 0
        %v1026 = vsel %vm415, %v960, 0
        %v1029 = vsel %vm415, %v961, 0
        %v1032 = vsel %vm415, %v962, 0
        %v1035 = vsel %vm415, %v963, 0
        %v1038 = vsel %vm415, %v964, 0
        %v1041 = vsel %vm415, %v965, 0
        %v1044 = vsel %vm415, %v966, 0
        %v1047 = vsel %vm415, %v967, 0
        %v1050 = vsel %vm415, %v968, 0
        %v1053 = vsel %vm415, %v969, 0
        %v1056 = vsel %vm415, %v970, 0
        %v1059 = vsel %vm415, %v971, 0
        %v1062 = vsel %vm415, %v972, 0
        %v1065 = vsel %vm415, %v973, 0
        %v1068 = vsel %vm415, %v974, 0
        %v1071 = vsel %vm415, %v975, 0
        %v1074 = vsel %vm415, %v976, 0
        %v1077 = vsel %vm415, %v977, 0
        %v1080 = vsel %vm415, %v978, 0
        %v1083 = vsel %vm415, %v979, 0
        %v1086 = vsel %vm415, %v980, 0
        %v1089 = vsel %vm415, %v981, 0
        %v1092 = vsel %vm415, %v982, 0
        %v1095 = vsel %vm415, %v983, 0
        %v1098 = vsel %vm415, %v984, 0
        %v1101 = vsel %vm415, %v985, 0
        %v1104 = vsel %vm415, %v986, 0
        %v1107 = vsel %vm415, %v987, 0
        %v1110 = vsel %vm415, %v988, 0
        %v1113 = vsel %vm415, %v989, 0
        %v1116 = vsel %vm539, %v991, 0
        %1118 = vmatpush.msra.mxu0 0.0
        %1119 = vmatpush.msra.mxu0 0.0
        %1120 = vmatpush.msra.mxu0 0.0
        %1121 = vmatpush.msra.mxu0 0.0
        %1122 = vmatpush.msra.mxu0 0.0
        %1123 = vmatpush.msra.mxu0 0.0
        %1124 = vmatpush.msra.mxu0 0.0
        %1125 = vmatpush.msra.mxu0 0.0
        %1126 = vmatpush.msra.mxu0 0.0
        %1127 = vmatpush.msra.mxu0 0.0
        %1128 = vmatpush.msra.mxu0 0.0
        %1129 = vmatpush.msra.mxu0 0.0
        %1130 = vmatpush.msra.mxu0 0.0
        %1131 = vmatpush.msra.mxu0 0.0
        %1132 = vmatpush.msra.mxu0 0.0
        %1133 = vmatpush.msra.mxu0 %v1116
        %1134 = vmatmul.f32.gmra.mxu0 %v993
        %v1135 = vpop.f32.mrf.mxu0
        %v1136 = vadd.f32 0.0, %v1135
        %1137 = vmatmul.f32.gmra.mxu0 %v996
        %v1138 = vpop.f32.mrf.mxu0
        %v1139 = vadd.f32 0.0, %v1138
        %1140 = vmatmul.f32.gmra.mxu0 %v999
        %v1141 = vpop.f32.mrf.mxu0
        %v1142 = vadd.f32 0.0, %v1141
        %1143 = vmatmul.f32.gmra.mxu0 %v1002
        %v1144 = vpop.f32.mrf.mxu0
        %v1145 = vadd.f32 0.0, %v1144
        %1146 = vmatmul.f32.gmra.mxu0 %v1005
        %v1147 = vpop.f32.mrf.mxu0
        %v1148 = vadd.f32 0.0, %v1147
        %1149 = vmatmul.f32.gmra.mxu0 %v1008
        %v1150 = vpop.f32.mrf.mxu0
        %v1151 = vadd.f32 0.0, %v1150
        %1152 = vmatmul.f32.gmra.mxu0 %v1011
        %v1153 = vpop.f32.mrf.mxu0
        %v1154 = vadd.f32 0.0, %v1153
        %1155 = vmatmul.f32.gmra.mxu0 %v1014
        %v1156 = vpop.f32.mrf.mxu0
        %v1157 = vadd.f32 0.0, %v1156
        %1158 = vmatmul.f32.gmra.mxu0 %v1017
        %v1159 = vpop.f32.mrf.mxu0
        %v1160 = vadd.f32 0.0, %v1159
        %1161 = vmatmul.f32.gmra.mxu0 %v1020
        %v1162 = vpop.f32.mrf.mxu0
        %v1163 = vadd.f32 0.0, %v1162
        %1164 = vmatmul.f32.gmra.mxu0 %v1023
        %v1165 = vpop.f32.mrf.mxu0
        %v1166 = vadd.f32 0.0, %v1165
        %1167 = vmatmul.f32.gmra.mxu0 %v1026
        %v1168 = vpop.f32.mrf.mxu0
        %v1169 = vadd.f32 0.0, %v1168
        %1170 = vmatmul.f32.gmra.mxu0 %v1029
        %v1171 = vpop.f32.mrf.mxu0
        %v1172 = vadd.f32 0.0, %v1171
        %1173 = vmatmul.f32.gmra.mxu0 %v1032
        %v1174 = vpop.f32.mrf.mxu0
        %v1175 = vadd.f32 0.0, %v1174
        %1176 = vmatmul.f32.gmra.mxu0 %v1035
        %v1177 = vpop.f32.mrf.mxu0
        %v1178 = vadd.f32 0.0, %v1177
        %1179 = vmatmul.f32.gmra.mxu0 %v1038
        %v1180 = vpop.f32.mrf.mxu0
        %v1181 = vadd.f32 0.0, %v1180
        %1182 = vmatmul.f32.gmra.mxu0 %v1041
        %v1183 = vpop.f32.mrf.mxu0
        %v1184 = vadd.f32 0.0, %v1183
        %1185 = vmatmul.f32.gmra.mxu0 %v1044
        %v1186 = vpop.f32.mrf.mxu0
        %v1187 = vadd.f32 0.0, %v1186
        %1188 = vmatmul.f32.gmra.mxu0 %v1047
        %v1189 = vpop.f32.mrf.mxu0
        %v1190 = vadd.f32 0.0, %v1189
        %1191 = vmatmul.f32.gmra.mxu0 %v1050
        %v1192 = vpop.f32.mrf.mxu0
        %v1193 = vadd.f32 0.0, %v1192
        %1194 = vmatmul.f32.gmra.mxu0 %v1053
        %v1195 = vpop.f32.mrf.mxu0
        %v1196 = vadd.f32 0.0, %v1195
        %1197 = vmatmul.f32.gmra.mxu0 %v1056
        %v1198 = vpop.f32.mrf.mxu0
        %v1199 = vadd.f32 0.0, %v1198
        %1200 = vmatmul.f32.gmra.mxu0 %v1059
        %v1201 = vpop.f32.mrf.mxu0
        %v1202 = vadd.f32 0.0, %v1201
        %1203 = vmatmul.f32.gmra.mxu0 %v1062
        %v1204 = vpop.f32.mrf.mxu0
        %v1205 = vadd.f32 0.0, %v1204
        %1206 = vmatmul.f32.gmra.mxu0 %v1065
        %v1207 = vpop.f32.mrf.mxu0
        %v1208 = vadd.f32 0.0, %v1207
        %1209 = vmatmul.f32.gmra.mxu0 %v1068
        %v1210 = vpop.f32.mrf.mxu0
        %v1211 = vadd.f32 0.0, %v1210
        %1212 = vmatmul.f32.gmra.mxu0 %v1071
        %v1213 = vpop.f32.mrf.mxu0
        %v1214 = vadd.f32 0.0, %v1213
        %1215 = vmatmul.f32.gmra.mxu0 %v1074
        %v1216 = vpop.f32.mrf.mxu0
        %v1217 = vadd.f32 0.0, %v1216
        %1218 = vmatmul.f32.gmra.mxu0 %v1077
        %v1219 = vpop.f32.mrf.mxu0
        %v1220 = vadd.f32 0.0, %v1219
        %1221 = vmatmul.f32.gmra.mxu0 %v1080
        %v1222 = vpop.f32.mrf.mxu0
        %v1223 = vadd.f32 0.0, %v1222
        %1224 = vmatmul.f32.gmra.mxu0 %v1083
        %v1225 = vpop.f32.mrf.mxu0
        %v1226 = vadd.f32 0.0, %v1225
        %1227 = vmatmul.f32.gmra.mxu0 %v1086
        %v1228 = vpop.f32.mrf.mxu0
        %v1229 = vadd.f32 0.0, %v1228
        %1230 = vmatmul.f32.gmra.mxu0 %v1089
        %v1231 = vpop.f32.mrf.mxu0
        %v1232 = vadd.f32 0.0, %v1231
        %1233 = vmatmul.f32.gmra.mxu0 %v1092
        %v1234 = vpop.f32.mrf.mxu0
        %v1235 = vadd.f32 0.0, %v1234
        %1236 = vmatmul.f32.gmra.mxu0 %v1095
        %v1237 = vpop.f32.mrf.mxu0
        %v1238 = vadd.f32 0.0, %v1237
        %1239 = vmatmul.f32.gmra.mxu0 %v1098
        %v1240 = vpop.f32.mrf.mxu0
        %v1241 = vadd.f32 0.0, %v1240
        %1242 = vmatmul.f32.gmra.mxu0 %v1101
        %v1243 = vpop.f32.mrf.mxu0
        %v1244 = vadd.f32 0.0, %v1243
        %1245 = vmatmul.f32.gmra.mxu0 %v1104
        %v1246 = vpop.f32.mrf.mxu0
        %v1247 = vadd.f32 0.0, %v1246
        %1248 = vmatmul.f32.gmra.mxu0 %v1107
        %v1249 = vpop.f32.mrf.mxu0
        %v1250 = vadd.f32 0.0, %v1249
        %1251 = vmatmul.f32.gmra.mxu0 %v1110
        %v1252 = vpop.f32.mrf.mxu0
        %v1253 = vadd.f32 0.0, %v1252
        %1254 = vmatmul.f32.gmra.mxu0 %v1113
        %v1255 = vpop.f32.mrf.mxu0
        %v1256 = vadd.f32 0.0, %v1255
        %1257 = vdwg.mxu0
        %v1258 = vadd.f32 %v827, %v1136
        %v1259 = vadd.f32 %v830, %v1139
        %v1260 = vadd.f32 %v833, %v1142
        %v1261 = vadd.f32 %v836, %v1145
        %v1262 = vadd.f32 %v839, %v1148
        %v1263 = vadd.f32 %v842, %v1151
        %v1264 = vadd.f32 %v845, %v1154
        %v1265 = vadd.f32 %v848, %v1157
        %v1266 = vadd.f32 %v851, %v1160
        %v1267 = vadd.f32 %v854, %v1163
        %v1268 = vadd.f32 %v857, %v1166
        %v1269 = vadd.f32 %v860, %v1169
        %v1270 = vadd.f32 %v863, %v1172
        %v1271 = vadd.f32 %v866, %v1175
        %v1272 = vadd.f32 %v869, %v1178
        %v1273 = vadd.f32 %v872, %v1181
        %v1274 = vadd.f32 %v875, %v1184
        %v1275 = vadd.f32 %v878, %v1187
        %v1276 = vadd.f32 %v881, %v1190
        %v1277 = vadd.f32 %v884, %v1193
        %v1278 = vadd.f32 %v887, %v1196
        %v1279 = vadd.f32 %v890, %v1199
        %v1280 = vadd.f32 %v893, %v1202
        %v1281 = vadd.f32 %v896, %v1205
        %v1282 = vadd.f32 %v899, %v1208
        %v1283 = vadd.f32 %v902, %v1211
        %v1284 = vadd.f32 %v905, %v1214
        %v1285 = vadd.f32 %v908, %v1217
        %v1286 = vadd.f32 %v911, %v1220
        %v1287 = vadd.f32 %v914, %v1223
        %v1288 = vadd.f32 %v917, %v1226
        %v1289 = vadd.f32 %v920, %v1229
        %v1290 = vadd.f32 %v923, %v1232
        %v1291 = vadd.f32 %v926, %v1235
        %v1292 = vadd.f32 %v929, %v1238
        %v1293 = vadd.f32 %v932, %v1241
        %v1294 = vadd.f32 %v935, %v1244
        %v1295 = vadd.f32 %v938, %v1247
        %v1296 = vadd.f32 %v941, %v1250
        %v1297 = vadd.f32 %v944, %v1253
        %v1298 = vadd.f32 %v947, %v1256
        %v1299 = vld [vmem:[%s329 + $0x17] sm:$0xff]
        %v1300 = vld [vmem:[%s329 + $0x1f] sm:$0xff]
        %v1301 = vld [vmem:[%s329 + $0x27] sm:$0xff]
        %v1302 = vld [vmem:[%s329 + $0x2f] sm:$0xff]
        %v1303 = vld [vmem:[%s329 + $0x37] sm:$0xff]
        %v1304 = vld [vmem:[%s329 + $0x3f] sm:$0xff]
        %v1305 = vld [vmem:[%s329 + $0x47] sm:$0xff]
        %v1306 = vld [vmem:[%s329 + $0x4f] sm:$0xff]
        %v1307 = vld [vmem:[%s329 + $0x57] sm:$0xff]
        %v1308 = vld [vmem:[%s329 + $0x5f] sm:$0xff]
        %v1309 = vld [vmem:[%s329 + $0x67] sm:$0xff]
        %v1310 = vld [vmem:[%s329 + $0x6f] sm:$0xff]
        %v1311 = vld [vmem:[%s329 + $0x77] sm:$0xff]
        %v1312 = vld [vmem:[%s329 + $0x7f] sm:$0xff]
        %v1313 = vld [vmem:[%s329 + $0x87] sm:$0xff]
        %v1314 = vld [vmem:[%s329 + $0x8f] sm:$0xff]
        %v1315 = vld [vmem:[%s329 + $0x97] sm:$0xff]
        %v1316 = vld [vmem:[%s329 + $0x9f] sm:$0xff]
        %v1317 = vld [vmem:[%s329 + $0xa7] sm:$0xff]
        %v1318 = vld [vmem:[%s329 + $0xaf] sm:$0xff]
        %v1319 = vld [vmem:[%s329 + $0xb7] sm:$0xff]
        %v1320 = vld [vmem:[%s329 + $0xbf] sm:$0xff]
        %v1321 = vld [vmem:[%s329 + $0xc7] sm:$0xff]
        %v1322 = vld [vmem:[%s329 + $0xcf] sm:$0xff]
        %v1323 = vld [vmem:[%s329 + $0xd7] sm:$0xff]
        %v1324 = vld [vmem:[%s329 + $0xdf] sm:$0xff]
        %v1325 = vld [vmem:[%s329 + $0xe7] sm:$0xff]
        %v1326 = vld [vmem:[%s329 + $0xef] sm:$0xff]
        %v1327 = vld [vmem:[%s329 + $0xf7] sm:$0xff]
        %v1328 = vld [vmem:[%s329 + $0xff] sm:$0xff]
        %v1329 = vld [vmem:[%s329 + $0x107] sm:$0xff]
        %v1330 = vld [vmem:[%s329 + $0x10f] sm:$0xff]
        %v1331 = vld [vmem:[%s329 + $0x117] sm:$0xff]
        %v1332 = vld [vmem:[%s329 + $0x11f] sm:$0xff]
        %v1333 = vld [vmem:[%s329 + $0x127] sm:$0xff]
        %v1334 = vld [vmem:[%s329 + $0x12f] sm:$0xff]
        %v1335 = vld [vmem:[%s329 + $0x137] sm:$0xff]
        %v1336 = vld [vmem:[%s329 + $0x13f] sm:$0xff]
        %v1337 = vld [vmem:[%s329 + $0x147] sm:$0xff]
        %v1338 = vld [vmem:[%s329 + $0x14f] sm:$0xff]
        %v1339 = vld [vmem:[%s329 + $0x157] sm:$0xf]
        %s1340 = scalar_lea.vmem %s1, 12
        %v1341 = vld [vmem:[%s1340] sm:$0x7]
        %v1343 = vsel %vm415, %v1299, 0
        %v1346 = vsel %vm415, %v1300, 0
        %v1349 = vsel %vm415, %v1301, 0
        %v1352 = vsel %vm415, %v1302, 0
        %v1355 = vsel %vm415, %v1303, 0
        %v1358 = vsel %vm415, %v1304, 0
        %v1361 = vsel %vm415, %v1305, 0
        %v1364 = vsel %vm415, %v1306, 0
        %v1367 = vsel %vm415, %v1307, 0
        %v1370 = vsel %vm415, %v1308, 0
        %v1373 = vsel %vm415, %v1309, 0
        %v1376 = vsel %vm415, %v1310, 0
        %v1379 = vsel %vm415, %v1311, 0
        %v1382 = vsel %vm415, %v1312, 0
        %v1385 = vsel %vm415, %v1313, 0
        %v1388 = vsel %vm415, %v1314, 0
        %v1391 = vsel %vm415, %v1315, 0
        %v1394 = vsel %vm415, %v1316, 0
        %v1397 = vsel %vm415, %v1317, 0
        %v1400 = vsel %vm415, %v1318, 0
        %v1403 = vsel %vm415, %v1319, 0
        %v1406 = vsel %vm415, %v1320, 0
        %v1409 = vsel %vm415, %v1321, 0
        %v1412 = vsel %vm415, %v1322, 0
        %v1415 = vsel %vm415, %v1323, 0
        %v1418 = vsel %vm415, %v1324, 0
        %v1421 = vsel %vm415, %v1325, 0
        %v1424 = vsel %vm415, %v1326, 0
        %v1427 = vsel %vm415, %v1327, 0
        %v1430 = vsel %vm415, %v1328, 0
        %v1433 = vsel %vm415, %v1329, 0
        %v1436 = vsel %vm415, %v1330, 0
        %v1439 = vsel %vm415, %v1331, 0
        %v1442 = vsel %vm415, %v1332, 0
        %v1445 = vsel %vm415, %v1333, 0
        %v1448 = vsel %vm415, %v1334, 0
        %v1451 = vsel %vm415, %v1335, 0
        %v1454 = vsel %vm415, %v1336, 0
        %v1457 = vsel %vm415, %v1337, 0
        %v1460 = vsel %vm415, %v1338, 0
        %v1463 = vsel %vm415, %v1339, 0
        %v1466 = vsel %vm539, %v1341, 0
        %1468 = vmatpush.msra.mxu0 0.0
        %1469 = vmatpush.msra.mxu0 0.0
        %1470 = vmatpush.msra.mxu0 0.0
        %1471 = vmatpush.msra.mxu0 0.0
        %1472 = vmatpush.msra.mxu0 0.0
        %1473 = vmatpush.msra.mxu0 0.0
        %1474 = vmatpush.msra.mxu0 0.0
        %1475 = vmatpush.msra.mxu0 0.0
        %1476 = vmatpush.msra.mxu0 0.0
        %1477 = vmatpush.msra.mxu0 0.0
        %1478 = vmatpush.msra.mxu0 0.0
        %1479 = vmatpush.msra.mxu0 0.0
        %1480 = vmatpush.msra.mxu0 0.0
        %1481 = vmatpush.msra.mxu0 0.0
        %1482 = vmatpush.msra.mxu0 0.0
        %1483 = vmatpush.msra.mxu0 %v1466
        %1484 = vmatmul.f32.gmra.mxu0 %v1343
        %v1485 = vpop.f32.mrf.mxu0
        %v1486 = vadd.f32 0.0, %v1485
        %1487 = vmatmul.f32.gmra.mxu0 %v1346
        %v1488 = vpop.f32.mrf.mxu0
        %v1489 = vadd.f32 0.0, %v1488
        %1490 = vmatmul.f32.gmra.mxu0 %v1349
        %v1491 = vpop.f32.mrf.mxu0
        %v1492 = vadd.f32 0.0, %v1491
        %1493 = vmatmul.f32.gmra.mxu0 %v1352
        %v1494 = vpop.f32.mrf.mxu0
        %v1495 = vadd.f32 0.0, %v1494
        %1496 = vmatmul.f32.gmra.mxu0 %v1355
        %v1497 = vpop.f32.mrf.mxu0
        %v1498 = vadd.f32 0.0, %v1497
        %1499 = vmatmul.f32.gmra.mxu0 %v1358
        %v1500 = vpop.f32.mrf.mxu0
        %v1501 = vadd.f32 0.0, %v1500
        %1502 = vmatmul.f32.gmra.mxu0 %v1361
        %v1503 = vpop.f32.mrf.mxu0
        %v1504 = vadd.f32 0.0, %v1503
        %1505 = vmatmul.f32.gmra.mxu0 %v1364
        %v1506 = vpop.f32.mrf.mxu0
        %v1507 = vadd.f32 0.0, %v1506
        %1508 = vmatmul.f32.gmra.mxu0 %v1367
        %v1509 = vpop.f32.mrf.mxu0
        %v1510 = vadd.f32 0.0, %v1509
        %1511 = vmatmul.f32.gmra.mxu0 %v1370
        %v1512 = vpop.f32.mrf.mxu0
        %v1513 = vadd.f32 0.0, %v1512
        %1514 = vmatmul.f32.gmra.mxu0 %v1373
        %v1515 = vpop.f32.mrf.mxu0
        %v1516 = vadd.f32 0.0, %v1515
        %1517 = vmatmul.f32.gmra.mxu0 %v1376
        %v1518 = vpop.f32.mrf.mxu0
        %v1519 = vadd.f32 0.0, %v1518
        %1520 = vmatmul.f32.gmra.mxu0 %v1379
        %v1521 = vpop.f32.mrf.mxu0
        %v1522 = vadd.f32 0.0, %v1521
        %1523 = vmatmul.f32.gmra.mxu0 %v1382
        %v1524 = vpop.f32.mrf.mxu0
        %v1525 = vadd.f32 0.0, %v1524
        %1526 = vmatmul.f32.gmra.mxu0 %v1385
        %v1527 = vpop.f32.mrf.mxu0
        %v1528 = vadd.f32 0.0, %v1527
        %1529 = vmatmul.f32.gmra.mxu0 %v1388
        %v1530 = vpop.f32.mrf.mxu0
        %v1531 = vadd.f32 0.0, %v1530
        %1532 = vmatmul.f32.gmra.mxu0 %v1391
        %v1533 = vpop.f32.mrf.mxu0
        %v1534 = vadd.f32 0.0, %v1533
        %1535 = vmatmul.f32.gmra.mxu0 %v1394
        %v1536 = vpop.f32.mrf.mxu0
        %v1537 = vadd.f32 0.0, %v1536
        %1538 = vmatmul.f32.gmra.mxu0 %v1397
        %v1539 = vpop.f32.mrf.mxu0
        %v1540 = vadd.f32 0.0, %v1539
        %1541 = vmatmul.f32.gmra.mxu0 %v1400
        %v1542 = vpop.f32.mrf.mxu0
        %v1543 = vadd.f32 0.0, %v1542
        %1544 = vmatmul.f32.gmra.mxu0 %v1403
        %v1545 = vpop.f32.mrf.mxu0
        %v1546 = vadd.f32 0.0, %v1545
        %1547 = vmatmul.f32.gmra.mxu0 %v1406
        %v1548 = vpop.f32.mrf.mxu0
        %v1549 = vadd.f32 0.0, %v1548
        %1550 = vmatmul.f32.gmra.mxu0 %v1409
        %v1551 = vpop.f32.mrf.mxu0
        %v1552 = vadd.f32 0.0, %v1551
        %1553 = vmatmul.f32.gmra.mxu0 %v1412
        %v1554 = vpop.f32.mrf.mxu0
        %v1555 = vadd.f32 0.0, %v1554
        %1556 = vmatmul.f32.gmra.mxu0 %v1415
        %v1557 = vpop.f32.mrf.mxu0
        %v1558 = vadd.f32 0.0, %v1557
        %1559 = vmatmul.f32.gmra.mxu0 %v1418
        %v1560 = vpop.f32.mrf.mxu0
        %v1561 = vadd.f32 0.0, %v1560
        %1562 = vmatmul.f32.gmra.mxu0 %v1421
        %v1563 = vpop.f32.mrf.mxu0
        %v1564 = vadd.f32 0.0, %v1563
        %1565 = vmatmul.f32.gmra.mxu0 %v1424
        %v1566 = vpop.f32.mrf.mxu0
        %v1567 = vadd.f32 0.0, %v1566
        %1568 = vmatmul.f32.gmra.mxu0 %v1427
        %v1569 = vpop.f32.mrf.mxu0
        %v1570 = vadd.f32 0.0, %v1569
        %1571 = vmatmul.f32.gmra.mxu0 %v1430
        %v1572 = vpop.f32.mrf.mxu0
        %v1573 = vadd.f32 0.0, %v1572
        %1574 = vmatmul.f32.gmra.mxu0 %v1433
        %v1575 = vpop.f32.mrf.mxu0
        %v1576 = vadd.f32 0.0, %v1575
        %1577 = vmatmul.f32.gmra.mxu0 %v1436
        %v1578 = vpop.f32.mrf.mxu0
        %v1579 = vadd.f32 0.0, %v1578
        %1580 = vmatmul.f32.gmra.mxu0 %v1439
        %v1581 = vpop.f32.mrf.mxu0
        %v1582 = vadd.f32 0.0, %v1581
        %1583 = vmatmul.f32.gmra.mxu0 %v1442
        %v1584 = vpop.f32.mrf.mxu0
        %v1585 = vadd.f32 0.0, %v1584
        %1586 = vmatmul.f32.gmra.mxu0 %v1445
        %v1587 = vpop.f32.mrf.mxu0
        %v1588 = vadd.f32 0.0, %v1587
        %1589 = vmatmul.f32.gmra.mxu0 %v1448
        %v1590 = vpop.f32.mrf.mxu0
        %v1591 = vadd.f32 0.0, %v1590
        %1592 = vmatmul.f32.gmra.mxu0 %v1451
        %v1593 = vpop.f32.mrf.mxu0
        %v1594 = vadd.f32 0.0, %v1593
        %1595 = vmatmul.f32.gmra.mxu0 %v1454
        %v1596 = vpop.f32.mrf.mxu0
        %v1597 = vadd.f32 0.0, %v1596
        %1598 = vmatmul.f32.gmra.mxu0 %v1457
        %v1599 = vpop.f32.mrf.mxu0
        %v1600 = vadd.f32 0.0, %v1599
        %1601 = vmatmul.f32.gmra.mxu0 %v1460
        %v1602 = vpop.f32.mrf.mxu0
        %v1603 = vadd.f32 0.0, %v1602
        %1604 = vmatmul.f32.gmra.mxu0 %v1463
        %v1605 = vpop.f32.mrf.mxu0
        %v1606 = vadd.f32 0.0, %v1605
        %1607 = vdwg.mxu0
        %v1608 = vadd.f32 %v1258, %v1486
        %v1609 = vadd.f32 %v1259, %v1489
        %v1610 = vadd.f32 %v1260, %v1492
        %v1611 = vadd.f32 %v1261, %v1495
        %v1612 = vadd.f32 %v1262, %v1498
        %v1613 = vadd.f32 %v1263, %v1501
        %v1614 = vadd.f32 %v1264, %v1504
        %v1615 = vadd.f32 %v1265, %v1507
        %v1616 = vadd.f32 %v1266, %v1510
        %v1617 = vadd.f32 %v1267, %v1513
        %v1618 = vadd.f32 %v1268, %v1516
        %v1619 = vadd.f32 %v1269, %v1519
        %v1620 = vadd.f32 %v1270, %v1522
        %v1621 = vadd.f32 %v1271, %v1525
        %v1622 = vadd.f32 %v1272, %v1528
        %v1623 = vadd.f32 %v1273, %v1531
        %v1624 = vadd.f32 %v1274, %v1534
        %v1625 = vadd.f32 %v1275, %v1537
        %v1626 = vadd.f32 %v1276, %v1540
        %v1627 = vadd.f32 %v1277, %v1543
        %v1628 = vadd.f32 %v1278, %v1546
        %v1629 = vadd.f32 %v1279, %v1549
        %v1630 = vadd.f32 %v1280, %v1552
        %v1631 = vadd.f32 %v1281, %v1555
        %v1632 = vadd.f32 %v1282, %v1558
        %v1633 = vadd.f32 %v1283, %v1561
        %v1634 = vadd.f32 %v1284, %v1564
        %v1635 = vadd.f32 %v1285, %v1567
        %v1636 = vadd.f32 %v1286, %v1570
        %v1637 = vadd.f32 %v1287, %v1573
        %v1638 = vadd.f32 %v1288, %v1576
        %v1639 = vadd.f32 %v1289, %v1579
        %v1640 = vadd.f32 %v1290, %v1582
        %v1641 = vadd.f32 %v1291, %v1585
        %v1642 = vadd.f32 %v1292, %v1588
        %v1643 = vadd.f32 %v1293, %v1591
        %v1644 = vadd.f32 %v1294, %v1594
        %v1645 = vadd.f32 %v1295, %v1597
        %v1646 = vadd.f32 %v1296, %v1600
        %v1647 = vadd.f32 %v1297, %v1603
        %v1648 = vadd.f32 %v1298, %v1606
        %v1649 = vld [vmem:[%s329 + $0x18] sm:$0xff]
        %v1650 = vld [vmem:[%s329 + $0x20] sm:$0xff]
        %v1651 = vld [vmem:[%s329 + $0x28] sm:$0xff]
        %v1652 = vld [vmem:[%s329 + $0x30] sm:$0xff]
        %v1653 = vld [vmem:[%s329 + $0x38] sm:$0xff]
        %v1654 = vld [vmem:[%s329 + $0x40] sm:$0xff]
        %v1655 = vld [vmem:[%s329 + $0x48] sm:$0xff]
        %v1656 = vld [vmem:[%s329 + $0x50] sm:$0xff]
        %v1657 = vld [vmem:[%s329 + $0x58] sm:$0xff]
        %v1658 = vld [vmem:[%s329 + $0x60] sm:$0xff]
        %v1659 = vld [vmem:[%s329 + $0x68] sm:$0xff]
        %v1660 = vld [vmem:[%s329 + $0x70] sm:$0xff]
        %v1661 = vld [vmem:[%s329 + $0x78] sm:$0xff]
        %v1662 = vld [vmem:[%s329 + $0x80] sm:$0xff]
        %v1663 = vld [vmem:[%s329 + $0x88] sm:$0xff]
        %v1664 = vld [vmem:[%s329 + $0x90] sm:$0xff]
        %v1665 = vld [vmem:[%s329 + $0x98] sm:$0xff]
        %v1666 = vld [vmem:[%s329 + $0xa0] sm:$0xff]
        %v1667 = vld [vmem:[%s329 + $0xa8] sm:$0xff]
        %v1668 = vld [vmem:[%s329 + $0xb0] sm:$0xff]
        %v1669 = vld [vmem:[%s329 + $0xb8] sm:$0xff]
        %v1670 = vld [vmem:[%s329 + $0xc0] sm:$0xff]
        %v1671 = vld [vmem:[%s329 + $0xc8] sm:$0xff]
        %v1672 = vld [vmem:[%s329 + $0xd0] sm:$0xff]
        %v1673 = vld [vmem:[%s329 + $0xd8] sm:$0xff]
        %v1674 = vld [vmem:[%s329 + $0xe0] sm:$0xff]
        %v1675 = vld [vmem:[%s329 + $0xe8] sm:$0xff]
        %v1676 = vld [vmem:[%s329 + $0xf0] sm:$0xff]
        %v1677 = vld [vmem:[%s329 + $0xf8] sm:$0xff]
        %v1678 = vld [vmem:[%s329 + $0x100] sm:$0xff]
        %v1679 = vld [vmem:[%s329 + $0x108] sm:$0xff]
        %v1680 = vld [vmem:[%s329 + $0x110] sm:$0xff]
        %v1681 = vld [vmem:[%s329 + $0x118] sm:$0xff]
        %v1682 = vld [vmem:[%s329 + $0x120] sm:$0xff]
        %v1683 = vld [vmem:[%s329 + $0x128] sm:$0xff]
        %v1684 = vld [vmem:[%s329 + $0x130] sm:$0xff]
        %v1685 = vld [vmem:[%s329 + $0x138] sm:$0xff]
        %v1686 = vld [vmem:[%s329 + $0x140] sm:$0xff]
        %v1687 = vld [vmem:[%s329 + $0x148] sm:$0xff]
        %v1688 = vld [vmem:[%s329 + $0x150] sm:$0xff]
        %v1689 = vld [vmem:[%s329 + $0x158] sm:$0xf]
        %s1690 = scalar_lea.vmem %s1, 16
        %v1691 = vld [vmem:[%s1690] sm:$0x7]
        %v1693 = vsel %vm415, %v1649, 0
        %v1696 = vsel %vm415, %v1650, 0
        %v1699 = vsel %vm415, %v1651, 0
        %v1702 = vsel %vm415, %v1652, 0
        %v1705 = vsel %vm415, %v1653, 0
        %v1708 = vsel %vm415, %v1654, 0
        %v1711 = vsel %vm415, %v1655, 0
        %v1714 = vsel %vm415, %v1656, 0
        %v1717 = vsel %vm415, %v1657, 0
        %v1720 = vsel %vm415, %v1658, 0
        %v1723 = vsel %vm415, %v1659, 0
        %v1726 = vsel %vm415, %v1660, 0
        %v1729 = vsel %vm415, %v1661, 0
        %v1732 = vsel %vm415, %v1662, 0
        %v1735 = vsel %vm415, %v1663, 0
        %v1738 = vsel %vm415, %v1664, 0
        %v1741 = vsel %vm415, %v1665, 0
        %v1744 = vsel %vm415, %v1666, 0
        %v1747 = vsel %vm415, %v1667, 0
        %v1750 = vsel %vm415, %v1668, 0
        %v1753 = vsel %vm415, %v1669, 0
        %v1756 = vsel %vm415, %v1670, 0
        %v1759 = vsel %vm415, %v1671, 0
        %v1762 = vsel %vm415, %v1672, 0
        %v1765 = vsel %vm415, %v1673, 0
        %v1768 = vsel %vm415, %v1674, 0
        %v1771 = vsel %vm415, %v1675, 0
        %v1774 = vsel %vm415, %v1676, 0
        %v1777 = vsel %vm415, %v1677, 0
        %v1780 = vsel %vm415, %v1678, 0
        %v1783 = vsel %vm415, %v1679, 0
        %v1786 = vsel %vm415, %v1680, 0
        %v1789 = vsel %vm415, %v1681, 0
        %v1792 = vsel %vm415, %v1682, 0
        %v1795 = vsel %vm415, %v1683, 0
        %v1798 = vsel %vm415, %v1684, 0
        %v1801 = vsel %vm415, %v1685, 0
        %v1804 = vsel %vm415, %v1686, 0
        %v1807 = vsel %vm415, %v1687, 0
        %v1810 = vsel %vm415, %v1688, 0
        %v1813 = vsel %vm415, %v1689, 0
        %v1816 = vsel %vm539, %v1691, 0
        %1818 = vmatpush.msra.mxu0 0.0
        %1819 = vmatpush.msra.mxu0 0.0
        %1820 = vmatpush.msra.mxu0 0.0
        %1821 = vmatpush.msra.mxu0 0.0
        %1822 = vmatpush.msra.mxu0 0.0
        %1823 = vmatpush.msra.mxu0 0.0
        %1824 = vmatpush.msra.mxu0 0.0
        %1825 = vmatpush.msra.mxu0 0.0
        %1826 = vmatpush.msra.mxu0 0.0
        %1827 = vmatpush.msra.mxu0 0.0
        %1828 = vmatpush.msra.mxu0 0.0
        %1829 = vmatpush.msra.mxu0 0.0
        %1830 = vmatpush.msra.mxu0 0.0
        %1831 = vmatpush.msra.mxu0 0.0
        %1832 = vmatpush.msra.mxu0 0.0
        %1833 = vmatpush.msra.mxu0 %v1816
        %1834 = vmatmul.f32.gmra.mxu0 %v1693
        %v1835 = vpop.f32.mrf.mxu0
        %v1836 = vadd.f32 0.0, %v1835
        %1837 = vmatmul.f32.gmra.mxu0 %v1696
        %v1838 = vpop.f32.mrf.mxu0
        %v1839 = vadd.f32 0.0, %v1838
        %1840 = vmatmul.f32.gmra.mxu0 %v1699
        %v1841 = vpop.f32.mrf.mxu0
        %v1842 = vadd.f32 0.0, %v1841
        %1843 = vmatmul.f32.gmra.mxu0 %v1702
        %v1844 = vpop.f32.mrf.mxu0
        %v1845 = vadd.f32 0.0, %v1844
        %1846 = vmatmul.f32.gmra.mxu0 %v1705
        %v1847 = vpop.f32.mrf.mxu0
        %v1848 = vadd.f32 0.0, %v1847
        %1849 = vmatmul.f32.gmra.mxu0 %v1708
        %v1850 = vpop.f32.mrf.mxu0
        %v1851 = vadd.f32 0.0, %v1850
        %1852 = vmatmul.f32.gmra.mxu0 %v1711
        %v1853 = vpop.f32.mrf.mxu0
        %v1854 = vadd.f32 0.0, %v1853
        %1855 = vmatmul.f32.gmra.mxu0 %v1714
        %v1856 = vpop.f32.mrf.mxu0
        %v1857 = vadd.f32 0.0, %v1856
        %1858 = vmatmul.f32.gmra.mxu0 %v1717
        %v1859 = vpop.f32.mrf.mxu0
        %v1860 = vadd.f32 0.0, %v1859
        %1861 = vmatmul.f32.gmra.mxu0 %v1720
        %v1862 = vpop.f32.mrf.mxu0
        %v1863 = vadd.f32 0.0, %v1862
        %1864 = vmatmul.f32.gmra.mxu0 %v1723
        %v1865 = vpop.f32.mrf.mxu0
        %v1866 = vadd.f32 0.0, %v1865
        %1867 = vmatmul.f32.gmra.mxu0 %v1726
        %v1868 = vpop.f32.mrf.mxu0
        %v1869 = vadd.f32 0.0, %v1868
        %1870 = vmatmul.f32.gmra.mxu0 %v1729
        %v1871 = vpop.f32.mrf.mxu0
        %v1872 = vadd.f32 0.0, %v1871
        %1873 = vmatmul.f32.gmra.mxu0 %v1732
        %v1874 = vpop.f32.mrf.mxu0
        %v1875 = vadd.f32 0.0, %v1874
        %1876 = vmatmul.f32.gmra.mxu0 %v1735
        %v1877 = vpop.f32.mrf.mxu0
        %v1878 = vadd.f32 0.0, %v1877
        %1879 = vmatmul.f32.gmra.mxu0 %v1738
        %v1880 = vpop.f32.mrf.mxu0
        %v1881 = vadd.f32 0.0, %v1880
        %1882 = vmatmul.f32.gmra.mxu0 %v1741
        %v1883 = vpop.f32.mrf.mxu0
        %v1884 = vadd.f32 0.0, %v1883
        %1885 = vmatmul.f32.gmra.mxu0 %v1744
        %v1886 = vpop.f32.mrf.mxu0
        %v1887 = vadd.f32 0.0, %v1886
        %1888 = vmatmul.f32.gmra.mxu0 %v1747
        %v1889 = vpop.f32.mrf.mxu0
        %v1890 = vadd.f32 0.0, %v1889
        %1891 = vmatmul.f32.gmra.mxu0 %v1750
        %v1892 = vpop.f32.mrf.mxu0
        %v1893 = vadd.f32 0.0, %v1892
        %1894 = vmatmul.f32.gmra.mxu0 %v1753
        %v1895 = vpop.f32.mrf.mxu0
        %v1896 = vadd.f32 0.0, %v1895
        %1897 = vmatmul.f32.gmra.mxu0 %v1756
        %v1898 = vpop.f32.mrf.mxu0
        %v1899 = vadd.f32 0.0, %v1898
        %1900 = vmatmul.f32.gmra.mxu0 %v1759
        %v1901 = vpop.f32.mrf.mxu0
        %v1902 = vadd.f32 0.0, %v1901
        %1903 = vmatmul.f32.gmra.mxu0 %v1762
        %v1904 = vpop.f32.mrf.mxu0
        %v1905 = vadd.f32 0.0, %v1904
        %1906 = vmatmul.f32.gmra.mxu0 %v1765
        %v1907 = vpop.f32.mrf.mxu0
        %v1908 = vadd.f32 0.0, %v1907
        %1909 = vmatmul.f32.gmra.mxu0 %v1768
        %v1910 = vpop.f32.mrf.mxu0
        %v1911 = vadd.f32 0.0, %v1910
        %1912 = vmatmul.f32.gmra.mxu0 %v1771
        %v1913 = vpop.f32.mrf.mxu0
        %v1914 = vadd.f32 0.0, %v1913
        %1915 = vmatmul.f32.gmra.mxu0 %v1774
        %v1916 = vpop.f32.mrf.mxu0
        %v1917 = vadd.f32 0.0, %v1916
        %1918 = vmatmul.f32.gmra.mxu0 %v1777
        %v1919 = vpop.f32.mrf.mxu0
        %v1920 = vadd.f32 0.0, %v1919
        %1921 = vmatmul.f32.gmra.mxu0 %v1780
        %v1922 = vpop.f32.mrf.mxu0
        %v1923 = vadd.f32 0.0, %v1922
        %1924 = vmatmul.f32.gmra.mxu0 %v1783
        %v1925 = vpop.f32.mrf.mxu0
        %v1926 = vadd.f32 0.0, %v1925
        %1927 = vmatmul.f32.gmra.mxu0 %v1786
        %v1928 = vpop.f32.mrf.mxu0
        %v1929 = vadd.f32 0.0, %v1928
        %1930 = vmatmul.f32.gmra.mxu0 %v1789
        %v1931 = vpop.f32.mrf.mxu0
        %v1932 = vadd.f32 0.0, %v1931
        %1933 = vmatmul.f32.gmra.mxu0 %v1792
        %v1934 = vpop.f32.mrf.mxu0
        %v1935 = vadd.f32 0.0, %v1934
        %1936 = vmatmul.f32.gmra.mxu0 %v1795
        %v1937 = vpop.f32.mrf.mxu0
        %v1938 = vadd.f32 0.0, %v1937
        %1939 = vmatmul.f32.gmra.mxu0 %v1798
        %v1940 = vpop.f32.mrf.mxu0
        %v1941 = vadd.f32 0.0, %v1940
        %1942 = vmatmul.f32.gmra.mxu0 %v1801
        %v1943 = vpop.f32.mrf.mxu0
        %v1944 = vadd.f32 0.0, %v1943
        %1945 = vmatmul.f32.gmra.mxu0 %v1804
        %v1946 = vpop.f32.mrf.mxu0
        %v1947 = vadd.f32 0.0, %v1946
        %1948 = vmatmul.f32.gmra.mxu0 %v1807
        %v1949 = vpop.f32.mrf.mxu0
        %v1950 = vadd.f32 0.0, %v1949
        %1951 = vmatmul.f32.gmra.mxu0 %v1810
        %v1952 = vpop.f32.mrf.mxu0
        %v1953 = vadd.f32 0.0, %v1952
        %1954 = vmatmul.f32.gmra.mxu0 %v1813
        %v1955 = vpop.f32.mrf.mxu0
        %v1956 = vadd.f32 0.0, %v1955
        %1957 = vdwg.mxu0
        %v1958 = vadd.f32 %v1608, %v1836
        %v1959 = vadd.f32 %v1609, %v1839
        %v1960 = vadd.f32 %v1610, %v1842
        %v1961 = vadd.f32 %v1611, %v1845
        %v1962 = vadd.f32 %v1612, %v1848
        %v1963 = vadd.f32 %v1613, %v1851
        %v1964 = vadd.f32 %v1614, %v1854
        %v1965 = vadd.f32 %v1615, %v1857
        %v1966 = vadd.f32 %v1616, %v1860
        %v1967 = vadd.f32 %v1617, %v1863
        %v1968 = vadd.f32 %v1618, %v1866
        %v1969 = vadd.f32 %v1619, %v1869
        %v1970 = vadd.f32 %v1620, %v1872
        %v1971 = vadd.f32 %v1621, %v1875
        %v1972 = vadd.f32 %v1622, %v1878
        %v1973 = vadd.f32 %v1623, %v1881
        %v1974 = vadd.f32 %v1624, %v1884
        %v1975 = vadd.f32 %v1625, %v1887
        %v1976 = vadd.f32 %v1626, %v1890
        %v1977 = vadd.f32 %v1627, %v1893
        %v1978 = vadd.f32 %v1628, %v1896
        %v1979 = vadd.f32 %v1629, %v1899
        %v1980 = vadd.f32 %v1630, %v1902
        %v1981 = vadd.f32 %v1631, %v1905
        %v1982 = vadd.f32 %v1632, %v1908
        %v1983 = vadd.f32 %v1633, %v1911
        %v1984 = vadd.f32 %v1634, %v1914
        %v1985 = vadd.f32 %v1635, %v1917
        %v1986 = vadd.f32 %v1636, %v1920
        %v1987 = vadd.f32 %v1637, %v1923
        %v1988 = vadd.f32 %v1638, %v1926
        %v1989 = vadd.f32 %v1639, %v1929
        %v1990 = vadd.f32 %v1640, %v1932
        %v1991 = vadd.f32 %v1641, %v1935
        %v1992 = vadd.f32 %v1642, %v1938
        %v1993 = vadd.f32 %v1643, %v1941
        %v1994 = vadd.f32 %v1644, %v1944
        %v1995 = vadd.f32 %v1645, %v1947
        %v1996 = vadd.f32 %v1646, %v1950
        %v1997 = vadd.f32 %v1647, %v1953
        %v1998 = vadd.f32 %v1648, %v1956
        %v1999 = vld [vmem:[%s329 + $0x19] sm:$0xff]
        %v2000 = vld [vmem:[%s329 + $0x21] sm:$0xff]
        %v2001 = vld [vmem:[%s329 + $0x29] sm:$0xff]
        %v2002 = vld [vmem:[%s329 + $0x31] sm:$0xff]
        %v2003 = vld [vmem:[%s329 + $0x39] sm:$0xff]
        %v2004 = vld [vmem:[%s329 + $0x41] sm:$0xff]
        %v2005 = vld [vmem:[%s329 + $0x49] sm:$0xff]
        %v2006 = vld [vmem:[%s329 + $0x51] sm:$0xff]
        %v2007 = vld [vmem:[%s329 + $0x59] sm:$0xff]
        %v2008 = vld [vmem:[%s329 + $0x61] sm:$0xff]
        %v2009 = vld [vmem:[%s329 + $0x69] sm:$0xff]
        %v2010 = vld [vmem:[%s329 + $0x71] sm:$0xff]
        %v2011 = vld [vmem:[%s329 + $0x79] sm:$0xff]
        %v2012 = vld [vmem:[%s329 + $0x81] sm:$0xff]
        %v2013 = vld [vmem:[%s329 + $0x89] sm:$0xff]
        %v2014 = vld [vmem:[%s329 + $0x91] sm:$0xff]
        %v2015 = vld [vmem:[%s329 + $0x99] sm:$0xff]
        %v2016 = vld [vmem:[%s329 + $0xa1] sm:$0xff]
        %v2017 = vld [vmem:[%s329 + $0xa9] sm:$0xff]
        %v2018 = vld [vmem:[%s329 + $0xb1] sm:$0xff]
        %v2019 = vld [vmem:[%s329 + $0xb9] sm:$0xff]
        %v2020 = vld [vmem:[%s329 + $0xc1] sm:$0xff]
        %v2021 = vld [vmem:[%s329 + $0xc9] sm:$0xff]
        %v2022 = vld [vmem:[%s329 + $0xd1] sm:$0xff]
        %v2023 = vld [vmem:[%s329 + $0xd9] sm:$0xff]
        %v2024 = vld [vmem:[%s329 + $0xe1] sm:$0xff]
        %v2025 = vld [vmem:[%s329 + $0xe9] sm:$0xff]
        %v2026 = vld [vmem:[%s329 + $0xf1] sm:$0xff]
        %v2027 = vld [vmem:[%s329 + $0xf9] sm:$0xff]
        %v2028 = vld [vmem:[%s329 + $0x101] sm:$0xff]
        %v2029 = vld [vmem:[%s329 + $0x109] sm:$0xff]
        %v2030 = vld [vmem:[%s329 + $0x111] sm:$0xff]
        %v2031 = vld [vmem:[%s329 + $0x119] sm:$0xff]
        %v2032 = vld [vmem:[%s329 + $0x121] sm:$0xff]
        %v2033 = vld [vmem:[%s329 + $0x129] sm:$0xff]
        %v2034 = vld [vmem:[%s329 + $0x131] sm:$0xff]
        %v2035 = vld [vmem:[%s329 + $0x139] sm:$0xff]
        %v2036 = vld [vmem:[%s329 + $0x141] sm:$0xff]
        %v2037 = vld [vmem:[%s329 + $0x149] sm:$0xff]
        %v2038 = vld [vmem:[%s329 + $0x151] sm:$0xff]
        %v2039 = vld [vmem:[%s329 + $0x159] sm:$0xf]
        %s2040 = scalar_lea.vmem %s1, 20
        %v2041 = vld [vmem:[%s2040] sm:$0x7]
        %v2043 = vsel %vm415, %v1999, 0
        %v2046 = vsel %vm415, %v2000, 0
        %v2049 = vsel %vm415, %v2001, 0
        %v2052 = vsel %vm415, %v2002, 0
        %v2055 = vsel %vm415, %v2003, 0
        %v2058 = vsel %vm415, %v2004, 0
        %v2061 = vsel %vm415, %v2005, 0
        %v2064 = vsel %vm415, %v2006, 0
        %v2067 = vsel %vm415, %v2007, 0
        %v2070 = vsel %vm415, %v2008, 0
        %v2073 = vsel %vm415, %v2009, 0
        %v2076 = vsel %vm415, %v2010, 0
        %v2079 = vsel %vm415, %v2011, 0
        %v2082 = vsel %vm415, %v2012, 0
        %v2085 = vsel %vm415, %v2013, 0
        %v2088 = vsel %vm415, %v2014, 0
        %v2091 = vsel %vm415, %v2015, 0
        %v2094 = vsel %vm415, %v2016, 0
        %v2097 = vsel %vm415, %v2017, 0
        %v2100 = vsel %vm415, %v2018, 0
        %v2103 = vsel %vm415, %v2019, 0
        %v2106 = vsel %vm415, %v2020, 0
        %v2109 = vsel %vm415, %v2021, 0
        %v2112 = vsel %vm415, %v2022, 0
        %v2115 = vsel %vm415, %v2023, 0
        %v2118 = vsel %vm415, %v2024, 0
        %v2121 = vsel %vm415, %v2025, 0
        %v2124 = vsel %vm415, %v2026, 0
        %v2127 = vsel %vm415, %v2027, 0
        %v2130 = vsel %vm415, %v2028, 0
        %v2133 = vsel %vm415, %v2029, 0
        %v2136 = vsel %vm415, %v2030, 0
        %v2139 = vsel %vm415, %v2031, 0
        %v2142 = vsel %vm415, %v2032, 0
        %v2145 = vsel %vm415, %v2033, 0
        %v2148 = vsel %vm415, %v2034, 0
        %v2151 = vsel %vm415, %v2035, 0
        %v2154 = vsel %vm415, %v2036, 0
        %v2157 = vsel %vm415, %v2037, 0
        %v2160 = vsel %vm415, %v2038, 0
        %v2163 = vsel %vm415, %v2039, 0
        %v2166 = vsel %vm539, %v2041, 0
        %2168 = vmatpush.msra.mxu0 0.0
        %2169 = vmatpush.msra.mxu0 0.0
        %2170 = vmatpush.msra.mxu0 0.0
        %2171 = vmatpush.msra.mxu0 0.0
        %2172 = vmatpush.msra.mxu0 0.0
        %2173 = vmatpush.msra.mxu0 0.0
        %2174 = vmatpush.msra.mxu0 0.0
        %2175 = vmatpush.msra.mxu0 0.0
        %2176 = vmatpush.msra.mxu0 0.0
        %2177 = vmatpush.msra.mxu0 0.0
        %2178 = vmatpush.msra.mxu0 0.0
        %2179 = vmatpush.msra.mxu0 0.0
        %2180 = vmatpush.msra.mxu0 0.0
        %2181 = vmatpush.msra.mxu0 0.0
        %2182 = vmatpush.msra.mxu0 0.0
        %2183 = vmatpush.msra.mxu0 %v2166
        %2184 = vmatmul.f32.gmra.mxu0 %v2043
        %v2185 = vpop.f32.mrf.mxu0
        %v2186 = vadd.f32 0.0, %v2185
        %2187 = vmatmul.f32.gmra.mxu0 %v2046
        %v2188 = vpop.f32.mrf.mxu0
        %v2189 = vadd.f32 0.0, %v2188
        %2190 = vmatmul.f32.gmra.mxu0 %v2049
        %v2191 = vpop.f32.mrf.mxu0
        %v2192 = vadd.f32 0.0, %v2191
        %2193 = vmatmul.f32.gmra.mxu0 %v2052
        %v2194 = vpop.f32.mrf.mxu0
        %v2195 = vadd.f32 0.0, %v2194
        %2196 = vmatmul.f32.gmra.mxu0 %v2055
        %v2197 = vpop.f32.mrf.mxu0
        %v2198 = vadd.f32 0.0, %v2197
        %2199 = vmatmul.f32.gmra.mxu0 %v2058
        %v2200 = vpop.f32.mrf.mxu0
        %v2201 = vadd.f32 0.0, %v2200
        %2202 = vmatmul.f32.gmra.mxu0 %v2061
        %v2203 = vpop.f32.mrf.mxu0
        %v2204 = vadd.f32 0.0, %v2203
        %2205 = vmatmul.f32.gmra.mxu0 %v2064
        %v2206 = vpop.f32.mrf.mxu0
        %v2207 = vadd.f32 0.0, %v2206
        %2208 = vmatmul.f32.gmra.mxu0 %v2067
        %v2209 = vpop.f32.mrf.mxu0
        %v2210 = vadd.f32 0.0, %v2209
        %2211 = vmatmul.f32.gmra.mxu0 %v2070
        %v2212 = vpop.f32.mrf.mxu0
        %v2213 = vadd.f32 0.0, %v2212
        %2214 = vmatmul.f32.gmra.mxu0 %v2073
        %v2215 = vpop.f32.mrf.mxu0
        %v2216 = vadd.f32 0.0, %v2215
        %2217 = vmatmul.f32.gmra.mxu0 %v2076
        %v2218 = vpop.f32.mrf.mxu0
        %v2219 = vadd.f32 0.0, %v2218
        %2220 = vmatmul.f32.gmra.mxu0 %v2079
        %v2221 = vpop.f32.mrf.mxu0
        %v2222 = vadd.f32 0.0, %v2221
        %2223 = vmatmul.f32.gmra.mxu0 %v2082
        %v2224 = vpop.f32.mrf.mxu0
        %v2225 = vadd.f32 0.0, %v2224
        %2226 = vmatmul.f32.gmra.mxu0 %v2085
        %v2227 = vpop.f32.mrf.mxu0
        %v2228 = vadd.f32 0.0, %v2227
        %2229 = vmatmul.f32.gmra.mxu0 %v2088
        %v2230 = vpop.f32.mrf.mxu0
        %v2231 = vadd.f32 0.0, %v2230
        %2232 = vmatmul.f32.gmra.mxu0 %v2091
        %v2233 = vpop.f32.mrf.mxu0
        %v2234 = vadd.f32 0.0, %v2233
        %2235 = vmatmul.f32.gmra.mxu0 %v2094
        %v2236 = vpop.f32.mrf.mxu0
        %v2237 = vadd.f32 0.0, %v2236
        %2238 = vmatmul.f32.gmra.mxu0 %v2097
        %v2239 = vpop.f32.mrf.mxu0
        %v2240 = vadd.f32 0.0, %v2239
        %2241 = vmatmul.f32.gmra.mxu0 %v2100
        %v2242 = vpop.f32.mrf.mxu0
        %v2243 = vadd.f32 0.0, %v2242
        %2244 = vmatmul.f32.gmra.mxu0 %v2103
        %v2245 = vpop.f32.mrf.mxu0
        %v2246 = vadd.f32 0.0, %v2245
        %2247 = vmatmul.f32.gmra.mxu0 %v2106
        %v2248 = vpop.f32.mrf.mxu0
        %v2249 = vadd.f32 0.0, %v2248
        %2250 = vmatmul.f32.gmra.mxu0 %v2109
        %v2251 = vpop.f32.mrf.mxu0
        %v2252 = vadd.f32 0.0, %v2251
        %2253 = vmatmul.f32.gmra.mxu0 %v2112
        %v2254 = vpop.f32.mrf.mxu0
        %v2255 = vadd.f32 0.0, %v2254
        %2256 = vmatmul.f32.gmra.mxu0 %v2115
        %v2257 = vpop.f32.mrf.mxu0
        %v2258 = vadd.f32 0.0, %v2257
        %2259 = vmatmul.f32.gmra.mxu0 %v2118
        %v2260 = vpop.f32.mrf.mxu0
        %v2261 = vadd.f32 0.0, %v2260
        %2262 = vmatmul.f32.gmra.mxu0 %v2121
        %v2263 = vpop.f32.mrf.mxu0
        %v2264 = vadd.f32 0.0, %v2263
        %2265 = vmatmul.f32.gmra.mxu0 %v2124
        %v2266 = vpop.f32.mrf.mxu0
        %v2267 = vadd.f32 0.0, %v2266
        %2268 = vmatmul.f32.gmra.mxu0 %v2127
        %v2269 = vpop.f32.mrf.mxu0
        %v2270 = vadd.f32 0.0, %v2269
        %2271 = vmatmul.f32.gmra.mxu0 %v2130
        %v2272 = vpop.f32.mrf.mxu0
        %v2273 = vadd.f32 0.0, %v2272
        %2274 = vmatmul.f32.gmra.mxu0 %v2133
        %v2275 = vpop.f32.mrf.mxu0
        %v2276 = vadd.f32 0.0, %v2275
        %2277 = vmatmul.f32.gmra.mxu0 %v2136
        %v2278 = vpop.f32.mrf.mxu0
        %v2279 = vadd.f32 0.0, %v2278
        %2280 = vmatmul.f32.gmra.mxu0 %v2139
        %v2281 = vpop.f32.mrf.mxu0
        %v2282 = vadd.f32 0.0, %v2281
        %2283 = vmatmul.f32.gmra.mxu0 %v2142
        %v2284 = vpop.f32.mrf.mxu0
        %v2285 = vadd.f32 0.0, %v2284
        %2286 = vmatmul.f32.gmra.mxu0 %v2145
        %v2287 = vpop.f32.mrf.mxu0
        %v2288 = vadd.f32 0.0, %v2287
        %2289 = vmatmul.f32.gmra.mxu0 %v2148
        %v2290 = vpop.f32.mrf.mxu0
        %v2291 = vadd.f32 0.0, %v2290
        %2292 = vmatmul.f32.gmra.mxu0 %v2151
        %v2293 = vpop.f32.mrf.mxu0
        %v2294 = vadd.f32 0.0, %v2293
        %2295 = vmatmul.f32.gmra.mxu0 %v2154
        %v2296 = vpop.f32.mrf.mxu0
        %v2297 = vadd.f32 0.0, %v2296
        %2298 = vmatmul.f32.gmra.mxu0 %v2157
        %v2299 = vpop.f32.mrf.mxu0
        %v2300 = vadd.f32 0.0, %v2299
        %2301 = vmatmul.f32.gmra.mxu0 %v2160
        %v2302 = vpop.f32.mrf.mxu0
        %v2303 = vadd.f32 0.0, %v2302
        %2304 = vmatmul.f32.gmra.mxu0 %v2163
        %v2305 = vpop.f32.mrf.mxu0
        %v2306 = vadd.f32 0.0, %v2305
        %2307 = vdwg.mxu0
        %v2308 = vadd.f32 %v1958, %v2186
        %v2309 = vadd.f32 %v1959, %v2189
        %v2310 = vadd.f32 %v1960, %v2192
        %v2311 = vadd.f32 %v1961, %v2195
        %v2312 = vadd.f32 %v1962, %v2198
        %v2313 = vadd.f32 %v1963, %v2201
        %v2314 = vadd.f32 %v1964, %v2204
        %v2315 = vadd.f32 %v1965, %v2207
        %v2316 = vadd.f32 %v1966, %v2210
        %v2317 = vadd.f32 %v1967, %v2213
        %v2318 = vadd.f32 %v1968, %v2216
        %v2319 = vadd.f32 %v1969, %v2219
        %v2320 = vadd.f32 %v1970, %v2222
        %v2321 = vadd.f32 %v1971, %v2225
        %v2322 = vadd.f32 %v1972, %v2228
        %v2323 = vadd.f32 %v1973, %v2231
        %v2324 = vadd.f32 %v1974, %v2234
        %v2325 = vadd.f32 %v1975, %v2237
        %v2326 = vadd.f32 %v1976, %v2240
        %v2327 = vadd.f32 %v1977, %v2243
        %v2328 = vadd.f32 %v1978, %v2246
        %v2329 = vadd.f32 %v1979, %v2249
        %v2330 = vadd.f32 %v1980, %v2252
        %v2331 = vadd.f32 %v1981, %v2255
        %v2332 = vadd.f32 %v1982, %v2258
        %v2333 = vadd.f32 %v1983, %v2261
        %v2334 = vadd.f32 %v1984, %v2264
        %v2335 = vadd.f32 %v1985, %v2267
        %v2336 = vadd.f32 %v1986, %v2270
        %v2337 = vadd.f32 %v1987, %v2273
        %v2338 = vadd.f32 %v1988, %v2276
        %v2339 = vadd.f32 %v1989, %v2279
        %v2340 = vadd.f32 %v1990, %v2282
        %v2341 = vadd.f32 %v1991, %v2285
        %v2342 = vadd.f32 %v1992, %v2288
        %v2343 = vadd.f32 %v1993, %v2291
        %v2344 = vadd.f32 %v1994, %v2294
        %v2345 = vadd.f32 %v1995, %v2297
        %v2346 = vadd.f32 %v1996, %v2300
        %v2347 = vadd.f32 %v1997, %v2303
        %v2348 = vadd.f32 %v1998, %v2306
        %v2349 = vld [vmem:[%s329 + $0x29] sm:$0xff]
        %v2350 = vld [vmem:[%s329 + $0x31] sm:$0xff]
        %v2351 = vld [vmem:[%s329 + $0x39] sm:$0xff]
        %v2352 = vld [vmem:[%s329 + $0x41] sm:$0xff]
        %v2353 = vld [vmem:[%s329 + $0x49] sm:$0xff]
        %v2354 = vld [vmem:[%s329 + $0x51] sm:$0xff]
        %v2355 = vld [vmem:[%s329 + $0x59] sm:$0xff]
        %v2356 = vld [vmem:[%s329 + $0x61] sm:$0xff]
        %v2357 = vld [vmem:[%s329 + $0x69] sm:$0xff]
        %v2358 = vld [vmem:[%s329 + $0x71] sm:$0xff]
        %v2359 = vld [vmem:[%s329 + $0x79] sm:$0xff]
        %v2360 = vld [vmem:[%s329 + $0x81] sm:$0xff]
        %v2361 = vld [vmem:[%s329 + $0x89] sm:$0xff]
        %v2362 = vld [vmem:[%s329 + $0x91] sm:$0xff]
        %v2363 = vld [vmem:[%s329 + $0x99] sm:$0xff]
        %v2364 = vld [vmem:[%s329 + $0xa1] sm:$0xff]
        %v2365 = vld [vmem:[%s329 + $0xa9] sm:$0xff]
        %v2366 = vld [vmem:[%s329 + $0xb1] sm:$0xff]
        %v2367 = vld [vmem:[%s329 + $0xb9] sm:$0xff]
        %v2368 = vld [vmem:[%s329 + $0xc1] sm:$0xff]
        %v2369 = vld [vmem:[%s329 + $0xc9] sm:$0xff]
        %v2370 = vld [vmem:[%s329 + $0xd1] sm:$0xff]
        %v2371 = vld [vmem:[%s329 + $0xd9] sm:$0xff]
        %v2372 = vld [vmem:[%s329 + $0xe1] sm:$0xff]
        %v2373 = vld [vmem:[%s329 + $0xe9] sm:$0xff]
        %v2374 = vld [vmem:[%s329 + $0xf1] sm:$0xff]
        %v2375 = vld [vmem:[%s329 + $0xf9] sm:$0xff]
        %v2376 = vld [vmem:[%s329 + $0x101] sm:$0xff]
        %v2377 = vld [vmem:[%s329 + $0x109] sm:$0xff]
        %v2378 = vld [vmem:[%s329 + $0x111] sm:$0xff]
        %v2379 = vld [vmem:[%s329 + $0x119] sm:$0xff]
        %v2380 = vld [vmem:[%s329 + $0x121] sm:$0xff]
        %v2381 = vld [vmem:[%s329 + $0x129] sm:$0xff]
        %v2382 = vld [vmem:[%s329 + $0x131] sm:$0xff]
        %v2383 = vld [vmem:[%s329 + $0x139] sm:$0xff]
        %v2384 = vld [vmem:[%s329 + $0x141] sm:$0xff]
        %v2385 = vld [vmem:[%s329 + $0x149] sm:$0xff]
        %v2386 = vld [vmem:[%s329 + $0x151] sm:$0xff]
        %v2387 = vld [vmem:[%s329 + $0x159] sm:$0xff]
        %v2388 = vld [vmem:[%s329 + $0x161] sm:$0xff]
        %v2389 = vld [vmem:[%s329 + $0x169] sm:$0xf]
        %s2390 = scalar_lea.vmem %s1, 24
        %v2391 = vld [vmem:[%s2390] sm:$0x7]
        %v2393 = vsel %vm415, %v2349, 0
        %v2396 = vsel %vm415, %v2350, 0
        %v2399 = vsel %vm415, %v2351, 0
        %v2402 = vsel %vm415, %v2352, 0
        %v2405 = vsel %vm415, %v2353, 0
        %v2408 = vsel %vm415, %v2354, 0
        %v2411 = vsel %vm415, %v2355, 0
        %v2414 = vsel %vm415, %v2356, 0
        %v2417 = vsel %vm415, %v2357, 0
        %v2420 = vsel %vm415, %v2358, 0
        %v2423 = vsel %vm415, %v2359, 0
        %v2426 = vsel %vm415, %v2360, 0
        %v2429 = vsel %vm415, %v2361, 0
        %v2432 = vsel %vm415, %v2362, 0
        %v2435 = vsel %vm415, %v2363, 0
        %v2438 = vsel %vm415, %v2364, 0
        %v2441 = vsel %vm415, %v2365, 0
        %v2444 = vsel %vm415, %v2366, 0
        %v2447 = vsel %vm415, %v2367, 0
        %v2450 = vsel %vm415, %v2368, 0
        %v2453 = vsel %vm415, %v2369, 0
        %v2456 = vsel %vm415, %v2370, 0
        %v2459 = vsel %vm415, %v2371, 0
        %v2462 = vsel %vm415, %v2372, 0
        %v2465 = vsel %vm415, %v2373, 0
        %v2468 = vsel %vm415, %v2374, 0
        %v2471 = vsel %vm415, %v2375, 0
        %v2474 = vsel %vm415, %v2376, 0
        %v2477 = vsel %vm415, %v2377, 0
        %v2480 = vsel %vm415, %v2378, 0
        %v2483 = vsel %vm415, %v2379, 0
        %v2486 = vsel %vm415, %v2380, 0
        %v2489 = vsel %vm415, %v2381, 0
        %v2492 = vsel %vm415, %v2382, 0
        %v2495 = vsel %vm415, %v2383, 0
        %v2498 = vsel %vm415, %v2384, 0
        %v2501 = vsel %vm415, %v2385, 0
        %v2504 = vsel %vm415, %v2386, 0
        %v2507 = vsel %vm415, %v2387, 0
        %v2510 = vsel %vm415, %v2388, 0
        %v2513 = vsel %vm415, %v2389, 0
        %v2516 = vsel %vm539, %v2391, 0
        %2518 = vmatpush.msra.mxu0 0.0
        %2519 = vmatpush.msra.mxu0 0.0
        %2520 = vmatpush.msra.mxu0 0.0
        %2521 = vmatpush.msra.mxu0 0.0
        %2522 = vmatpush.msra.mxu0 0.0
        %2523 = vmatpush.msra.mxu0 0.0
        %2524 = vmatpush.msra.mxu0 0.0
        %2525 = vmatpush.msra.mxu0 0.0
        %2526 = vmatpush.msra.mxu0 0.0
        %2527 = vmatpush.msra.mxu0 0.0
        %2528 = vmatpush.msra.mxu0 0.0
        %2529 = vmatpush.msra.mxu0 0.0
        %2530 = vmatpush.msra.mxu0 0.0
        %2531 = vmatpush.msra.mxu0 0.0
        %2532 = vmatpush.msra.mxu0 0.0
        %2533 = vmatpush.msra.mxu0 %v2516
        %2534 = vmatmul.f32.gmra.mxu0 %v2393
        %v2535 = vpop.f32.mrf.mxu0
        %v2536 = vadd.f32 0.0, %v2535
        %2537 = vmatmul.f32.gmra.mxu0 %v2396
        %v2538 = vpop.f32.mrf.mxu0
        %v2539 = vadd.f32 0.0, %v2538
        %2540 = vmatmul.f32.gmra.mxu0 %v2399
        %v2541 = vpop.f32.mrf.mxu0
        %v2542 = vadd.f32 0.0, %v2541
        %2543 = vmatmul.f32.gmra.mxu0 %v2402
        %v2544 = vpop.f32.mrf.mxu0
        %v2545 = vadd.f32 0.0, %v2544
        %2546 = vmatmul.f32.gmra.mxu0 %v2405
        %v2547 = vpop.f32.mrf.mxu0
        %v2548 = vadd.f32 0.0, %v2547
        %2549 = vmatmul.f32.gmra.mxu0 %v2408
        %v2550 = vpop.f32.mrf.mxu0
        %v2551 = vadd.f32 0.0, %v2550
        %2552 = vmatmul.f32.gmra.mxu0 %v2411
        %v2553 = vpop.f32.mrf.mxu0
        %v2554 = vadd.f32 0.0, %v2553
        %2555 = vmatmul.f32.gmra.mxu0 %v2414
        %v2556 = vpop.f32.mrf.mxu0
        %v2557 = vadd.f32 0.0, %v2556
        %2558 = vmatmul.f32.gmra.mxu0 %v2417
        %v2559 = vpop.f32.mrf.mxu0
        %v2560 = vadd.f32 0.0, %v2559
        %2561 = vmatmul.f32.gmra.mxu0 %v2420
        %v2562 = vpop.f32.mrf.mxu0
        %v2563 = vadd.f32 0.0, %v2562
        %2564 = vmatmul.f32.gmra.mxu0 %v2423
        %v2565 = vpop.f32.mrf.mxu0
        %v2566 = vadd.f32 0.0, %v2565
        %2567 = vmatmul.f32.gmra.mxu0 %v2426
        %v2568 = vpop.f32.mrf.mxu0
        %v2569 = vadd.f32 0.0, %v2568
        %2570 = vmatmul.f32.gmra.mxu0 %v2429
        %v2571 = vpop.f32.mrf.mxu0
        %v2572 = vadd.f32 0.0, %v2571
        %2573 = vmatmul.f32.gmra.mxu0 %v2432
        %v2574 = vpop.f32.mrf.mxu0
        %v2575 = vadd.f32 0.0, %v2574
        %2576 = vmatmul.f32.gmra.mxu0 %v2435
        %v2577 = vpop.f32.mrf.mxu0
        %v2578 = vadd.f32 0.0, %v2577
        %2579 = vmatmul.f32.gmra.mxu0 %v2438
        %v2580 = vpop.f32.mrf.mxu0
        %v2581 = vadd.f32 0.0, %v2580
        %2582 = vmatmul.f32.gmra.mxu0 %v2441
        %v2583 = vpop.f32.mrf.mxu0
        %v2584 = vadd.f32 0.0, %v2583
        %2585 = vmatmul.f32.gmra.mxu0 %v2444
        %v2586 = vpop.f32.mrf.mxu0
        %v2587 = vadd.f32 0.0, %v2586
        %2588 = vmatmul.f32.gmra.mxu0 %v2447
        %v2589 = vpop.f32.mrf.mxu0
        %v2590 = vadd.f32 0.0, %v2589
        %2591 = vmatmul.f32.gmra.mxu0 %v2450
        %v2592 = vpop.f32.mrf.mxu0
        %v2593 = vadd.f32 0.0, %v2592
        %2594 = vmatmul.f32.gmra.mxu0 %v2453
        %v2595 = vpop.f32.mrf.mxu0
        %v2596 = vadd.f32 0.0, %v2595
        %2597 = vmatmul.f32.gmra.mxu0 %v2456
        %v2598 = vpop.f32.mrf.mxu0
        %v2599 = vadd.f32 0.0, %v2598
        %2600 = vmatmul.f32.gmra.mxu0 %v2459
        %v2601 = vpop.f32.mrf.mxu0
        %v2602 = vadd.f32 0.0, %v2601
        %2603 = vmatmul.f32.gmra.mxu0 %v2462
        %v2604 = vpop.f32.mrf.mxu0
        %v2605 = vadd.f32 0.0, %v2604
        %2606 = vmatmul.f32.gmra.mxu0 %v2465
        %v2607 = vpop.f32.mrf.mxu0
        %v2608 = vadd.f32 0.0, %v2607
        %2609 = vmatmul.f32.gmra.mxu0 %v2468
        %v2610 = vpop.f32.mrf.mxu0
        %v2611 = vadd.f32 0.0, %v2610
        %2612 = vmatmul.f32.gmra.mxu0 %v2471
        %v2613 = vpop.f32.mrf.mxu0
        %v2614 = vadd.f32 0.0, %v2613
        %2615 = vmatmul.f32.gmra.mxu0 %v2474
        %v2616 = vpop.f32.mrf.mxu0
        %v2617 = vadd.f32 0.0, %v2616
        %2618 = vmatmul.f32.gmra.mxu0 %v2477
        %v2619 = vpop.f32.mrf.mxu0
        %v2620 = vadd.f32 0.0, %v2619
        %2621 = vmatmul.f32.gmra.mxu0 %v2480
        %v2622 = vpop.f32.mrf.mxu0
        %v2623 = vadd.f32 0.0, %v2622
        %2624 = vmatmul.f32.gmra.mxu0 %v2483
        %v2625 = vpop.f32.mrf.mxu0
        %v2626 = vadd.f32 0.0, %v2625
        %2627 = vmatmul.f32.gmra.mxu0 %v2486
        %v2628 = vpop.f32.mrf.mxu0
        %v2629 = vadd.f32 0.0, %v2628
        %2630 = vmatmul.f32.gmra.mxu0 %v2489
        %v2631 = vpop.f32.mrf.mxu0
        %v2632 = vadd.f32 0.0, %v2631
        %2633 = vmatmul.f32.gmra.mxu0 %v2492
        %v2634 = vpop.f32.mrf.mxu0
        %v2635 = vadd.f32 0.0, %v2634
        %2636 = vmatmul.f32.gmra.mxu0 %v2495
        %v2637 = vpop.f32.mrf.mxu0
        %v2638 = vadd.f32 0.0, %v2637
        %2639 = vmatmul.f32.gmra.mxu0 %v2498
        %v2640 = vpop.f32.mrf.mxu0
        %v2641 = vadd.f32 0.0, %v2640
        %2642 = vmatmul.f32.gmra.mxu0 %v2501
        %v2643 = vpop.f32.mrf.mxu0
        %v2644 = vadd.f32 0.0, %v2643
        %2645 = vmatmul.f32.gmra.mxu0 %v2504
        %v2646 = vpop.f32.mrf.mxu0
        %v2647 = vadd.f32 0.0, %v2646
        %2648 = vmatmul.f32.gmra.mxu0 %v2507
        %v2649 = vpop.f32.mrf.mxu0
        %v2650 = vadd.f32 0.0, %v2649
        %2651 = vmatmul.f32.gmra.mxu0 %v2510
        %v2652 = vpop.f32.mrf.mxu0
        %v2653 = vadd.f32 0.0, %v2652
        %2654 = vmatmul.f32.gmra.mxu0 %v2513
        %v2655 = vpop.f32.mrf.mxu0
        %v2656 = vadd.f32 0.0, %v2655
        %2657 = vdwg.mxu0
        %v2658 = vadd.f32 %v2308, %v2536
        %v2659 = vadd.f32 %v2309, %v2539
        %v2660 = vadd.f32 %v2310, %v2542
        %v2661 = vadd.f32 %v2311, %v2545
        %v2662 = vadd.f32 %v2312, %v2548
        %v2663 = vadd.f32 %v2313, %v2551
        %v2664 = vadd.f32 %v2314, %v2554
        %v2665 = vadd.f32 %v2315, %v2557
        %v2666 = vadd.f32 %v2316, %v2560
        %v2667 = vadd.f32 %v2317, %v2563
        %v2668 = vadd.f32 %v2318, %v2566
        %v2669 = vadd.f32 %v2319, %v2569
        %v2670 = vadd.f32 %v2320, %v2572
        %v2671 = vadd.f32 %v2321, %v2575
        %v2672 = vadd.f32 %v2322, %v2578
        %v2673 = vadd.f32 %v2323, %v2581
        %v2674 = vadd.f32 %v2324, %v2584
        %v2675 = vadd.f32 %v2325, %v2587
        %v2676 = vadd.f32 %v2326, %v2590
        %v2677 = vadd.f32 %v2327, %v2593
        %v2678 = vadd.f32 %v2328, %v2596
        %v2679 = vadd.f32 %v2329, %v2599
        %v2680 = vadd.f32 %v2330, %v2602
        %v2681 = vadd.f32 %v2331, %v2605
        %v2682 = vadd.f32 %v2332, %v2608
        %v2683 = vadd.f32 %v2333, %v2611
        %v2684 = vadd.f32 %v2334, %v2614
        %v2685 = vadd.f32 %v2335, %v2617
        %v2686 = vadd.f32 %v2336, %v2620
        %v2687 = vadd.f32 %v2337, %v2623
        %v2688 = vadd.f32 %v2338, %v2626
        %v2689 = vadd.f32 %v2339, %v2629
        %v2690 = vadd.f32 %v2340, %v2632
        %v2691 = vadd.f32 %v2341, %v2635
        %v2692 = vadd.f32 %v2342, %v2638
        %v2693 = vadd.f32 %v2343, %v2641
        %v2694 = vadd.f32 %v2344, %v2644
        %v2695 = vadd.f32 %v2345, %v2647
        %v2696 = vadd.f32 %v2346, %v2650
        %v2697 = vadd.f32 %v2347, %v2653
        %v2698 = vadd.f32 %v2348, %v2656
        %v2699 = vld [vmem:[%s329 + $0x2a] sm:$0xff]
        %v2700 = vld [vmem:[%s329 + $0x32] sm:$0xff]
        %v2701 = vld [vmem:[%s329 + $0x3a] sm:$0xff]
        %v2702 = vld [vmem:[%s329 + $0x42] sm:$0xff]
        %v2703 = vld [vmem:[%s329 + $0x4a] sm:$0xff]
        %v2704 = vld [vmem:[%s329 + $0x52] sm:$0xff]
        %v2705 = vld [vmem:[%s329 + $0x5a] sm:$0xff]
        %v2706 = vld [vmem:[%s329 + $0x62] sm:$0xff]
        %v2707 = vld [vmem:[%s329 + $0x6a] sm:$0xff]
        %v2708 = vld [vmem:[%s329 + $0x72] sm:$0xff]
        %v2709 = vld [vmem:[%s329 + $0x7a] sm:$0xff]
        %v2710 = vld [vmem:[%s329 + $0x82] sm:$0xff]
        %v2711 = vld [vmem:[%s329 + $0x8a] sm:$0xff]
        %v2712 = vld [vmem:[%s329 + $0x92] sm:$0xff]
        %v2713 = vld [vmem:[%s329 + $0x9a] sm:$0xff]
        %v2714 = vld [vmem:[%s329 + $0xa2] sm:$0xff]
        %v2715 = vld [vmem:[%s329 + $0xaa] sm:$0xff]
        %v2716 = vld [vmem:[%s329 + $0xb2] sm:$0xff]
        %v2717 = vld [vmem:[%s329 + $0xba] sm:$0xff]
        %v2718 = vld [vmem:[%s329 + $0xc2] sm:$0xff]
        %v2719 = vld [vmem:[%s329 + $0xca] sm:$0xff]
        %v2720 = vld [vmem:[%s329 + $0xd2] sm:$0xff]
        %v2721 = vld [vmem:[%s329 + $0xda] sm:$0xff]
        %v2722 = vld [vmem:[%s329 + $0xe2] sm:$0xff]
        %v2723 = vld [vmem:[%s329 + $0xea] sm:$0xff]
        %v2724 = vld [vmem:[%s329 + $0xf2] sm:$0xff]
        %v2725 = vld [vmem:[%s329 + $0xfa] sm:$0xff]
        %v2726 = vld [vmem:[%s329 + $0x102] sm:$0xff]
        %v2727 = vld [vmem:[%s329 + $0x10a] sm:$0xff]
        %v2728 = vld [vmem:[%s329 + $0x112] sm:$0xff]
        %v2729 = vld [vmem:[%s329 + $0x11a] sm:$0xff]
        %v2730 = vld [vmem:[%s329 + $0x122] sm:$0xff]
        %v2731 = vld [vmem:[%s329 + $0x12a] sm:$0xff]
        %v2732 = vld [vmem:[%s329 + $0x132] sm:$0xff]
        %v2733 = vld [vmem:[%s329 + $0x13a] sm:$0xff]
        %v2734 = vld [vmem:[%s329 + $0x142] sm:$0xff]
        %v2735 = vld [vmem:[%s329 + $0x14a] sm:$0xff]
        %v2736 = vld [vmem:[%s329 + $0x152] sm:$0xff]
        %v2737 = vld [vmem:[%s329 + $0x15a] sm:$0xff]
        %v2738 = vld [vmem:[%s329 + $0x162] sm:$0xff]
        %v2739 = vld [vmem:[%s329 + $0x16a] sm:$0xf]
        %s2740 = scalar_lea.vmem %s1, 28
        %v2741 = vld [vmem:[%s2740] sm:$0x7]
        %v2743 = vsel %vm415, %v2699, 0
        %v2746 = vsel %vm415, %v2700, 0
        %v2749 = vsel %vm415, %v2701, 0
        %v2752 = vsel %vm415, %v2702, 0
        %v2755 = vsel %vm415, %v2703, 0
        %v2758 = vsel %vm415, %v2704, 0
        %v2761 = vsel %vm415, %v2705, 0
        %v2764 = vsel %vm415, %v2706, 0
        %v2767 = vsel %vm415, %v2707, 0
        %v2770 = vsel %vm415, %v2708, 0
        %v2773 = vsel %vm415, %v2709, 0
        %v2776 = vsel %vm415, %v2710, 0
        %v2779 = vsel %vm415, %v2711, 0
        %v2782 = vsel %vm415, %v2712, 0
        %v2785 = vsel %vm415, %v2713, 0
        %v2788 = vsel %vm415, %v2714, 0
        %v2791 = vsel %vm415, %v2715, 0
        %v2794 = vsel %vm415, %v2716, 0
        %v2797 = vsel %vm415, %v2717, 0
        %v2800 = vsel %vm415, %v2718, 0
        %v2803 = vsel %vm415, %v2719, 0
        %v2806 = vsel %vm415, %v2720, 0
        %v2809 = vsel %vm415, %v2721, 0
        %v2812 = vsel %vm415, %v2722, 0
        %v2815 = vsel %vm415, %v2723, 0
        %v2818 = vsel %vm415, %v2724, 0
        %v2821 = vsel %vm415, %v2725, 0
        %v2824 = vsel %vm415, %v2726, 0
        %v2827 = vsel %vm415, %v2727, 0
        %v2830 = vsel %vm415, %v2728, 0
        %v2833 = vsel %vm415, %v2729, 0
        %v2836 = vsel %vm415, %v2730, 0
        %v2839 = vsel %vm415, %v2731, 0
        %v2842 = vsel %vm415, %v2732, 0
        %v2845 = vsel %vm415, %v2733, 0
        %v2848 = vsel %vm415, %v2734, 0
        %v2851 = vsel %vm415, %v2735, 0
        %v2854 = vsel %vm415, %v2736, 0
        %v2857 = vsel %vm415, %v2737, 0
        %v2860 = vsel %vm415, %v2738, 0
        %v2863 = vsel %vm415, %v2739, 0
        %v2866 = vsel %vm539, %v2741, 0
        %2868 = vmatpush.msra.mxu0 0.0
        %2869 = vmatpush.msra.mxu0 0.0
        %2870 = vmatpush.msra.mxu0 0.0
        %2871 = vmatpush.msra.mxu0 0.0
        %2872 = vmatpush.msra.mxu0 0.0
        %2873 = vmatpush.msra.mxu0 0.0
        %2874 = vmatpush.msra.mxu0 0.0
        %2875 = vmatpush.msra.mxu0 0.0
        %2876 = vmatpush.msra.mxu0 0.0
        %2877 = vmatpush.msra.mxu0 0.0
        %2878 = vmatpush.msra.mxu0 0.0
        %2879 = vmatpush.msra.mxu0 0.0
        %2880 = vmatpush.msra.mxu0 0.0
        %2881 = vmatpush.msra.mxu0 0.0
        %2882 = vmatpush.msra.mxu0 0.0
        %2883 = vmatpush.msra.mxu0 %v2866
        %2884 = vmatmul.f32.gmra.mxu0 %v2743
        %v2885 = vpop.f32.mrf.mxu0
        %v2886 = vadd.f32 0.0, %v2885
        %2887 = vmatmul.f32.gmra.mxu0 %v2746
        %v2888 = vpop.f32.mrf.mxu0
        %v2889 = vadd.f32 0.0, %v2888
        %2890 = vmatmul.f32.gmra.mxu0 %v2749
        %v2891 = vpop.f32.mrf.mxu0
        %v2892 = vadd.f32 0.0, %v2891
        %2893 = vmatmul.f32.gmra.mxu0 %v2752
        %v2894 = vpop.f32.mrf.mxu0
        %v2895 = vadd.f32 0.0, %v2894
        %2896 = vmatmul.f32.gmra.mxu0 %v2755
        %v2897 = vpop.f32.mrf.mxu0
        %v2898 = vadd.f32 0.0, %v2897
        %2899 = vmatmul.f32.gmra.mxu0 %v2758
        %v2900 = vpop.f32.mrf.mxu0
        %v2901 = vadd.f32 0.0, %v2900
        %2902 = vmatmul.f32.gmra.mxu0 %v2761
        %v2903 = vpop.f32.mrf.mxu0
        %v2904 = vadd.f32 0.0, %v2903
        %2905 = vmatmul.f32.gmra.mxu0 %v2764
        %v2906 = vpop.f32.mrf.mxu0
        %v2907 = vadd.f32 0.0, %v2906
        %2908 = vmatmul.f32.gmra.mxu0 %v2767
        %v2909 = vpop.f32.mrf.mxu0
        %v2910 = vadd.f32 0.0, %v2909
        %2911 = vmatmul.f32.gmra.mxu0 %v2770
        %v2912 = vpop.f32.mrf.mxu0
        %v2913 = vadd.f32 0.0, %v2912
        %2914 = vmatmul.f32.gmra.mxu0 %v2773
        %v2915 = vpop.f32.mrf.mxu0
        %v2916 = vadd.f32 0.0, %v2915
        %2917 = vmatmul.f32.gmra.mxu0 %v2776
        %v2918 = vpop.f32.mrf.mxu0
        %v2919 = vadd.f32 0.0, %v2918
        %2920 = vmatmul.f32.gmra.mxu0 %v2779
        %v2921 = vpop.f32.mrf.mxu0
        %v2922 = vadd.f32 0.0, %v2921
        %2923 = vmatmul.f32.gmra.mxu0 %v2782
        %v2924 = vpop.f32.mrf.mxu0
        %v2925 = vadd.f32 0.0, %v2924
        %2926 = vmatmul.f32.gmra.mxu0 %v2785
        %v2927 = vpop.f32.mrf.mxu0
        %v2928 = vadd.f32 0.0, %v2927
        %2929 = vmatmul.f32.gmra.mxu0 %v2788
        %v2930 = vpop.f32.mrf.mxu0
        %v2931 = vadd.f32 0.0, %v2930
        %2932 = vmatmul.f32.gmra.mxu0 %v2791
        %v2933 = vpop.f32.mrf.mxu0
        %v2934 = vadd.f32 0.0, %v2933
        %2935 = vmatmul.f32.gmra.mxu0 %v2794
        %v2936 = vpop.f32.mrf.mxu0
        %v2937 = vadd.f32 0.0, %v2936
        %2938 = vmatmul.f32.gmra.mxu0 %v2797
        %v2939 = vpop.f32.mrf.mxu0
        %v2940 = vadd.f32 0.0, %v2939
        %2941 = vmatmul.f32.gmra.mxu0 %v2800
        %v2942 = vpop.f32.mrf.mxu0
        %v2943 = vadd.f32 0.0, %v2942
        %2944 = vmatmul.f32.gmra.mxu0 %v2803
        %v2945 = vpop.f32.mrf.mxu0
        %v2946 = vadd.f32 0.0, %v2945
        %2947 = vmatmul.f32.gmra.mxu0 %v2806
        %v2948 = vpop.f32.mrf.mxu0
        %v2949 = vadd.f32 0.0, %v2948
        %2950 = vmatmul.f32.gmra.mxu0 %v2809
        %v2951 = vpop.f32.mrf.mxu0
        %v2952 = vadd.f32 0.0, %v2951
        %2953 = vmatmul.f32.gmra.mxu0 %v2812
        %v2954 = vpop.f32.mrf.mxu0
        %v2955 = vadd.f32 0.0, %v2954
        %2956 = vmatmul.f32.gmra.mxu0 %v2815
        %v2957 = vpop.f32.mrf.mxu0
        %v2958 = vadd.f32 0.0, %v2957
        %2959 = vmatmul.f32.gmra.mxu0 %v2818
        %v2960 = vpop.f32.mrf.mxu0
        %v2961 = vadd.f32 0.0, %v2960
        %2962 = vmatmul.f32.gmra.mxu0 %v2821
        %v2963 = vpop.f32.mrf.mxu0
        %v2964 = vadd.f32 0.0, %v2963
        %2965 = vmatmul.f32.gmra.mxu0 %v2824
        %v2966 = vpop.f32.mrf.mxu0
        %v2967 = vadd.f32 0.0, %v2966
        %2968 = vmatmul.f32.gmra.mxu0 %v2827
        %v2969 = vpop.f32.mrf.mxu0
        %v2970 = vadd.f32 0.0, %v2969
        %2971 = vmatmul.f32.gmra.mxu0 %v2830
        %v2972 = vpop.f32.mrf.mxu0
        %v2973 = vadd.f32 0.0, %v2972
        %2974 = vmatmul.f32.gmra.mxu0 %v2833
        %v2975 = vpop.f32.mrf.mxu0
        %v2976 = vadd.f32 0.0, %v2975
        %2977 = vmatmul.f32.gmra.mxu0 %v2836
        %v2978 = vpop.f32.mrf.mxu0
        %v2979 = vadd.f32 0.0, %v2978
        %2980 = vmatmul.f32.gmra.mxu0 %v2839
        %v2981 = vpop.f32.mrf.mxu0
        %v2982 = vadd.f32 0.0, %v2981
        %2983 = vmatmul.f32.gmra.mxu0 %v2842
        %v2984 = vpop.f32.mrf.mxu0
        %v2985 = vadd.f32 0.0, %v2984
        %2986 = vmatmul.f32.gmra.mxu0 %v2845
        %v2987 = vpop.f32.mrf.mxu0
        %v2988 = vadd.f32 0.0, %v2987
        %2989 = vmatmul.f32.gmra.mxu0 %v2848
        %v2990 = vpop.f32.mrf.mxu0
        %v2991 = vadd.f32 0.0, %v2990
        %2992 = vmatmul.f32.gmra.mxu0 %v2851
        %v2993 = vpop.f32.mrf.mxu0
        %v2994 = vadd.f32 0.0, %v2993
        %2995 = vmatmul.f32.gmra.mxu0 %v2854
        %v2996 = vpop.f32.mrf.mxu0
        %v2997 = vadd.f32 0.0, %v2996
        %2998 = vmatmul.f32.gmra.mxu0 %v2857
        %v2999 = vpop.f32.mrf.mxu0
        %v3000 = vadd.f32 0.0, %v2999
        %3001 = vmatmul.f32.gmra.mxu0 %v2860
        %v3002 = vpop.f32.mrf.mxu0
        %v3003 = vadd.f32 0.0, %v3002
        %3004 = vmatmul.f32.gmra.mxu0 %v2863
        %v3005 = vpop.f32.mrf.mxu0
        %v3006 = vadd.f32 0.0, %v3005
        %3007 = vdwg.mxu0
        %v3008 = vadd.f32 %v2658, %v2886
        %v3009 = vadd.f32 %v2659, %v2889
        %v3010 = vadd.f32 %v2660, %v2892
        %v3011 = vadd.f32 %v2661, %v2895
        %v3012 = vadd.f32 %v2662, %v2898
        %v3013 = vadd.f32 %v2663, %v2901
        %v3014 = vadd.f32 %v2664, %v2904
        %v3015 = vadd.f32 %v2665, %v2907
        %v3016 = vadd.f32 %v2666, %v2910
        %v3017 = vadd.f32 %v2667, %v2913
        %v3018 = vadd.f32 %v2668, %v2916
        %v3019 = vadd.f32 %v2669, %v2919
        %v3020 = vadd.f32 %v2670, %v2922
        %v3021 = vadd.f32 %v2671, %v2925
        %v3022 = vadd.f32 %v2672, %v2928
        %v3023 = vadd.f32 %v2673, %v2931
        %v3024 = vadd.f32 %v2674, %v2934
        %v3025 = vadd.f32 %v2675, %v2937
        %v3026 = vadd.f32 %v2676, %v2940
        %v3027 = vadd.f32 %v2677, %v2943
        %v3028 = vadd.f32 %v2678, %v2946
        %v3029 = vadd.f32 %v2679, %v2949
        %v3030 = vadd.f32 %v2680, %v2952
        %v3031 = vadd.f32 %v2681, %v2955
        %v3032 = vadd.f32 %v2682, %v2958
        %v3033 = vadd.f32 %v2683, %v2961
        %v3034 = vadd.f32 %v2684, %v2964
        %v3035 = vadd.f32 %v2685, %v2967
        %v3036 = vadd.f32 %v2686, %v2970
        %v3037 = vadd.f32 %v2687, %v2973
        %v3038 = vadd.f32 %v2688, %v2976
        %v3039 = vadd.f32 %v2689, %v2979
        %v3040 = vadd.f32 %v2690, %v2982
        %v3041 = vadd.f32 %v2691, %v2985
        %v3042 = vadd.f32 %v2692, %v2988
        %v3043 = vadd.f32 %v2693, %v2991
        %v3044 = vadd.f32 %v2694, %v2994
        %v3045 = vadd.f32 %v2695, %v2997
        %v3046 = vadd.f32 %v2696, %v3000
        %v3047 = vadd.f32 %v2697, %v3003
        %v3048 = vadd.f32 %v2698, %v3006
        %v3049 = vld [vmem:[%s329 + $0x2b] sm:$0xff]
        %v3050 = vld [vmem:[%s329 + $0x33] sm:$0xff]
        %v3051 = vld [vmem:[%s329 + $0x3b] sm:$0xff]
        %v3052 = vld [vmem:[%s329 + $0x43] sm:$0xff]
        %v3053 = vld [vmem:[%s329 + $0x4b] sm:$0xff]
        %v3054 = vld [vmem:[%s329 + $0x53] sm:$0xff]
        %v3055 = vld [vmem:[%s329 + $0x5b] sm:$0xff]
        %v3056 = vld [vmem:[%s329 + $0x63] sm:$0xff]
        %v3057 = vld [vmem:[%s329 + $0x6b] sm:$0xff]
        %v3058 = vld [vmem:[%s329 + $0x73] sm:$0xff]
        %v3059 = vld [vmem:[%s329 + $0x7b] sm:$0xff]
        %v3060 = vld [vmem:[%s329 + $0x83] sm:$0xff]
        %v3061 = vld [vmem:[%s329 + $0x8b] sm:$0xff]
        %v3062 = vld [vmem:[%s329 + $0x93] sm:$0xff]
        %v3063 = vld [vmem:[%s329 + $0x9b] sm:$0xff]
        %v3064 = vld [vmem:[%s329 + $0xa3] sm:$0xff]
        %v3065 = vld [vmem:[%s329 + $0xab] sm:$0xff]
        %v3066 = vld [vmem:[%s329 + $0xb3] sm:$0xff]
        %v3067 = vld [vmem:[%s329 + $0xbb] sm:$0xff]
        %v3068 = vld [vmem:[%s329 + $0xc3] sm:$0xff]
        %v3069 = vld [vmem:[%s329 + $0xcb] sm:$0xff]
        %v3070 = vld [vmem:[%s329 + $0xd3] sm:$0xff]
        %v3071 = vld [vmem:[%s329 + $0xdb] sm:$0xff]
        %v3072 = vld [vmem:[%s329 + $0xe3] sm:$0xff]
        %v3073 = vld [vmem:[%s329 + $0xeb] sm:$0xff]
        %v3074 = vld [vmem:[%s329 + $0xf3] sm:$0xff]
        %v3075 = vld [vmem:[%s329 + $0xfb] sm:$0xff]
        %v3076 = vld [vmem:[%s329 + $0x103] sm:$0xff]
        %v3077 = vld [vmem:[%s329 + $0x10b] sm:$0xff]
        %v3078 = vld [vmem:[%s329 + $0x113] sm:$0xff]
        %v3079 = vld [vmem:[%s329 + $0x11b] sm:$0xff]
        %v3080 = vld [vmem:[%s329 + $0x123] sm:$0xff]
        %v3081 = vld [vmem:[%s329 + $0x12b] sm:$0xff]
        %v3082 = vld [vmem:[%s329 + $0x133] sm:$0xff]
        %v3083 = vld [vmem:[%s329 + $0x13b] sm:$0xff]
        %v3084 = vld [vmem:[%s329 + $0x143] sm:$0xff]
        %v3085 = vld [vmem:[%s329 + $0x14b] sm:$0xff]
        %v3086 = vld [vmem:[%s329 + $0x153] sm:$0xff]
        %v3087 = vld [vmem:[%s329 + $0x15b] sm:$0xff]
        %v3088 = vld [vmem:[%s329 + $0x163] sm:$0xff]
        %v3089 = vld [vmem:[%s329 + $0x16b] sm:$0xf]
        %s3090 = scalar_lea.vmem %s1, 32
        %v3091 = vld [vmem:[%s3090] sm:$0x7]
        %v3093 = vsel %vm415, %v3049, 0
        %v3096 = vsel %vm415, %v3050, 0
        %v3099 = vsel %vm415, %v3051, 0
        %v3102 = vsel %vm415, %v3052, 0
        %v3105 = vsel %vm415, %v3053, 0
        %v3108 = vsel %vm415, %v3054, 0
        %v3111 = vsel %vm415, %v3055, 0
        %v3114 = vsel %vm415, %v3056, 0
        %v3117 = vsel %vm415, %v3057, 0
        %v3120 = vsel %vm415, %v3058, 0
        %v3123 = vsel %vm415, %v3059, 0
        %v3126 = vsel %vm415, %v3060, 0
        %v3129 = vsel %vm415, %v3061, 0
        %v3132 = vsel %vm415, %v3062, 0
        %v3135 = vsel %vm415, %v3063, 0
        %v3138 = vsel %vm415, %v3064, 0
        %v3141 = vsel %vm415, %v3065, 0
        %v3144 = vsel %vm415, %v3066, 0
        %v3147 = vsel %vm415, %v3067, 0
        %v3150 = vsel %vm415, %v3068, 0
        %v3153 = vsel %vm415, %v3069, 0
        %v3156 = vsel %vm415, %v3070, 0
        %v3159 = vsel %vm415, %v3071, 0
        %v3162 = vsel %vm415, %v3072, 0
        %v3165 = vsel %vm415, %v3073, 0
        %v3168 = vsel %vm415, %v3074, 0
        %v3171 = vsel %vm415, %v3075, 0
        %v3174 = vsel %vm415, %v3076, 0
        %v3177 = vsel %vm415, %v3077, 0
        %v3180 = vsel %vm415, %v3078, 0
        %v3183 = vsel %vm415, %v3079, 0
        %v3186 = vsel %vm415, %v3080, 0
        %v3189 = vsel %vm415, %v3081, 0
        %v3192 = vsel %vm415, %v3082, 0
        %v3195 = vsel %vm415, %v3083, 0
        %v3198 = vsel %vm415, %v3084, 0
        %v3201 = vsel %vm415, %v3085, 0
        %v3204 = vsel %vm415, %v3086, 0
        %v3207 = vsel %vm415, %v3087, 0
        %v3210 = vsel %vm415, %v3088, 0
        %v3213 = vsel %vm415, %v3089, 0
        %v3216 = vsel %vm539, %v3091, 0
        %3218 = vmatpush.msra.mxu0 0.0
        %3219 = vmatpush.msra.mxu0 0.0
        %3220 = vmatpush.msra.mxu0 0.0
        %3221 = vmatpush.msra.mxu0 0.0
        %3222 = vmatpush.msra.mxu0 0.0
        %3223 = vmatpush.msra.mxu0 0.0
        %3224 = vmatpush.msra.mxu0 0.0
        %3225 = vmatpush.msra.mxu0 0.0
        %3226 = vmatpush.msra.mxu0 0.0
        %3227 = vmatpush.msra.mxu0 0.0
        %3228 = vmatpush.msra.mxu0 0.0
        %3229 = vmatpush.msra.mxu0 0.0
        %3230 = vmatpush.msra.mxu0 0.0
        %3231 = vmatpush.msra.mxu0 0.0
        %3232 = vmatpush.msra.mxu0 0.0
        %3233 = vmatpush.msra.mxu0 %v3216
        %3234 = vmatmul.f32.gmra.mxu0 %v3093
        %v3235 = vpop.f32.mrf.mxu0
        %v3236 = vadd.f32 0.0, %v3235
        %3237 = vmatmul.f32.gmra.mxu0 %v3096
        %v3238 = vpop.f32.mrf.mxu0
        %v3239 = vadd.f32 0.0, %v3238
        %3240 = vmatmul.f32.gmra.mxu0 %v3099
        %v3241 = vpop.f32.mrf.mxu0
        %v3242 = vadd.f32 0.0, %v3241
        %3243 = vmatmul.f32.gmra.mxu0 %v3102
        %v3244 = vpop.f32.mrf.mxu0
        %v3245 = vadd.f32 0.0, %v3244
        %3246 = vmatmul.f32.gmra.mxu0 %v3105
        %v3247 = vpop.f32.mrf.mxu0
        %v3248 = vadd.f32 0.0, %v3247
        %3249 = vmatmul.f32.gmra.mxu0 %v3108
        %v3250 = vpop.f32.mrf.mxu0
        %v3251 = vadd.f32 0.0, %v3250
        %3252 = vmatmul.f32.gmra.mxu0 %v3111
        %v3253 = vpop.f32.mrf.mxu0
        %v3254 = vadd.f32 0.0, %v3253
        %3255 = vmatmul.f32.gmra.mxu0 %v3114
        %v3256 = vpop.f32.mrf.mxu0
        %v3257 = vadd.f32 0.0, %v3256
        %3258 = vmatmul.f32.gmra.mxu0 %v3117
        %v3259 = vpop.f32.mrf.mxu0
        %v3260 = vadd.f32 0.0, %v3259
        %3261 = vmatmul.f32.gmra.mxu0 %v3120
        %v3262 = vpop.f32.mrf.mxu0
        %v3263 = vadd.f32 0.0, %v3262
        %3264 = vmatmul.f32.gmra.mxu0 %v3123
        %v3265 = vpop.f32.mrf.mxu0
        %v3266 = vadd.f32 0.0, %v3265
        %3267 = vmatmul.f32.gmra.mxu0 %v3126
        %v3268 = vpop.f32.mrf.mxu0
        %v3269 = vadd.f32 0.0, %v3268
        %3270 = vmatmul.f32.gmra.mxu0 %v3129
        %v3271 = vpop.f32.mrf.mxu0
        %v3272 = vadd.f32 0.0, %v3271
        %3273 = vmatmul.f32.gmra.mxu0 %v3132
        %v3274 = vpop.f32.mrf.mxu0
        %v3275 = vadd.f32 0.0, %v3274
        %3276 = vmatmul.f32.gmra.mxu0 %v3135
        %v3277 = vpop.f32.mrf.mxu0
        %v3278 = vadd.f32 0.0, %v3277
        %3279 = vmatmul.f32.gmra.mxu0 %v3138
        %v3280 = vpop.f32.mrf.mxu0
        %v3281 = vadd.f32 0.0, %v3280
        %3282 = vmatmul.f32.gmra.mxu0 %v3141
        %v3283 = vpop.f32.mrf.mxu0
        %v3284 = vadd.f32 0.0, %v3283
        %3285 = vmatmul.f32.gmra.mxu0 %v3144
        %v3286 = vpop.f32.mrf.mxu0
        %v3287 = vadd.f32 0.0, %v3286
        %3288 = vmatmul.f32.gmra.mxu0 %v3147
        %v3289 = vpop.f32.mrf.mxu0
        %v3290 = vadd.f32 0.0, %v3289
        %3291 = vmatmul.f32.gmra.mxu0 %v3150
        %v3292 = vpop.f32.mrf.mxu0
        %v3293 = vadd.f32 0.0, %v3292
        %3294 = vmatmul.f32.gmra.mxu0 %v3153
        %v3295 = vpop.f32.mrf.mxu0
        %v3296 = vadd.f32 0.0, %v3295
        %3297 = vmatmul.f32.gmra.mxu0 %v3156
        %v3298 = vpop.f32.mrf.mxu0
        %v3299 = vadd.f32 0.0, %v3298
        %3300 = vmatmul.f32.gmra.mxu0 %v3159
        %v3301 = vpop.f32.mrf.mxu0
        %v3302 = vadd.f32 0.0, %v3301
        %3303 = vmatmul.f32.gmra.mxu0 %v3162
        %v3304 = vpop.f32.mrf.mxu0
        %v3305 = vadd.f32 0.0, %v3304
        %3306 = vmatmul.f32.gmra.mxu0 %v3165
        %v3307 = vpop.f32.mrf.mxu0
        %v3308 = vadd.f32 0.0, %v3307
        %3309 = vmatmul.f32.gmra.mxu0 %v3168
        %v3310 = vpop.f32.mrf.mxu0
        %v3311 = vadd.f32 0.0, %v3310
        %3312 = vmatmul.f32.gmra.mxu0 %v3171
        %v3313 = vpop.f32.mrf.mxu0
        %v3314 = vadd.f32 0.0, %v3313
        %3315 = vmatmul.f32.gmra.mxu0 %v3174
        %v3316 = vpop.f32.mrf.mxu0
        %v3317 = vadd.f32 0.0, %v3316
        %3318 = vmatmul.f32.gmra.mxu0 %v3177
        %v3319 = vpop.f32.mrf.mxu0
        %v3320 = vadd.f32 0.0, %v3319
        %3321 = vmatmul.f32.gmra.mxu0 %v3180
        %v3322 = vpop.f32.mrf.mxu0
        %v3323 = vadd.f32 0.0, %v3322
        %3324 = vmatmul.f32.gmra.mxu0 %v3183
        %v3325 = vpop.f32.mrf.mxu0
        %v3326 = vadd.f32 0.0, %v3325
        %3327 = vmatmul.f32.gmra.mxu0 %v3186
        %v3328 = vpop.f32.mrf.mxu0
        %v3329 = vadd.f32 0.0, %v3328
        %3330 = vmatmul.f32.gmra.mxu0 %v3189
        %v3331 = vpop.f32.mrf.mxu0
        %v3332 = vadd.f32 0.0, %v3331
        %3333 = vmatmul.f32.gmra.mxu0 %v3192
        %v3334 = vpop.f32.mrf.mxu0
        %v3335 = vadd.f32 0.0, %v3334
        %3336 = vmatmul.f32.gmra.mxu0 %v3195
        %v3337 = vpop.f32.mrf.mxu0
        %v3338 = vadd.f32 0.0, %v3337
        %3339 = vmatmul.f32.gmra.mxu0 %v3198
        %v3340 = vpop.f32.mrf.mxu0
        %v3341 = vadd.f32 0.0, %v3340
        %3342 = vmatmul.f32.gmra.mxu0 %v3201
        %v3343 = vpop.f32.mrf.mxu0
        %v3344 = vadd.f32 0.0, %v3343
        %3345 = vmatmul.f32.gmra.mxu0 %v3204
        %v3346 = vpop.f32.mrf.mxu0
        %v3347 = vadd.f32 0.0, %v3346
        %3348 = vmatmul.f32.gmra.mxu0 %v3207
        %v3349 = vpop.f32.mrf.mxu0
        %v3350 = vadd.f32 0.0, %v3349
        %3351 = vmatmul.f32.gmra.mxu0 %v3210
        %v3352 = vpop.f32.mrf.mxu0
        %v3353 = vadd.f32 0.0, %v3352
        %3354 = vmatmul.f32.gmra.mxu0 %v3213
        %v3355 = vpop.f32.mrf.mxu0
        %v3356 = vadd.f32 0.0, %v3355
        %3357 = vdwg.mxu0
        %v3358 = vadd.f32 %v3008, %v3236
        %v3359 = vadd.f32 %v3009, %v3239
        %v3360 = vadd.f32 %v3010, %v3242
        %v3361 = vadd.f32 %v3011, %v3245
        %v3362 = vadd.f32 %v3012, %v3248
        %v3363 = vadd.f32 %v3013, %v3251
        %v3364 = vadd.f32 %v3014, %v3254
        %v3365 = vadd.f32 %v3015, %v3257
        %v3366 = vadd.f32 %v3016, %v3260
        %v3367 = vadd.f32 %v3017, %v3263
        %v3368 = vadd.f32 %v3018, %v3266
        %v3369 = vadd.f32 %v3019, %v3269
        %v3370 = vadd.f32 %v3020, %v3272
        %v3371 = vadd.f32 %v3021, %v3275
        %v3372 = vadd.f32 %v3022, %v3278
        %v3373 = vadd.f32 %v3023, %v3281
        %v3374 = vadd.f32 %v3024, %v3284
        %v3375 = vadd.f32 %v3025, %v3287
        %v3376 = vadd.f32 %v3026, %v3290
        %v3377 = vadd.f32 %v3027, %v3293
        %v3378 = vadd.f32 %v3028, %v3296
        %v3379 = vadd.f32 %v3029, %v3299
        %v3380 = vadd.f32 %v3030, %v3302
        %v3381 = vadd.f32 %v3031, %v3305
        %v3382 = vadd.f32 %v3032, %v3308
        %v3383 = vadd.f32 %v3033, %v3311
        %v3384 = vadd.f32 %v3034, %v3314
        %v3385 = vadd.f32 %v3035, %v3317
        %v3386 = vadd.f32 %v3036, %v3320
        %v3387 = vadd.f32 %v3037, %v3323
        %v3388 = vadd.f32 %v3038, %v3326
        %v3389 = vadd.f32 %v3039, %v3329
        %v3390 = vadd.f32 %v3040, %v3332
        %v3391 = vadd.f32 %v3041, %v3335
        %v3392 = vadd.f32 %v3042, %v3338
        %v3393 = vadd.f32 %v3043, %v3341
        %v3394 = vadd.f32 %v3044, %v3344
        %v3395 = vadd.f32 %v3045, %v3347
        %v3396 = vadd.f32 %v3046, %v3350
        %v3397 = vadd.f32 %v3047, %v3353
        %v3398 = vadd.f32 %v3048, %v3356
        %v3399 = vld [vmem:[%s2] sm:$0x1]
        %v3401 = vperm.slane %v3399, 0
        %v3403 = vadd.f32 %v3358, %v3401
        %v3404 = vadd.f32 %v3359, %v3401
        %v3405 = vadd.f32 %v3360, %v3401
        %v3406 = vadd.f32 %v3361, %v3401
        %v3407 = vadd.f32 %v3362, %v3401
        %v3408 = vadd.f32 %v3363, %v3401
        %v3409 = vadd.f32 %v3364, %v3401
        %v3410 = vadd.f32 %v3365, %v3401
        %v3411 = vadd.f32 %v3366, %v3401
        %v3412 = vadd.f32 %v3367, %v3401
        %v3413 = vadd.f32 %v3368, %v3401
        %v3414 = vadd.f32 %v3369, %v3401
        %v3415 = vadd.f32 %v3370, %v3401
        %v3416 = vadd.f32 %v3371, %v3401
        %v3417 = vadd.f32 %v3372, %v3401
        %v3418 = vadd.f32 %v3373, %v3401
        %v3419 = vadd.f32 %v3374, %v3401
        %v3420 = vadd.f32 %v3375, %v3401
        %v3421 = vadd.f32 %v3376, %v3401
        %v3422 = vadd.f32 %v3377, %v3401
        %v3423 = vadd.f32 %v3378, %v3401
        %v3424 = vadd.f32 %v3379, %v3401
        %v3425 = vadd.f32 %v3380, %v3401
        %v3426 = vadd.f32 %v3381, %v3401
        %v3427 = vadd.f32 %v3382, %v3401
        %v3428 = vadd.f32 %v3383, %v3401
        %v3429 = vadd.f32 %v3384, %v3401
        %v3430 = vadd.f32 %v3385, %v3401
        %v3431 = vadd.f32 %v3386, %v3401
        %v3432 = vadd.f32 %v3387, %v3401
        %v3433 = vadd.f32 %v3388, %v3401
        %v3434 = vadd.f32 %v3389, %v3401
        %v3435 = vadd.f32 %v3390, %v3401
        %v3436 = vadd.f32 %v3391, %v3401
        %v3437 = vadd.f32 %v3392, %v3401
        %v3438 = vadd.f32 %v3393, %v3401
        %v3439 = vadd.f32 %v3394, %v3401
        %v3440 = vadd.f32 %v3395, %v3401
        %v3441 = vadd.f32 %v3396, %v3401
        %v3442 = vadd.f32 %v3397, %v3401
        %v3443 = vadd.f32 %v3398, %v3401
        %v3444 = vmax.f32 %v3403, 0.0
        %v3445 = vmax.f32 %v3404, 0.0
        %v3446 = vmax.f32 %v3405, 0.0
        %v3447 = vmax.f32 %v3406, 0.0
        %v3448 = vmax.f32 %v3407, 0.0
        %v3449 = vmax.f32 %v3408, 0.0
        %v3450 = vmax.f32 %v3409, 0.0
        %v3451 = vmax.f32 %v3410, 0.0
        %v3452 = vmax.f32 %v3411, 0.0
        %v3453 = vmax.f32 %v3412, 0.0
        %v3454 = vmax.f32 %v3413, 0.0
        %v3455 = vmax.f32 %v3414, 0.0
        %v3456 = vmax.f32 %v3415, 0.0
        %v3457 = vmax.f32 %v3416, 0.0
        %v3458 = vmax.f32 %v3417, 0.0
        %v3459 = vmax.f32 %v3418, 0.0
        %v3460 = vmax.f32 %v3419, 0.0
        %v3461 = vmax.f32 %v3420, 0.0
        %v3462 = vmax.f32 %v3421, 0.0
        %v3463 = vmax.f32 %v3422, 0.0
        %v3464 = vmax.f32 %v3423, 0.0
        %v3465 = vmax.f32 %v3424, 0.0
        %v3466 = vmax.f32 %v3425, 0.0
        %v3467 = vmax.f32 %v3426, 0.0
        %v3468 = vmax.f32 %v3427, 0.0
        %v3469 = vmax.f32 %v3428, 0.0
        %v3470 = vmax.f32 %v3429, 0.0
        %v3471 = vmax.f32 %v3430, 0.0
        %v3472 = vmax.f32 %v3431, 0.0
        %v3473 = vmax.f32 %v3432, 0.0
        %v3474 = vmax.f32 %v3433, 0.0
        %v3475 = vmax.f32 %v3434, 0.0
        %v3476 = vmax.f32 %v3435, 0.0
        %v3477 = vmax.f32 %v3436, 0.0
        %v3478 = vmax.f32 %v3437, 0.0
        %v3479 = vmax.f32 %v3438, 0.0
        %v3480 = vmax.f32 %v3439, 0.0
        %v3481 = vmax.f32 %v3440, 0.0
        %v3482 = vmax.f32 %v3441, 0.0
        %v3483 = vmax.f32 %v3442, 0.0
        %v3484 = vmax.f32 %v3443, 0.0
        %vm3485 = vcmask 64512
        %3486 = vst.msk [vmem:[#allocation2] sm:$0xff] %vm3485, %v3444
        %3487 = vst.msk [vmem:[#allocation2 + $0x8] sm:$0xff] %vm3485, %v3445
        %3488 = vst.msk [vmem:[#allocation2 + $0x10] sm:$0xff] %vm3485, %v3446
        %3489 = vst.msk [vmem:[#allocation2 + $0x18] sm:$0xff] %vm3485, %v3447
        %3490 = vst.msk [vmem:[#allocation2 + $0x20] sm:$0xff] %vm3485, %v3448
        %3491 = vst.msk [vmem:[#allocation2 + $0x28] sm:$0xff] %vm3485, %v3449
        %3492 = vst.msk [vmem:[#allocation2 + $0x30] sm:$0xff] %vm3485, %v3450
        %3493 = vst.msk [vmem:[#allocation2 + $0x38] sm:$0xff] %vm3485, %v3451
        %3494 = vst.msk [vmem:[#allocation2 + $0x40] sm:$0xff] %vm3485, %v3452
        %3495 = vst.msk [vmem:[#allocation2 + $0x48] sm:$0xff] %vm3485, %v3453
        %3496 = vst.msk [vmem:[#allocation2 + $0x50] sm:$0xff] %vm3485, %v3454
        %3497 = vst.msk [vmem:[#allocation2 + $0x58] sm:$0xff] %vm3485, %v3455
        %3498 = vst.msk [vmem:[#allocation2 + $0x60] sm:$0xff] %vm3485, %v3456
        %3499 = vst.msk [vmem:[#allocation2 + $0x68] sm:$0xff] %vm3485, %v3457
        %3500 = vst.msk [vmem:[#allocation2 + $0x70] sm:$0xff] %vm3485, %v3458
        %3501 = vst.msk [vmem:[#allocation2 + $0x78] sm:$0xff] %vm3485, %v3459
        %3502 = vst.msk [vmem:[#allocation2 + $0x80] sm:$0xff] %vm3485, %v3460
        %3503 = vst.msk [vmem:[#allocation2 + $0x88] sm:$0xff] %vm3485, %v3461
        %3504 = vst.msk [vmem:[#allocation2 + $0x90] sm:$0xff] %vm3485, %v3462
        %3505 = vst.msk [vmem:[#allocation2 + $0x98] sm:$0xff] %vm3485, %v3463
        %3506 = vst.msk [vmem:[#allocation2 + $0xa0] sm:$0xff] %vm3485, %v3464
        %3507 = vst.msk [vmem:[#allocation2 + $0xa8] sm:$0xff] %vm3485, %v3465
        %3508 = vst.msk [vmem:[#allocation2 + $0xb0] sm:$0xff] %vm3485, %v3466
        %3509 = vst.msk [vmem:[#allocation2 + $0xb8] sm:$0xff] %vm3485, %v3467
        %3510 = vst.msk [vmem:[#allocation2 + $0xc0] sm:$0xff] %vm3485, %v3468
        %3511 = vst.msk [vmem:[#allocation2 + $0xc8] sm:$0xff] %vm3485, %v3469
        %3512 = vst.msk [vmem:[#allocation2 + $0xd0] sm:$0xff] %vm3485, %v3470
        %3513 = vst.msk [vmem:[#allocation2 + $0xd8] sm:$0xff] %vm3485, %v3471
        %3514 = vst.msk [vmem:[#allocation2 + $0xe0] sm:$0xff] %vm3485, %v3472
        %3515 = vst.msk [vmem:[#allocation2 + $0xe8] sm:$0xff] %vm3485, %v3473
        %3516 = vst.msk [vmem:[#allocation2 + $0xf0] sm:$0xff] %vm3485, %v3474
        %3517 = vst.msk [vmem:[#allocation2 + $0xf8] sm:$0xff] %vm3485, %v3475
        %3518 = vst.msk [vmem:[#allocation2 + $0x100] sm:$0xff] %vm3485, %v3476
        %3519 = vst.msk [vmem:[#allocation2 + $0x108] sm:$0xff] %vm3485, %v3477
        %3520 = vst.msk [vmem:[#allocation2 + $0x110] sm:$0xff] %vm3485, %v3478
        %3521 = vst.msk [vmem:[#allocation2 + $0x118] sm:$0xff] %vm3485, %v3479
        %3522 = vst.msk [vmem:[#allocation2 + $0x120] sm:$0xff] %vm3485, %v3480
        %3523 = vst.msk [vmem:[#allocation2 + $0x128] sm:$0xff] %vm3485, %v3481
        %3524 = vst.msk [vmem:[#allocation2 + $0x130] sm:$0xff] %vm3485, %v3482
        %3525 = vst.msk [vmem:[#allocation2 + $0x138] sm:$0xff] %vm3485, %v3483
        %vm3526 = vcmask 60416
        %3527 = vst.msk [vmem:[#allocation2 + $0x140] sm:$0xf] %vm3526, %v3484
        %3528 = vst.msk [vmem:[#allocation3] sm:$0xff] %vm3485, 0.0
        %3529 = vst.msk [vmem:[#allocation3 + $0x8] sm:$0xff] %vm3485, 0.0
        %3530 = vst.msk [vmem:[#allocation3 + $0x10] sm:$0xff] %vm3485, 0.0
        %3531 = vst.msk [vmem:[#allocation3 + $0x18] sm:$0xff] %vm3485, 0.0
        %3532 = vst.msk [vmem:[#allocation3 + $0x20] sm:$0xff] %vm3485, 0.0
        %3533 = vst.msk [vmem:[#allocation3 + $0x28] sm:$0xff] %vm3485, 0.0
        %3534 = vst.msk [vmem:[#allocation3 + $0x30] sm:$0xff] %vm3485, 0.0
        %3535 = vst.msk [vmem:[#allocation3 + $0x38] sm:$0xff] %vm3485, 0.0
        %3536 = vst.msk [vmem:[#allocation3 + $0x40] sm:$0xff] %vm3485, 0.0
        %3537 = vst.msk [vmem:[#allocation3 + $0x48] sm:$0xff] %vm3485, 0.0
        %3538 = vst.msk [vmem:[#allocation3 + $0x50] sm:$0xff] %vm3485, 0.0
        %3539 = vst.msk [vmem:[#allocation3 + $0x58] sm:$0xff] %vm3485, 0.0
        %3540 = vst.msk [vmem:[#allocation3 + $0x60] sm:$0xff] %vm3485, 0.0
        %3541 = vst.msk [vmem:[#allocation3 + $0x68] sm:$0xff] %vm3485, 0.0
        %3542 = vst.msk [vmem:[#allocation3 + $0x70] sm:$0xff] %vm3485, 0.0
        %3543 = vst.msk [vmem:[#allocation3 + $0x78] sm:$0xff] %vm3485, 0.0
        %3544 = vst.msk [vmem:[#allocation3 + $0x80] sm:$0xf] %vm3526, 0.0
        %s3545 = scalar_lea.vmem [#allocation2], 19
        %v3546 = vld [vmem:[%s3545] ss:$2 sm:$0xff]
        %s3547 = scalar_lea.vmem [#allocation2], 20
        %v3548 = vld [vmem:[%s3547] ss:$2 sm:$0xff]
        %s3549 = scalar_lea.vmem [#allocation2], 37
        %v3550 = vld [vmem:[%s3549] ss:$2 sm:$0xff]
        %s3551 = scalar_lea.vmem [#allocation2], 38
        %v3552 = vld [vmem:[%s3551] ss:$2 sm:$0xff]
        %v3553 = vmax.f32 %v3546, %v3548
        %v3554 = vmax.f32 %v3550, %v3552
        %v3555 = vmax.f32 %v3553, %v3554
        %3556 = vst.msk [vmem:[#allocation3 + $0x1b] sm:$0xff] %vm3485, %v3555
        %s3557 = scalar_lea.vmem [#allocation2], 55
        %v3558 = vld [vmem:[%s3557] ss:$2 sm:$0xff]
        %s3559 = scalar_lea.vmem [#allocation2], 56
        %v3560 = vld [vmem:[%s3559] ss:$2 sm:$0xff]
        %s3561 = scalar_lea.vmem [#allocation2], 73
        %v3562 = vld [vmem:[%s3561] ss:$2 sm:$0xff]
        %s3563 = scalar_lea.vmem [#allocation2], 74
        %v3564 = vld [vmem:[%s3563] ss:$2 sm:$0xff]
        %v3565 = vmax.f32 %v3558, %v3560
        %v3566 = vmax.f32 %v3562, %v3564
        %v3567 = vmax.f32 %v3565, %v3566
        %3568 = vst.msk [vmem:[#allocation3 + $0x25] sm:$0xff] %vm3485, %v3567
        %s3569 = scalar_lea.vmem [#allocation2], 91
        %v3570 = vld [vmem:[%s3569] ss:$2 sm:$0xff]
        %s3571 = scalar_lea.vmem [#allocation2], 92
        %v3572 = vld [vmem:[%s3571] ss:$2 sm:$0xff]
        %s3573 = scalar_lea.vmem [#allocation2], 109
        %v3574 = vld [vmem:[%s3573] ss:$2 sm:$0xff]
        %s3575 = scalar_lea.vmem [#allocation2], 110
        %v3576 = vld [vmem:[%s3575] ss:$2 sm:$0xff]
        %v3577 = vmax.f32 %v3570, %v3572
        %v3578 = vmax.f32 %v3574, %v3576
        %v3579 = vmax.f32 %v3577, %v3578
        %3580 = vst.msk [vmem:[#allocation3 + $0x2f] sm:$0xff] %vm3485, %v3579
        %s3581 = scalar_lea.vmem [#allocation2], 127
        %v3582 = vld [vmem:[%s3581] ss:$2 sm:$0xff]
        %s3583 = scalar_lea.vmem [#allocation2], 128
        %v3584 = vld [vmem:[%s3583] ss:$2 sm:$0xff]
        %s3585 = scalar_lea.vmem [#allocation2], 145
        %v3586 = vld [vmem:[%s3585] ss:$2 sm:$0xff]
        %s3587 = scalar_lea.vmem [#allocation2], 146
        %v3588 = vld [vmem:[%s3587] ss:$2 sm:$0xff]
        %v3589 = vmax.f32 %v3582, %v3584
        %v3590 = vmax.f32 %v3586, %v3588
        %v3591 = vmax.f32 %v3589, %v3590
        %3592 = vst.msk [vmem:[#allocation3 + $0x39] sm:$0xff] %vm3485, %v3591
        %s3593 = scalar_lea.vmem [#allocation2], 163
        %v3594 = vld [vmem:[%s3593] ss:$2 sm:$0xff]
        %s3595 = scalar_lea.vmem [#allocation2], 164
        %v3596 = vld [vmem:[%s3595] ss:$2 sm:$0xff]
        %s3597 = scalar_lea.vmem [#allocation2], 181
        %v3598 = vld [vmem:[%s3597] ss:$2 sm:$0xff]
        %s3599 = scalar_lea.vmem [#allocation2], 182
        %v3600 = vld [vmem:[%s3599] ss:$2 sm:$0xff]
        %v3601 = vmax.f32 %v3594, %v3596
        %v3602 = vmax.f32 %v3598, %v3600
        %v3603 = vmax.f32 %v3601, %v3602
        %3604 = vst.msk [vmem:[#allocation3 + $0x43] sm:$0xff] %vm3485, %v3603
        %s3605 = scalar_lea.vmem [#allocation2], 199
        %v3606 = vld [vmem:[%s3605] ss:$2 sm:$0xff]
        %s3607 = scalar_lea.vmem [#allocation2], 200
        %v3608 = vld [vmem:[%s3607] ss:$2 sm:$0xff]
        %s3609 = scalar_lea.vmem [#allocation2], 217
        %v3610 = vld [vmem:[%s3609] ss:$2 sm:$0xff]
        %s3611 = scalar_lea.vmem [#allocation2], 218
        %v3612 = vld [vmem:[%s3611] ss:$2 sm:$0xff]
        %v3613 = vmax.f32 %v3606, %v3608
        %v3614 = vmax.f32 %v3610, %v3612
        %v3615 = vmax.f32 %v3613, %v3614
        %3616 = vst.msk [vmem:[#allocation3 + $0x4d] sm:$0xff] %vm3485, %v3615
        %s3617 = scalar_lea.vmem [#allocation2], 235
        %v3618 = vld [vmem:[%s3617] ss:$2 sm:$0xff]
        %s3619 = scalar_lea.vmem [#allocation2], 236
        %v3620 = vld [vmem:[%s3619] ss:$2 sm:$0xff]
        %s3621 = scalar_lea.vmem [#allocation2], 253
        %v3622 = vld [vmem:[%s3621] ss:$2 sm:$0xff]
        %s3623 = scalar_lea.vmem [#allocation2], 254
        %v3624 = vld [vmem:[%s3623] ss:$2 sm:$0xff]
        %v3625 = vmax.f32 %v3618, %v3620
        %v3626 = vmax.f32 %v3622, %v3624
        %v3627 = vmax.f32 %v3625, %v3626
        %3628 = vst.msk [vmem:[#allocation3 + $0x57] sm:$0xff] %vm3485, %v3627
        %s3629 = scalar_lea.vmem [#allocation2], 271
        %v3630 = vld [vmem:[%s3629] ss:$2 sm:$0xff]
        %s3631 = scalar_lea.vmem [#allocation2], 272
        %v3632 = vld [vmem:[%s3631] ss:$2 sm:$0xff]
        %s3633 = scalar_lea.vmem [#allocation2], 289
        %v3634 = vld [vmem:[%s3633] ss:$2 sm:$0xff]
        %s3635 = scalar_lea.vmem [#allocation2], 290
        %v3636 = vld [vmem:[%s3635] ss:$2 sm:$0xff]
        %v3637 = vmax.f32 %v3630, %v3632
        %v3638 = vmax.f32 %v3634, %v3636
        %v3639 = vmax.f32 %v3637, %v3638
        %3640 = vst.msk [vmem:[#allocation3 + $0x61] sm:$0xff] %vm3485, %v3639
        %v3641 = vld [vmem:[#allocation3 + $0x5] sm:$0xff]
        %v3642 = vld [vmem:[#allocation3 + $0xd] sm:$0xff]
        %v3643 = vld [vmem:[#allocation3 + $0x15] sm:$0xff]
        %v3644 = vld [vmem:[#allocation3 + $0x1d] sm:$0xff]
        %v3645 = vld [vmem:[#allocation3 + $0x25] sm:$0xff]
        %v3646 = vld [vmem:[#allocation3 + $0x2d] sm:$0xff]
        %v3647 = vld [vmem:[#allocation3 + $0x35] sm:$0xff]
        %v3648 = vld [vmem:[#allocation3 + $0x3d] sm:$0xff]
        %v3649 = vld [vmem:[#allocation3 + $0x45] sm:$0xff]
        %v3650 = vld [vmem:[#allocation3 + $0x4d] sm:$0xff]
        %v3651 = vld [vmem:[#allocation3 + $0x55] sm:$0xff]
        %v3652 = vld [vmem:[#allocation3 + $0x5d] sm:$0xff]
        %v3653 = vld [vmem:[#allocation3 + $0x65] sm:$0xf]
        %v3654 = vld [vmem:[%s3] sm:$0xff]
        %v3655 = vld [vmem:[#allocation3 + $0x6] sm:$0xff]
        %v3656 = vld [vmem:[#allocation3 + $0xe] sm:$0xff]
        %v3657 = vld [vmem:[#allocation3 + $0x16] sm:$0xff]
        %v3658 = vld [vmem:[#allocation3 + $0x1e] sm:$0xff]
        %v3659 = vld [vmem:[#allocation3 + $0x26] sm:$0xff]
        %v3660 = vld [vmem:[#allocation3 + $0x2e] sm:$0xff]
        %v3661 = vld [vmem:[#allocation3 + $0x36] sm:$0xff]
        %v3662 = vld [vmem:[#allocation3 + $0x3e] sm:$0xff]
        %v3663 = vld [vmem:[#allocation3 + $0x46] sm:$0xff]
        %v3664 = vld [vmem:[#allocation3 + $0x4e] sm:$0xff]
        %v3665 = vld [vmem:[#allocation3 + $0x56] sm:$0xff]
        %v3666 = vld [vmem:[#allocation3 + $0x5e] sm:$0xff]
        %v3667 = vld [vmem:[#allocation3 + $0x66] sm:$0xf]
        %s3668 = scalar_lea.vmem %s3, 8
        %v3669 = vld [vmem:[%s3668] sm:$0xff]
        %v3671 = vsel %vm3485, %v3655, 0
        %v3674 = vsel %vm3485, %v3656, 0
        %v3677 = vsel %vm3485, %v3657, 0
        %v3680 = vsel %vm3485, %v3658, 0
        %v3683 = vsel %vm3485, %v3659, 0
        %v3686 = vsel %vm3485, %v3660, 0
        %v3689 = vsel %vm3485, %v3661, 0
        %v3692 = vsel %vm3485, %v3662, 0
        %v3695 = vsel %vm3485, %v3663, 0
        %v3698 = vsel %vm3485, %v3664, 0
        %v3701 = vsel %vm3485, %v3665, 0
        %v3704 = vsel %vm3485, %v3666, 0
        %v3707 = vsel %vm3485, %v3667, 0
        %3709 = vmatpush.msra.mxu0 0.0
        %3710 = vmatpush.msra.mxu0 0.0
        %3711 = vmatpush.msra.mxu0 0.0
        %3712 = vmatpush.msra.mxu0 0.0
        %3713 = vmatpush.msra.mxu0 0.0
        %3714 = vmatpush.msra.mxu0 0.0
        %3715 = vmatpush.msra.mxu0 0.0
        %3716 = vmatpush.msra.mxu0 0.0
        %3717 = vmatpush.msra.mxu0 0.0
        %3718 = vmatpush.msra.mxu0 0.0
        %3719 = vmatpush.msra.mxu0 0.0
        %3720 = vmatpush.msra.mxu0 0.0
        %3721 = vmatpush.msra.mxu0 0.0
        %3722 = vmatpush.msra.mxu0 0.0
        %3723 = vmatpush.msra.mxu0 0.0
        %3724 = vmatpush.msra.mxu0 %v3669
        %3725 = vmatmul.f32.gmra.mxu0 %v3671
        %v3726 = vpop.f32.mrf.mxu0
        %v3727 = vadd.f32 0.0, %v3726
        %3728 = vmatmul.f32.gmra.mxu0 %v3674
        %v3729 = vpop.f32.mrf.mxu0
        %v3730 = vadd.f32 0.0, %v3729
        %3731 = vmatmul.f32.gmra.mxu0 %v3677
        %v3732 = vpop.f32.mrf.mxu0
        %v3733 = vadd.f32 0.0, %v3732
        %3734 = vmatmul.f32.gmra.mxu0 %v3680
        %v3735 = vpop.f32.mrf.mxu0
        %v3736 = vadd.f32 0.0, %v3735
        %3737 = vmatmul.f32.gmra.mxu0 %v3683
        %v3738 = vpop.f32.mrf.mxu0
        %v3739 = vadd.f32 0.0, %v3738
        %3740 = vmatmul.f32.gmra.mxu0 %v3686
        %v3741 = vpop.f32.mrf.mxu0
        %v3742 = vadd.f32 0.0, %v3741
        %3743 = vmatmul.f32.gmra.mxu0 %v3689
        %v3744 = vpop.f32.mrf.mxu0
        %v3745 = vadd.f32 0.0, %v3744
        %3746 = vmatmul.f32.gmra.mxu0 %v3692
        %v3747 = vpop.f32.mrf.mxu0
        %v3748 = vadd.f32 0.0, %v3747
        %3749 = vmatmul.f32.gmra.mxu0 %v3695
        %v3750 = vpop.f32.mrf.mxu0
        %v3751 = vadd.f32 0.0, %v3750
        %3752 = vmatmul.f32.gmra.mxu0 %v3698
        %v3753 = vpop.f32.mrf.mxu0
        %v3754 = vadd.f32 0.0, %v3753
        %3755 = vmatmul.f32.gmra.mxu0 %v3701
        %v3756 = vpop.f32.mrf.mxu0
        %v3757 = vadd.f32 0.0, %v3756
        %3758 = vmatmul.f32.gmra.mxu0 %v3704
        %v3759 = vpop.f32.mrf.mxu0
        %v3760 = vadd.f32 0.0, %v3759
        %3761 = vmatmul.f32.gmra.mxu0 %v3707
        %v3762 = vpop.f32.mrf.mxu0
        %v3763 = vadd.f32 0.0, %v3762
        %3764 = vdwg.mxu0
        %v3766 = vsel %vm3485, %v3641, 0
        %v3769 = vsel %vm3485, %v3642, 0
        %v3772 = vsel %vm3485, %v3643, 0
        %v3775 = vsel %vm3485, %v3644, 0
        %v3778 = vsel %vm3485, %v3645, 0
        %v3781 = vsel %vm3485, %v3646, 0
        %v3784 = vsel %vm3485, %v3647, 0
        %v3787 = vsel %vm3485, %v3648, 0
        %v3790 = vsel %vm3485, %v3649, 0
        %v3793 = vsel %vm3485, %v3650, 0
        %v3796 = vsel %vm3485, %v3651, 0
        %v3799 = vsel %vm3485, %v3652, 0
        %v3802 = vsel %vm3485, %v3653, 0
        %3804 = vmatpush.msra.mxu0 0.0
        %3805 = vmatpush.msra.mxu0 0.0
        %3806 = vmatpush.msra.mxu0 0.0
        %3807 = vmatpush.msra.mxu0 0.0
        %3808 = vmatpush.msra.mxu0 0.0
        %3809 = vmatpush.msra.mxu0 0.0
        %3810 = vmatpush.msra.mxu0 0.0
        %3811 = vmatpush.msra.mxu0 0.0
        %3812 = vmatpush.msra.mxu0 0.0
        %3813 = vmatpush.msra.mxu0 0.0
        %3814 = vmatpush.msra.mxu0 0.0
        %3815 = vmatpush.msra.mxu0 0.0
        %3816 = vmatpush.msra.mxu0 0.0
        %3817 = vmatpush.msra.mxu0 0.0
        %3818 = vmatpush.msra.mxu0 0.0
        %3819 = vmatpush.msra.mxu0 %v3654
        %3820 = vmatmul.f32.gmra.mxu0 %v3766
        %v3821 = vpop.f32.mrf.mxu0
        %v3822 = vadd.f32 %v3727, %v3821
        %3823 = vmatmul.f32.gmra.mxu0 %v3769
        %v3824 = vpop.f32.mrf.mxu0
        %v3825 = vadd.f32 %v3730, %v3824
        %3826 = vmatmul.f32.gmra.mxu0 %v3772
        %v3827 = vpop.f32.mrf.mxu0
        %v3828 = vadd.f32 %v3733, %v3827
        %3829 = vmatmul.f32.gmra.mxu0 %v3775
        %v3830 = vpop.f32.mrf.mxu0
        %v3831 = vadd.f32 %v3736, %v3830
        %3832 = vmatmul.f32.gmra.mxu0 %v3778
        %v3833 = vpop.f32.mrf.mxu0
        %v3834 = vadd.f32 %v3739, %v3833
        %3835 = vmatmul.f32.gmra.mxu0 %v3781
        %v3836 = vpop.f32.mrf.mxu0
        %v3837 = vadd.f32 %v3742, %v3836
        %3838 = vmatmul.f32.gmra.mxu0 %v3784
        %v3839 = vpop.f32.mrf.mxu0
        %v3840 = vadd.f32 %v3745, %v3839
        %3841 = vmatmul.f32.gmra.mxu0 %v3787
        %v3842 = vpop.f32.mrf.mxu0
        %v3843 = vadd.f32 %v3748, %v3842
        %3844 = vmatmul.f32.gmra.mxu0 %v3790
        %v3845 = vpop.f32.mrf.mxu0
        %v3846 = vadd.f32 %v3751, %v3845
        %3847 = vmatmul.f32.gmra.mxu0 %v3793
        %v3848 = vpop.f32.mrf.mxu0
        %v3849 = vadd.f32 %v3754, %v3848
        %3850 = vmatmul.f32.gmra.mxu0 %v3796
        %v3851 = vpop.f32.mrf.mxu0
        %v3852 = vadd.f32 %v3757, %v3851
        %3853 = vmatmul.f32.gmra.mxu0 %v3799
        %v3854 = vpop.f32.mrf.mxu0
        %v3855 = vadd.f32 %v3760, %v3854
        %3856 = vmatmul.f32.gmra.mxu0 %v3802
        %v3857 = vpop.f32.mrf.mxu0
        %v3858 = vadd.f32 %v3763, %v3857
        %3859 = vdwg.mxu0
        %v3860 = vld [vmem:[#allocation3 + $0x7] sm:$0xff]
        %v3861 = vld [vmem:[#allocation3 + $0xf] sm:$0xff]
        %v3862 = vld [vmem:[#allocation3 + $0x17] sm:$0xff]
        %v3863 = vld [vmem:[#allocation3 + $0x1f] sm:$0xff]
        %v3864 = vld [vmem:[#allocation3 + $0x27] sm:$0xff]
        %v3865 = vld [vmem:[#allocation3 + $0x2f] sm:$0xff]
        %v3866 = vld [vmem:[#allocation3 + $0x37] sm:$0xff]
        %v3867 = vld [vmem:[#allocation3 + $0x3f] sm:$0xff]
        %v3868 = vld [vmem:[#allocation3 + $0x47] sm:$0xff]
        %v3869 = vld [vmem:[#allocation3 + $0x4f] sm:$0xff]
        %v3870 = vld [vmem:[#allocation3 + $0x57] sm:$0xff]
        %v3871 = vld [vmem:[#allocation3 + $0x5f] sm:$0xff]
        %v3872 = vld [vmem:[#allocation3 + $0x67] sm:$0xf]
        %s3873 = scalar_lea.vmem %s3, 16
        %v3874 = vld [vmem:[%s3873] sm:$0xff]
        %v3876 = vsel %vm3485, %v3860, 0
        %v3879 = vsel %vm3485, %v3861, 0
        %v3882 = vsel %vm3485, %v3862, 0
        %v3885 = vsel %vm3485, %v3863, 0
        %v3888 = vsel %vm3485, %v3864, 0
        %v3891 = vsel %vm3485, %v3865, 0
        %v3894 = vsel %vm3485, %v3866, 0
        %v3897 = vsel %vm3485, %v3867, 0
        %v3900 = vsel %vm3485, %v3868, 0
        %v3903 = vsel %vm3485, %v3869, 0
        %v3906 = vsel %vm3485, %v3870, 0
        %v3909 = vsel %vm3485, %v3871, 0
        %v3912 = vsel %vm3485, %v3872, 0
        %3914 = vmatpush.msra.mxu0 0.0
        %3915 = vmatpush.msra.mxu0 0.0
        %3916 = vmatpush.msra.mxu0 0.0
        %3917 = vmatpush.msra.mxu0 0.0
        %3918 = vmatpush.msra.mxu0 0.0
        %3919 = vmatpush.msra.mxu0 0.0
        %3920 = vmatpush.msra.mxu0 0.0
        %3921 = vmatpush.msra.mxu0 0.0
        %3922 = vmatpush.msra.mxu0 0.0
        %3923 = vmatpush.msra.mxu0 0.0
        %3924 = vmatpush.msra.mxu0 0.0
        %3925 = vmatpush.msra.mxu0 0.0
        %3926 = vmatpush.msra.mxu0 0.0
        %3927 = vmatpush.msra.mxu0 0.0
        %3928 = vmatpush.msra.mxu0 0.0
        %3929 = vmatpush.msra.mxu0 %v3874
        %3930 = vmatmul.f32.gmra.mxu0 %v3876
        %v3931 = vpop.f32.mrf.mxu0
        %v3932 = vadd.f32 0.0, %v3931
        %3933 = vmatmul.f32.gmra.mxu0 %v3879
        %v3934 = vpop.f32.mrf.mxu0
        %v3935 = vadd.f32 0.0, %v3934
        %3936 = vmatmul.f32.gmra.mxu0 %v3882
        %v3937 = vpop.f32.mrf.mxu0
        %v3938 = vadd.f32 0.0, %v3937
        %3939 = vmatmul.f32.gmra.mxu0 %v3885
        %v3940 = vpop.f32.mrf.mxu0
        %v3941 = vadd.f32 0.0, %v3940
        %3942 = vmatmul.f32.gmra.mxu0 %v3888
        %v3943 = vpop.f32.mrf.mxu0
        %v3944 = vadd.f32 0.0, %v3943
        %3945 = vmatmul.f32.gmra.mxu0 %v3891
        %v3946 = vpop.f32.mrf.mxu0
        %v3947 = vadd.f32 0.0, %v3946
        %3948 = vmatmul.f32.gmra.mxu0 %v3894
        %v3949 = vpop.f32.mrf.mxu0
        %v3950 = vadd.f32 0.0, %v3949
        %3951 = vmatmul.f32.gmra.mxu0 %v3897
        %v3952 = vpop.f32.mrf.mxu0
        %v3953 = vadd.f32 0.0, %v3952
        %3954 = vmatmul.f32.gmra.mxu0 %v3900
        %v3955 = vpop.f32.mrf.mxu0
        %v3956 = vadd.f32 0.0, %v3955
        %3957 = vmatmul.f32.gmra.mxu0 %v3903
        %v3958 = vpop.f32.mrf.mxu0
        %v3959 = vadd.f32 0.0, %v3958
        %3960 = vmatmul.f32.gmra.mxu0 %v3906
        %v3961 = vpop.f32.mrf.mxu0
        %v3962 = vadd.f32 0.0, %v3961
        %3963 = vmatmul.f32.gmra.mxu0 %v3909
        %v3964 = vpop.f32.mrf.mxu0
        %v3965 = vadd.f32 0.0, %v3964
        %3966 = vmatmul.f32.gmra.mxu0 %v3912
        %v3967 = vpop.f32.mrf.mxu0
        %v3968 = vadd.f32 0.0, %v3967
        %3969 = vdwg.mxu0
        %v3970 = vadd.f32 %v3822, %v3932
        %v3971 = vadd.f32 %v3825, %v3935
        %v3972 = vadd.f32 %v3828, %v3938
        %v3973 = vadd.f32 %v3831, %v3941
        %v3974 = vadd.f32 %v3834, %v3944
        %v3975 = vadd.f32 %v3837, %v3947
        %v3976 = vadd.f32 %v3840, %v3950
        %v3977 = vadd.f32 %v3843, %v3953
        %v3978 = vadd.f32 %v3846, %v3956
        %v3979 = vadd.f32 %v3849, %v3959
        %v3980 = vadd.f32 %v3852, %v3962
        %v3981 = vadd.f32 %v3855, %v3965
        %v3982 = vadd.f32 %v3858, %v3968
        %v3983 = vld [vmem:[#allocation3 + $0xf] sm:$0xff]
        %v3984 = vld [vmem:[#allocation3 + $0x17] sm:$0xff]
        %v3985 = vld [vmem:[#allocation3 + $0x1f] sm:$0xff]
        %v3986 = vld [vmem:[#allocation3 + $0x27] sm:$0xff]
        %v3987 = vld [vmem:[#allocation3 + $0x2f] sm:$0xff]
        %v3988 = vld [vmem:[#allocation3 + $0x37] sm:$0xff]
        %v3989 = vld [vmem:[#allocation3 + $0x3f] sm:$0xff]
        %v3990 = vld [vmem:[#allocation3 + $0x47] sm:$0xff]
        %v3991 = vld [vmem:[#allocation3 + $0x4f] sm:$0xff]
        %v3992 = vld [vmem:[#allocation3 + $0x57] sm:$0xff]
        %v3993 = vld [vmem:[#allocation3 + $0x5f] sm:$0xff]
        %v3994 = vld [vmem:[#allocation3 + $0x67] sm:$0xff]
        %v3995 = vld [vmem:[#allocation3 + $0x6f] sm:$0xf]
        %s3996 = scalar_lea.vmem %s3, 24
        %v3997 = vld [vmem:[%s3996] sm:$0xff]
        %v3999 = vsel %vm3485, %v3983, 0
        %v4002 = vsel %vm3485, %v3984, 0
        %v4005 = vsel %vm3485, %v3985, 0
        %v4008 = vsel %vm3485, %v3986, 0
        %v4011 = vsel %vm3485, %v3987, 0
        %v4014 = vsel %vm3485, %v3988, 0
        %v4017 = vsel %vm3485, %v3989, 0
        %v4020 = vsel %vm3485, %v3990, 0
        %v4023 = vsel %vm3485, %v3991, 0
        %v4026 = vsel %vm3485, %v3992, 0
        %v4029 = vsel %vm3485, %v3993, 0
        %v4032 = vsel %vm3485, %v3994, 0
        %v4035 = vsel %vm3485, %v3995, 0
        %4037 = vmatpush.msra.mxu0 0.0
        %4038 = vmatpush.msra.mxu0 0.0
        %4039 = vmatpush.msra.mxu0 0.0
        %4040 = vmatpush.msra.mxu0 0.0
        %4041 = vmatpush.msra.mxu0 0.0
        %4042 = vmatpush.msra.mxu0 0.0
        %4043 = vmatpush.msra.mxu0 0.0
        %4044 = vmatpush.msra.mxu0 0.0
        %4045 = vmatpush.msra.mxu0 0.0
        %4046 = vmatpush.msra.mxu0 0.0
        %4047 = vmatpush.msra.mxu0 0.0
        %4048 = vmatpush.msra.mxu0 0.0
        %4049 = vmatpush.msra.mxu0 0.0
        %4050 = vmatpush.msra.mxu0 0.0
        %4051 = vmatpush.msra.mxu0 0.0
        %4052 = vmatpush.msra.mxu0 %v3997
        %4053 = vmatmul.f32.gmra.mxu0 %v3999
        %v4054 = vpop.f32.mrf.mxu0
        %v4055 = vadd.f32 0.0, %v4054
        %4056 = vmatmul.f32.gmra.mxu0 %v4002
        %v4057 = vpop.f32.mrf.mxu0
        %v4058 = vadd.f32 0.0, %v4057
        %4059 = vmatmul.f32.gmra.mxu0 %v4005
        %v4060 = vpop.f32.mrf.mxu0
        %v4061 = vadd.f32 0.0, %v4060
        %4062 = vmatmul.f32.gmra.mxu0 %v4008
        %v4063 = vpop.f32.mrf.mxu0
        %v4064 = vadd.f32 0.0, %v4063
        %4065 = vmatmul.f32.gmra.mxu0 %v4011
        %v4066 = vpop.f32.mrf.mxu0
        %v4067 = vadd.f32 0.0, %v4066
        %4068 = vmatmul.f32.gmra.mxu0 %v4014
        %v4069 = vpop.f32.mrf.mxu0
        %v4070 = vadd.f32 0.0, %v4069
        %4071 = vmatmul.f32.gmra.mxu0 %v4017
        %v4072 = vpop.f32.mrf.mxu0
        %v4073 = vadd.f32 0.0, %v4072
        %4074 = vmatmul.f32.gmra.mxu0 %v4020
        %v4075 = vpop.f32.mrf.mxu0
        %v4076 = vadd.f32 0.0, %v4075
        %4077 = vmatmul.f32.gmra.mxu0 %v4023
        %v4078 = vpop.f32.mrf.mxu0
        %v4079 = vadd.f32 0.0, %v4078
        %4080 = vmatmul.f32.gmra.mxu0 %v4026
        %v4081 = vpop.f32.mrf.mxu0
        %v4082 = vadd.f32 0.0, %v4081
        %4083 = vmatmul.f32.gmra.mxu0 %v4029
        %v4084 = vpop.f32.mrf.mxu0
        %v4085 = vadd.f32 0.0, %v4084
        %4086 = vmatmul.f32.gmra.mxu0 %v4032
        %v4087 = vpop.f32.mrf.mxu0
        %v4088 = vadd.f32 0.0, %v4087
        %4089 = vmatmul.f32.gmra.mxu0 %v4035
        %v4090 = vpop.f32.mrf.mxu0
        %v4091 = vadd.f32 0.0, %v4090
        %4092 = vdwg.mxu0
        %v4093 = vadd.f32 %v3970, %v4055
        %v4094 = vadd.f32 %v3971, %v4058
        %v4095 = vadd.f32 %v3972, %v4061
        %v4096 = vadd.f32 %v3973, %v4064
        %v4097 = vadd.f32 %v3974, %v4067
        %v4098 = vadd.f32 %v3975, %v4070
        %v4099 = vadd.f32 %v3976, %v4073
        %v4100 = vadd.f32 %v3977, %v4076
        %v4101 = vadd.f32 %v3978, %v4079
        %v4102 = vadd.f32 %v3979, %v4082
        %v4103 = vadd.f32 %v3980, %v4085
        %v4104 = vadd.f32 %v3981, %v4088
        %v4105 = vadd.f32 %v3982, %v4091
        %v4106 = vld [vmem:[#allocation3 + $0x10] sm:$0xff]
        %v4107 = vld [vmem:[#allocation3 + $0x18] sm:$0xff]
        %v4108 = vld [vmem:[#allocation3 + $0x20] sm:$0xff]
        %v4109 = vld [vmem:[#allocation3 + $0x28] sm:$0xff]
        %v4110 = vld [vmem:[#allocation3 + $0x30] sm:$0xff]
        %v4111 = vld [vmem:[#allocation3 + $0x38] sm:$0xff]
        %v4112 = vld [vmem:[#allocation3 + $0x40] sm:$0xff]
        %v4113 = vld [vmem:[#allocation3 + $0x48] sm:$0xff]
        %v4114 = vld [vmem:[#allocation3 + $0x50] sm:$0xff]
        %v4115 = vld [vmem:[#allocation3 + $0x58] sm:$0xff]
        %v4116 = vld [vmem:[#allocation3 + $0x60] sm:$0xff]
        %v4117 = vld [vmem:[#allocation3 + $0x68] sm:$0xff]
        %v4118 = vld [vmem:[#allocation3 + $0x70] sm:$0xf]
        %s4119 = scalar_lea.vmem %s3, 32
        %v4120 = vld [vmem:[%s4119] sm:$0xff]
        %v4122 = vsel %vm3485, %v4106, 0
        %v4125 = vsel %vm3485, %v4107, 0
        %v4128 = vsel %vm3485, %v4108, 0
        %v4131 = vsel %vm3485, %v4109, 0
        %v4134 = vsel %vm3485, %v4110, 0
        %v4137 = vsel %vm3485, %v4111, 0
        %v4140 = vsel %vm3485, %v4112, 0
        %v4143 = vsel %vm3485, %v4113, 0
        %v4146 = vsel %vm3485, %v4114, 0
        %v4149 = vsel %vm3485, %v4115, 0
        %v4152 = vsel %vm3485, %v4116, 0
        %v4155 = vsel %vm3485, %v4117, 0
        %v4158 = vsel %vm3485, %v4118, 0
        %4160 = vmatpush.msra.mxu0 0.0
        %4161 = vmatpush.msra.mxu0 0.0
        %4162 = vmatpush.msra.mxu0 0.0
        %4163 = vmatpush.msra.mxu0 0.0
        %4164 = vmatpush.msra.mxu0 0.0
        %4165 = vmatpush.msra.mxu0 0.0
        %4166 = vmatpush.msra.mxu0 0.0
        %4167 = vmatpush.msra.mxu0 0.0
        %4168 = vmatpush.msra.mxu0 0.0
        %4169 = vmatpush.msra.mxu0 0.0
        %4170 = vmatpush.msra.mxu0 0.0
        %4171 = vmatpush.msra.mxu0 0.0
        %4172 = vmatpush.msra.mxu0 0.0
        %4173 = vmatpush.msra.mxu0 0.0
        %4174 = vmatpush.msra.mxu0 0.0
        %4175 = vmatpush.msra.mxu0 %v4120
        %4176 = vmatmul.f32.gmra.mxu0 %v4122
        %v4177 = vpop.f32.mrf.mxu0
        %v4178 = vadd.f32 0.0, %v4177
        %4179 = vmatmul.f32.gmra.mxu0 %v4125
        %v4180 = vpop.f32.mrf.mxu0
        %v4181 = vadd.f32 0.0, %v4180
        %4182 = vmatmul.f32.gmra.mxu0 %v4128
        %v4183 = vpop.f32.mrf.mxu0
        %v4184 = vadd.f32 0.0, %v4183
        %4185 = vmatmul.f32.gmra.mxu0 %v4131
        %v4186 = vpop.f32.mrf.mxu0
        %v4187 = vadd.f32 0.0, %v4186
        %4188 = vmatmul.f32.gmra.mxu0 %v4134
        %v4189 = vpop.f32.mrf.mxu0
        %v4190 = vadd.f32 0.0, %v4189
        %4191 = vmatmul.f32.gmra.mxu0 %v4137
        %v4192 = vpop.f32.mrf.mxu0
        %v4193 = vadd.f32 0.0, %v4192
        %4194 = vmatmul.f32.gmra.mxu0 %v4140
        %v4195 = vpop.f32.mrf.mxu0
        %v4196 = vadd.f32 0.0, %v4195
        %4197 = vmatmul.f32.gmra.mxu0 %v4143
        %v4198 = vpop.f32.mrf.mxu0
        %v4199 = vadd.f32 0.0, %v4198
        %4200 = vmatmul.f32.gmra.mxu0 %v4146
        %v4201 = vpop.f32.mrf.mxu0
        %v4202 = vadd.f32 0.0, %v4201
        %4203 = vmatmul.f32.gmra.mxu0 %v4149
        %v4204 = vpop.f32.mrf.mxu0
        %v4205 = vadd.f32 0.0, %v4204
        %4206 = vmatmul.f32.gmra.mxu0 %v4152
        %v4207 = vpop.f32.mrf.mxu0
        %v4208 = vadd.f32 0.0, %v4207
        %4209 = vmatmul.f32.gmra.mxu0 %v4155
        %v4210 = vpop.f32.mrf.mxu0
        %v4211 = vadd.f32 0.0, %v4210
        %4212 = vmatmul.f32.gmra.mxu0 %v4158
        %v4213 = vpop.f32.mrf.mxu0
        %v4214 = vadd.f32 0.0, %v4213
        %4215 = vdwg.mxu0
        %v4216 = vadd.f32 %v4093, %v4178
        %v4217 = vadd.f32 %v4094, %v4181
        %v4218 = vadd.f32 %v4095, %v4184
        %v4219 = vadd.f32 %v4096, %v4187
        %v4220 = vadd.f32 %v4097, %v4190
        %v4221 = vadd.f32 %v4098, %v4193
        %v4222 = vadd.f32 %v4099, %v4196
        %v4223 = vadd.f32 %v4100, %v4199
        %v4224 = vadd.f32 %v4101, %v4202
        %v4225 = vadd.f32 %v4102, %v4205
        %v4226 = vadd.f32 %v4103, %v4208
        %v4227 = vadd.f32 %v4104, %v4211
        %v4228 = vadd.f32 %v4105, %v4214
        %v4229 = vld [vmem:[#allocation3 + $0x11] sm:$0xff]
        %v4230 = vld [vmem:[#allocation3 + $0x19] sm:$0xff]
        %v4231 = vld [vmem:[#allocation3 + $0x21] sm:$0xff]
        %v4232 = vld [vmem:[#allocation3 + $0x29] sm:$0xff]
        %v4233 = vld [vmem:[#allocation3 + $0x31] sm:$0xff]
        %v4234 = vld [vmem:[#allocation3 + $0x39] sm:$0xff]
        %v4235 = vld [vmem:[#allocation3 + $0x41] sm:$0xff]
        %v4236 = vld [vmem:[#allocation3 + $0x49] sm:$0xff]
        %v4237 = vld [vmem:[#allocation3 + $0x51] sm:$0xff]
        %v4238 = vld [vmem:[#allocation3 + $0x59] sm:$0xff]
        %v4239 = vld [vmem:[#allocation3 + $0x61] sm:$0xff]
        %v4240 = vld [vmem:[#allocation3 + $0x69] sm:$0xff]
        %v4241 = vld [vmem:[#allocation3 + $0x71] sm:$0xf]
        %s4242 = scalar_lea.vmem %s3, 40
        %v4243 = vld [vmem:[%s4242] sm:$0xff]
        %v4245 = vsel %vm3485, %v4229, 0
        %v4248 = vsel %vm3485, %v4230, 0
        %v4251 = vsel %vm3485, %v4231, 0
        %v4254 = vsel %vm3485, %v4232, 0
        %v4257 = vsel %vm3485, %v4233, 0
        %v4260 = vsel %vm3485, %v4234, 0
        %v4263 = vsel %vm3485, %v4235, 0
        %v4266 = vsel %vm3485, %v4236, 0
        %v4269 = vsel %vm3485, %v4237, 0
        %v4272 = vsel %vm3485, %v4238, 0
        %v4275 = vsel %vm3485, %v4239, 0
        %v4278 = vsel %vm3485, %v4240, 0
        %v4281 = vsel %vm3485, %v4241, 0
        %4283 = vmatpush.msra.mxu0 0.0
        %4284 = vmatpush.msra.mxu0 0.0
        %4285 = vmatpush.msra.mxu0 0.0
        %4286 = vmatpush.msra.mxu0 0.0
        %4287 = vmatpush.msra.mxu0 0.0
        %4288 = vmatpush.msra.mxu0 0.0
        %4289 = vmatpush.msra.mxu0 0.0
        %4290 = vmatpush.msra.mxu0 0.0
        %4291 = vmatpush.msra.mxu0 0.0
        %4292 = vmatpush.msra.mxu0 0.0
        %4293 = vmatpush.msra.mxu0 0.0
        %4294 = vmatpush.msra.mxu0 0.0
        %4295 = vmatpush.msra.mxu0 0.0
        %4296 = vmatpush.msra.mxu0 0.0
        %4297 = vmatpush.msra.mxu0 0.0
        %4298 = vmatpush.msra.mxu0 %v4243
        %4299 = vmatmul.f32.gmra.mxu0 %v4245
        %v4300 = vpop.f32.mrf.mxu0
        %v4301 = vadd.f32 0.0, %v4300
        %4302 = vmatmul.f32.gmra.mxu0 %v4248
        %v4303 = vpop.f32.mrf.mxu0
        %v4304 = vadd.f32 0.0, %v4303
        %4305 = vmatmul.f32.gmra.mxu0 %v4251
        %v4306 = vpop.f32.mrf.mxu0
        %v4307 = vadd.f32 0.0, %v4306
        %4308 = vmatmul.f32.gmra.mxu0 %v4254
        %v4309 = vpop.f32.mrf.mxu0
        %v4310 = vadd.f32 0.0, %v4309
        %4311 = vmatmul.f32.gmra.mxu0 %v4257
        %v4312 = vpop.f32.mrf.mxu0
        %v4313 = vadd.f32 0.0, %v4312
        %4314 = vmatmul.f32.gmra.mxu0 %v4260
        %v4315 = vpop.f32.mrf.mxu0
        %v4316 = vadd.f32 0.0, %v4315
        %4317 = vmatmul.f32.gmra.mxu0 %v4263
        %v4318 = vpop.f32.mrf.mxu0
        %v4319 = vadd.f32 0.0, %v4318
        %4320 = vmatmul.f32.gmra.mxu0 %v4266
        %v4321 = vpop.f32.mrf.mxu0
        %v4322 = vadd.f32 0.0, %v4321
        %4323 = vmatmul.f32.gmra.mxu0 %v4269
        %v4324 = vpop.f32.mrf.mxu0
        %v4325 = vadd.f32 0.0, %v4324
        %4326 = vmatmul.f32.gmra.mxu0 %v4272
        %v4327 = vpop.f32.mrf.mxu0
        %v4328 = vadd.f32 0.0, %v4327
        %4329 = vmatmul.f32.gmra.mxu0 %v4275
        %v4330 = vpop.f32.mrf.mxu0
        %v4331 = vadd.f32 0.0, %v4330
        %4332 = vmatmul.f32.gmra.mxu0 %v4278
        %v4333 = vpop.f32.mrf.mxu0
        %v4334 = vadd.f32 0.0, %v4333
        %4335 = vmatmul.f32.gmra.mxu0 %v4281
        %v4336 = vpop.f32.mrf.mxu0
        %v4337 = vadd.f32 0.0, %v4336
        %4338 = vdwg.mxu0
        %v4339 = vadd.f32 %v4216, %v4301
        %v4340 = vadd.f32 %v4217, %v4304
        %v4341 = vadd.f32 %v4218, %v4307
        %v4342 = vadd.f32 %v4219, %v4310
        %v4343 = vadd.f32 %v4220, %v4313
        %v4344 = vadd.f32 %v4221, %v4316
        %v4345 = vadd.f32 %v4222, %v4319
        %v4346 = vadd.f32 %v4223, %v4322
        %v4347 = vadd.f32 %v4224, %v4325
        %v4348 = vadd.f32 %v4225, %v4328
        %v4349 = vadd.f32 %v4226, %v4331
        %v4350 = vadd.f32 %v4227, %v4334
        %v4351 = vadd.f32 %v4228, %v4337
        %v4352 = vld [vmem:[#allocation3 + $0x19] sm:$0xff]
        %v4353 = vld [vmem:[#allocation3 + $0x21] sm:$0xff]
        %v4354 = vld [vmem:[#allocation3 + $0x29] sm:$0xff]
        %v4355 = vld [vmem:[#allocation3 + $0x31] sm:$0xff]
        %v4356 = vld [vmem:[#allocation3 + $0x39] sm:$0xff]
        %v4357 = vld [vmem:[#allocation3 + $0x41] sm:$0xff]
        %v4358 = vld [vmem:[#allocation3 + $0x49] sm:$0xff]
        %v4359 = vld [vmem:[#allocation3 + $0x51] sm:$0xff]
        %v4360 = vld [vmem:[#allocation3 + $0x59] sm:$0xff]
        %v4361 = vld [vmem:[#allocation3 + $0x61] sm:$0xff]
        %v4362 = vld [vmem:[#allocation3 + $0x69] sm:$0xff]
        %v4363 = vld [vmem:[#allocation3 + $0x71] sm:$0xff]
        %v4364 = vld [vmem:[#allocation3 + $0x79] sm:$0xf]
        %s4365 = scalar_lea.vmem %s3, 48
        %v4366 = vld [vmem:[%s4365] sm:$0xff]
        %v4368 = vsel %vm3485, %v4352, 0
        %v4371 = vsel %vm3485, %v4353, 0
        %v4374 = vsel %vm3485, %v4354, 0
        %v4377 = vsel %vm3485, %v4355, 0
        %v4380 = vsel %vm3485, %v4356, 0
        %v4383 = vsel %vm3485, %v4357, 0
        %v4386 = vsel %vm3485, %v4358, 0
        %v4389 = vsel %vm3485, %v4359, 0
        %v4392 = vsel %vm3485, %v4360, 0
        %v4395 = vsel %vm3485, %v4361, 0
        %v4398 = vsel %vm3485, %v4362, 0
        %v4401 = vsel %vm3485, %v4363, 0
        %v4404 = vsel %vm3485, %v4364, 0
        %4406 = vmatpush.msra.mxu0 0.0
        %4407 = vmatpush.msra.mxu0 0.0
        %4408 = vmatpush.msra.mxu0 0.0
        %4409 = vmatpush.msra.mxu0 0.0
        %4410 = vmatpush.msra.mxu0 0.0
        %4411 = vmatpush.msra.mxu0 0.0
        %4412 = vmatpush.msra.mxu0 0.0
        %4413 = vmatpush.msra.mxu0 0.0
        %4414 = vmatpush.msra.mxu0 0.0
        %4415 = vmatpush.msra.mxu0 0.0
        %4416 = vmatpush.msra.mxu0 0.0
        %4417 = vmatpush.msra.mxu0 0.0
        %4418 = vmatpush.msra.mxu0 0.0
        %4419 = vmatpush.msra.mxu0 0.0
        %4420 = vmatpush.msra.mxu0 0.0
        %4421 = vmatpush.msra.mxu0 %v4366
        %4422 = vmatmul.f32.gmra.mxu0 %v4368
        %v4423 = vpop.f32.mrf.mxu0
        %v4424 = vadd.f32 0.0, %v4423
        %4425 = vmatmul.f32.gmra.mxu0 %v4371
        %v4426 = vpop.f32.mrf.mxu0
        %v4427 = vadd.f32 0.0, %v4426
        %4428 = vmatmul.f32.gmra.mxu0 %v4374
        %v4429 = vpop.f32.mrf.mxu0
        %v4430 = vadd.f32 0.0, %v4429
        %4431 = vmatmul.f32.gmra.mxu0 %v4377
        %v4432 = vpop.f32.mrf.mxu0
        %v4433 = vadd.f32 0.0, %v4432
        %4434 = vmatmul.f32.gmra.mxu0 %v4380
        %v4435 = vpop.f32.mrf.mxu0
        %v4436 = vadd.f32 0.0, %v4435
        %4437 = vmatmul.f32.gmra.mxu0 %v4383
        %v4438 = vpop.f32.mrf.mxu0
        %v4439 = vadd.f32 0.0, %v4438
        %4440 = vmatmul.f32.gmra.mxu0 %v4386
        %v4441 = vpop.f32.mrf.mxu0
        %v4442 = vadd.f32 0.0, %v4441
        %4443 = vmatmul.f32.gmra.mxu0 %v4389
        %v4444 = vpop.f32.mrf.mxu0
        %v4445 = vadd.f32 0.0, %v4444
        %4446 = vmatmul.f32.gmra.mxu0 %v4392
        %v4447 = vpop.f32.mrf.mxu0
        %v4448 = vadd.f32 0.0, %v4447
        %4449 = vmatmul.f32.gmra.mxu0 %v4395
        %v4450 = vpop.f32.mrf.mxu0
        %v4451 = vadd.f32 0.0, %v4450
        %4452 = vmatmul.f32.gmra.mxu0 %v4398
        %v4453 = vpop.f32.mrf.mxu0
        %v4454 = vadd.f32 0.0, %v4453
        %4455 = vmatmul.f32.gmra.mxu0 %v4401
        %v4456 = vpop.f32.mrf.mxu0
        %v4457 = vadd.f32 0.0, %v4456
        %4458 = vmatmul.f32.gmra.mxu0 %v4404
        %v4459 = vpop.f32.mrf.mxu0
        %v4460 = vadd.f32 0.0, %v4459
        %4461 = vdwg.mxu0
        %v4462 = vadd.f32 %v4339, %v4424
        %v4463 = vadd.f32 %v4340, %v4427
        %v4464 = vadd.f32 %v4341, %v4430
        %v4465 = vadd.f32 %v4342, %v4433
        %v4466 = vadd.f32 %v4343, %v4436
        %v4467 = vadd.f32 %v4344, %v4439
        %v4468 = vadd.f32 %v4345, %v4442
        %v4469 = vadd.f32 %v4346, %v4445
        %v4470 = vadd.f32 %v4347, %v4448
        %v4471 = vadd.f32 %v4348, %v4451
        %v4472 = vadd.f32 %v4349, %v4454
        %v4473 = vadd.f32 %v4350, %v4457
        %v4474 = vadd.f32 %v4351, %v4460
        %v4475 = vld [vmem:[#allocation3 + $0x1a] sm:$0xff]
        %v4476 = vld [vmem:[#allocation3 + $0x22] sm:$0xff]
        %v4477 = vld [vmem:[#allocation3 + $0x2a] sm:$0xff]
        %v4478 = vld [vmem:[#allocation3 + $0x32] sm:$0xff]
        %v4479 = vld [vmem:[#allocation3 + $0x3a] sm:$0xff]
        %v4480 = vld [vmem:[#allocation3 + $0x42] sm:$0xff]
        %v4481 = vld [vmem:[#allocation3 + $0x4a] sm:$0xff]
        %v4482 = vld [vmem:[#allocation3 + $0x52] sm:$0xff]
        %v4483 = vld [vmem:[#allocation3 + $0x5a] sm:$0xff]
        %v4484 = vld [vmem:[#allocation3 + $0x62] sm:$0xff]
        %v4485 = vld [vmem:[#allocation3 + $0x6a] sm:$0xff]
        %v4486 = vld [vmem:[#allocation3 + $0x72] sm:$0xff]
        %v4487 = vld [vmem:[#allocation3 + $0x7a] sm:$0xf]
        %s4488 = scalar_lea.vmem %s3, 56
        %v4489 = vld [vmem:[%s4488] sm:$0xff]
        %v4491 = vsel %vm3485, %v4475, 0
        %v4494 = vsel %vm3485, %v4476, 0
        %v4497 = vsel %vm3485, %v4477, 0
        %v4500 = vsel %vm3485, %v4478, 0
        %v4503 = vsel %vm3485, %v4479, 0
        %v4506 = vsel %vm3485, %v4480, 0
        %v4509 = vsel %vm3485, %v4481, 0
        %v4512 = vsel %vm3485, %v4482, 0
        %v4515 = vsel %vm3485, %v4483, 0
        %v4518 = vsel %vm3485, %v4484, 0
        %v4521 = vsel %vm3485, %v4485, 0
        %v4524 = vsel %vm3485, %v4486, 0
        %v4527 = vsel %vm3485, %v4487, 0
        %4529 = vmatpush.msra.mxu0 0.0
        %4530 = vmatpush.msra.mxu0 0.0
        %4531 = vmatpush.msra.mxu0 0.0
        %4532 = vmatpush.msra.mxu0 0.0
        %4533 = vmatpush.msra.mxu0 0.0
        %4534 = vmatpush.msra.mxu0 0.0
        %4535 = vmatpush.msra.mxu0 0.0
        %4536 = vmatpush.msra.mxu0 0.0
        %4537 = vmatpush.msra.mxu0 0.0
        %4538 = vmatpush.msra.mxu0 0.0
        %4539 = vmatpush.msra.mxu0 0.0
        %4540 = vmatpush.msra.mxu0 0.0
        %4541 = vmatpush.msra.mxu0 0.0
        %4542 = vmatpush.msra.mxu0 0.0
        %4543 = vmatpush.msra.mxu0 0.0
        %4544 = vmatpush.msra.mxu0 %v4489
        %4545 = vmatmul.f32.gmra.mxu0 %v4491
        %v4546 = vpop.f32.mrf.mxu0
        %v4547 = vadd.f32 0.0, %v4546
        %4548 = vmatmul.f32.gmra.mxu0 %v4494
        %v4549 = vpop.f32.mrf.mxu0
        %v4550 = vadd.f32 0.0, %v4549
        %4551 = vmatmul.f32.gmra.mxu0 %v4497
        %v4552 = vpop.f32.mrf.mxu0
        %v4553 = vadd.f32 0.0, %v4552
        %4554 = vmatmul.f32.gmra.mxu0 %v4500
        %v4555 = vpop.f32.mrf.mxu0
        %v4556 = vadd.f32 0.0, %v4555
        %4557 = vmatmul.f32.gmra.mxu0 %v4503
        %v4558 = vpop.f32.mrf.mxu0
        %v4559 = vadd.f32 0.0, %v4558
        %4560 = vmatmul.f32.gmra.mxu0 %v4506
        %v4561 = vpop.f32.mrf.mxu0
        %v4562 = vadd.f32 0.0, %v4561
        %4563 = vmatmul.f32.gmra.mxu0 %v4509
        %v4564 = vpop.f32.mrf.mxu0
        %v4565 = vadd.f32 0.0, %v4564
        %4566 = vmatmul.f32.gmra.mxu0 %v4512
        %v4567 = vpop.f32.mrf.mxu0
        %v4568 = vadd.f32 0.0, %v4567
        %4569 = vmatmul.f32.gmra.mxu0 %v4515
        %v4570 = vpop.f32.mrf.mxu0
        %v4571 = vadd.f32 0.0, %v4570
        %4572 = vmatmul.f32.gmra.mxu0 %v4518
        %v4573 = vpop.f32.mrf.mxu0
        %v4574 = vadd.f32 0.0, %v4573
        %4575 = vmatmul.f32.gmra.mxu0 %v4521
        %v4576 = vpop.f32.mrf.mxu0
        %v4577 = vadd.f32 0.0, %v4576
        %4578 = vmatmul.f32.gmra.mxu0 %v4524
        %v4579 = vpop.f32.mrf.mxu0
        %v4580 = vadd.f32 0.0, %v4579
        %4581 = vmatmul.f32.gmra.mxu0 %v4527
        %v4582 = vpop.f32.mrf.mxu0
        %v4583 = vadd.f32 0.0, %v4582
        %4584 = vdwg.mxu0
        %v4585 = vadd.f32 %v4462, %v4547
        %v4586 = vadd.f32 %v4463, %v4550
        %v4587 = vadd.f32 %v4464, %v4553
        %v4588 = vadd.f32 %v4465, %v4556
        %v4589 = vadd.f32 %v4466, %v4559
        %v4590 = vadd.f32 %v4467, %v4562
        %v4591 = vadd.f32 %v4468, %v4565
        %v4592 = vadd.f32 %v4469, %v4568
        %v4593 = vadd.f32 %v4470, %v4571
        %v4594 = vadd.f32 %v4471, %v4574
        %v4595 = vadd.f32 %v4472, %v4577
        %v4596 = vadd.f32 %v4473, %v4580
        %v4597 = vadd.f32 %v4474, %v4583
        %v4598 = vld [vmem:[#allocation3 + $0x1b] sm:$0xff]
        %v4599 = vld [vmem:[#allocation3 + $0x23] sm:$0xff]
        %v4600 = vld [vmem:[#allocation3 + $0x2b] sm:$0xff]
        %v4601 = vld [vmem:[#allocation3 + $0x33] sm:$0xff]
        %v4602 = vld [vmem:[#allocation3 + $0x3b] sm:$0xff]
        %v4603 = vld [vmem:[#allocation3 + $0x43] sm:$0xff]
        %v4604 = vld [vmem:[#allocation3 + $0x4b] sm:$0xff]
        %v4605 = vld [vmem:[#allocation3 + $0x53] sm:$0xff]
        %v4606 = vld [vmem:[#allocation3 + $0x5b] sm:$0xff]
        %v4607 = vld [vmem:[#allocation3 + $0x63] sm:$0xff]
        %v4608 = vld [vmem:[#allocation3 + $0x6b] sm:$0xff]
        %v4609 = vld [vmem:[#allocation3 + $0x73] sm:$0xff]
        %v4610 = vld [vmem:[#allocation3 + $0x7b] sm:$0xf]
        %s4611 = scalar_lea.vmem %s3, 64
        %v4612 = vld [vmem:[%s4611] sm:$0xff]
        %v4614 = vsel %vm3485, %v4598, 0
        %v4617 = vsel %vm3485, %v4599, 0
        %v4620 = vsel %vm3485, %v4600, 0
        %v4623 = vsel %vm3485, %v4601, 0
        %v4626 = vsel %vm3485, %v4602, 0
        %v4629 = vsel %vm3485, %v4603, 0
        %v4632 = vsel %vm3485, %v4604, 0
        %v4635 = vsel %vm3485, %v4605, 0
        %v4638 = vsel %vm3485, %v4606, 0
        %v4641 = vsel %vm3485, %v4607, 0
        %v4644 = vsel %vm3485, %v4608, 0
        %v4647 = vsel %vm3485, %v4609, 0
        %v4650 = vsel %vm3485, %v4610, 0
        %4652 = vmatpush.msra.mxu0 0.0
        %4653 = vmatpush.msra.mxu0 0.0
        %4654 = vmatpush.msra.mxu0 0.0
        %4655 = vmatpush.msra.mxu0 0.0
        %4656 = vmatpush.msra.mxu0 0.0
        %4657 = vmatpush.msra.mxu0 0.0
        %4658 = vmatpush.msra.mxu0 0.0
        %4659 = vmatpush.msra.mxu0 0.0
        %4660 = vmatpush.msra.mxu0 0.0
        %4661 = vmatpush.msra.mxu0 0.0
        %4662 = vmatpush.msra.mxu0 0.0
        %4663 = vmatpush.msra.mxu0 0.0
        %4664 = vmatpush.msra.mxu0 0.0
        %4665 = vmatpush.msra.mxu0 0.0
        %4666 = vmatpush.msra.mxu0 0.0
        %4667 = vmatpush.msra.mxu0 %v4612
        %4668 = vmatmul.f32.gmra.mxu0 %v4614
        %v4669 = vpop.f32.mrf.mxu0
        %v4670 = vadd.f32 0.0, %v4669
        %4671 = vmatmul.f32.gmra.mxu0 %v4617
        %v4672 = vpop.f32.mrf.mxu0
        %v4673 = vadd.f32 0.0, %v4672
        %4674 = vmatmul.f32.gmra.mxu0 %v4620
        %v4675 = vpop.f32.mrf.mxu0
        %v4676 = vadd.f32 0.0, %v4675
        %4677 = vmatmul.f32.gmra.mxu0 %v4623
        %v4678 = vpop.f32.mrf.mxu0
        %v4679 = vadd.f32 0.0, %v4678
        %4680 = vmatmul.f32.gmra.mxu0 %v4626
        %v4681 = vpop.f32.mrf.mxu0
        %v4682 = vadd.f32 0.0, %v4681
        %4683 = vmatmul.f32.gmra.mxu0 %v4629
        %v4684 = vpop.f32.mrf.mxu0
        %v4685 = vadd.f32 0.0, %v4684
        %4686 = vmatmul.f32.gmra.mxu0 %v4632
        %v4687 = vpop.f32.mrf.mxu0
        %v4688 = vadd.f32 0.0, %v4687
        %4689 = vmatmul.f32.gmra.mxu0 %v4635
        %v4690 = vpop.f32.mrf.mxu0
        %v4691 = vadd.f32 0.0, %v4690
        %4692 = vmatmul.f32.gmra.mxu0 %v4638
        %v4693 = vpop.f32.mrf.mxu0
        %v4694 = vadd.f32 0.0, %v4693
        %4695 = vmatmul.f32.gmra.mxu0 %v4641
        %v4696 = vpop.f32.mrf.mxu0
        %v4697 = vadd.f32 0.0, %v4696
        %4698 = vmatmul.f32.gmra.mxu0 %v4644
        %v4699 = vpop.f32.mrf.mxu0
        %v4700 = vadd.f32 0.0, %v4699
        %4701 = vmatmul.f32.gmra.mxu0 %v4647
        %v4702 = vpop.f32.mrf.mxu0
        %v4703 = vadd.f32 0.0, %v4702
        %4704 = vmatmul.f32.gmra.mxu0 %v4650
        %v4705 = vpop.f32.mrf.mxu0
        %v4706 = vadd.f32 0.0, %v4705
        %4707 = vdwg.mxu0
        %v4708 = vadd.f32 %v4585, %v4670
        %v4709 = vadd.f32 %v4586, %v4673
        %v4710 = vadd.f32 %v4587, %v4676
        %v4711 = vadd.f32 %v4588, %v4679
        %v4712 = vadd.f32 %v4589, %v4682
        %v4713 = vadd.f32 %v4590, %v4685
        %v4714 = vadd.f32 %v4591, %v4688
        %v4715 = vadd.f32 %v4592, %v4691
        %v4716 = vadd.f32 %v4593, %v4694
        %v4717 = vadd.f32 %v4594, %v4697
        %v4718 = vadd.f32 %v4595, %v4700
        %v4719 = vadd.f32 %v4596, %v4703
        %v4720 = vadd.f32 %v4597, %v4706
        %v4721 = vld [vmem:[%s4] sm:$0x1]
        %v4723 = vperm.slane %v4721, 0
        %v4725 = vadd.f32 %v4708, %v4723
        %v4726 = vadd.f32 %v4709, %v4723
        %v4727 = vadd.f32 %v4710, %v4723
        %v4728 = vadd.f32 %v4711, %v4723
        %v4729 = vadd.f32 %v4712, %v4723
        %v4730 = vadd.f32 %v4713, %v4723
        %v4731 = vadd.f32 %v4714, %v4723
        %v4732 = vadd.f32 %v4715, %v4723
        %v4733 = vadd.f32 %v4716, %v4723
        %v4734 = vadd.f32 %v4717, %v4723
        %v4735 = vadd.f32 %v4718, %v4723
        %v4736 = vadd.f32 %v4719, %v4723
        %v4737 = vadd.f32 %v4720, %v4723
        %v4738 = vmax.f32 %v4725, 0.0
        %v4739 = vmax.f32 %v4726, 0.0
        %v4740 = vmax.f32 %v4727, 0.0
        %v4741 = vmax.f32 %v4728, 0.0
        %v4742 = vmax.f32 %v4729, 0.0
        %v4743 = vmax.f32 %v4730, 0.0
        %v4744 = vmax.f32 %v4731, 0.0
        %v4745 = vmax.f32 %v4732, 0.0
        %v4746 = vmax.f32 %v4733, 0.0
        %v4747 = vmax.f32 %v4734, 0.0
        %v4748 = vmax.f32 %v4735, 0.0
        %v4749 = vmax.f32 %v4736, 0.0
        %v4750 = vmax.f32 %v4737, 0.0
        %vm4751 = vcmask 130048
        %4752 = vst.msk [vmem:[#allocation4] sm:$0xff] %vm4751, %v4738
        %4753 = vst.msk [vmem:[#allocation4 + $0x8] sm:$0xff] %vm4751, %v4739
        %4754 = vst.msk [vmem:[#allocation4 + $0x10] sm:$0xff] %vm4751, %v4740
        %4755 = vst.msk [vmem:[#allocation4 + $0x18] sm:$0xff] %vm4751, %v4741
        %4756 = vst.msk [vmem:[#allocation4 + $0x20] sm:$0xff] %vm4751, %v4742
        %4757 = vst.msk [vmem:[#allocation4 + $0x28] sm:$0xff] %vm4751, %v4743
        %4758 = vst.msk [vmem:[#allocation4 + $0x30] sm:$0xff] %vm4751, %v4744
        %4759 = vst.msk [vmem:[#allocation4 + $0x38] sm:$0xff] %vm4751, %v4745
        %4760 = vst.msk [vmem:[#allocation4 + $0x40] sm:$0xff] %vm4751, %v4746
        %4761 = vst.msk [vmem:[#allocation4 + $0x48] sm:$0xff] %vm4751, %v4747
        %4762 = vst.msk [vmem:[#allocation4 + $0x50] sm:$0xff] %vm4751, %v4748
        %4763 = vst.msk [vmem:[#allocation4 + $0x58] sm:$0xff] %vm4751, %v4749
        %vm4764 = vcmask 125952
        %4765 = vst.msk [vmem:[#allocation4 + $0x60] sm:$0xf] %vm4764, %v4750
        %4766 = vst.msk [vmem:[#allocation5] sm:$0xff] %vm4751, 0.0
        %4767 = vst.msk [vmem:[#allocation5 + $0x8] sm:$0xff] %vm4751, 0.0
        %4768 = vst.msk [vmem:[#allocation5 + $0x10] sm:$0xff] %vm4751, 0.0
        %4769 = vst.msk [vmem:[#allocation5 + $0x18] sm:$0xff] %vm4751, 0.0
        %4770 = vst.msk [vmem:[#allocation5 + $0x20] sm:$0xf] %vm4764, 0.0
        %s4771 = scalar_lea.vmem [#allocation4], 11
        %v4772 = vld [vmem:[%s4771] ss:$2 sm:$0xf]
        %s4773 = scalar_lea.vmem [#allocation4], 12
        %v4774 = vld [vmem:[%s4773] ss:$2 sm:$0xf]
        %s4775 = scalar_lea.vmem [#allocation4], 21
        %v4776 = vld [vmem:[%s4775] ss:$2 sm:$0xf]
        %s4777 = scalar_lea.vmem [#allocation4], 22
        %v4778 = vld [vmem:[%s4777] ss:$2 sm:$0xf]
        %v4779 = vmax.f32 %v4772, %v4774
        %v4780 = vmax.f32 %v4776, %v4778
        %v4781 = vmax.f32 %v4779, %v4780
        %4782 = vst.msk [vmem:[#allocation5 + $0x7] sm:$0xf] %vm4764, %v4781
        %s4783 = scalar_lea.vmem [#allocation4], 31
        %v4784 = vld [vmem:[%s4783] ss:$2 sm:$0xf]
        %s4785 = scalar_lea.vmem [#allocation4], 32
        %v4786 = vld [vmem:[%s4785] ss:$2 sm:$0xf]
        %s4787 = scalar_lea.vmem [#allocation4], 41
        %v4788 = vld [vmem:[%s4787] ss:$2 sm:$0xf]
        %s4789 = scalar_lea.vmem [#allocation4], 42
        %v4790 = vld [vmem:[%s4789] ss:$2 sm:$0xf]
        %v4791 = vmax.f32 %v4784, %v4786
        %v4792 = vmax.f32 %v4788, %v4790
        %v4793 = vmax.f32 %v4791, %v4792
        %4794 = vst.msk [vmem:[#allocation5 + $0xd] sm:$0xf] %vm4764, %v4793
        %s4795 = scalar_lea.vmem [#allocation4], 51
        %v4796 = vld [vmem:[%s4795] ss:$2 sm:$0xf]
        %s4797 = scalar_lea.vmem [#allocation4], 52
        %v4798 = vld [vmem:[%s4797] ss:$2 sm:$0xf]
        %s4799 = scalar_lea.vmem [#allocation4], 61
        %v4800 = vld [vmem:[%s4799] ss:$2 sm:$0xf]
        %s4801 = scalar_lea.vmem [#allocation4], 62
        %v4802 = vld [vmem:[%s4801] ss:$2 sm:$0xf]
        %v4803 = vmax.f32 %v4796, %v4798
        %v4804 = vmax.f32 %v4800, %v4802
        %v4805 = vmax.f32 %v4803, %v4804
        %4806 = vst.msk [vmem:[#allocation5 + $0x13] sm:$0xf] %vm4764, %v4805
        %s4807 = scalar_lea.vmem [#allocation4], 71
        %v4808 = vld [vmem:[%s4807] ss:$2 sm:$0xf]
        %s4809 = scalar_lea.vmem [#allocation4], 72
        %v4810 = vld [vmem:[%s4809] ss:$2 sm:$0xf]
        %s4811 = scalar_lea.vmem [#allocation4], 81
        %v4812 = vld [vmem:[%s4811] ss:$2 sm:$0xf]
        %s4813 = scalar_lea.vmem [#allocation4], 82
        %v4814 = vld [vmem:[%s4813] ss:$2 sm:$0xf]
        %v4815 = vmax.f32 %v4808, %v4810
        %v4816 = vmax.f32 %v4812, %v4814
        %v4817 = vmax.f32 %v4815, %v4816
        %4818 = vst.msk [vmem:[#allocation5 + $0x19] sm:$0xf] %vm4764, %v4817
        %v4819 = vld [vmem:[%s6] sm:$0x1]
        %v4820 = vld [vmem:[#allocation5 + $0x7] sm:$0x1]
        %v4821 = vadd.f32 %v4820, 0.0
        %v4822 = vld [vmem:[#allocation5 + $0x8] sm:$0x1]
        %v4823 = vadd.f32 %v4821, %v4822
        %v4824 = vld [vmem:[#allocation5 + $0xd] sm:$0x1]
        %v4825 = vadd.f32 %v4823, %v4824
        %v4826 = vld [vmem:[#allocation5 + $0xe] sm:$0x1]
        %v4827 = vadd.f32 %v4825, %v4826
        %v4828 = vmul.f32 %v4827, 0.25
        %v4829 = vld [vmem:[%s5] sm:$0xff]
        %v4830 = vld [vmem:[%s5 + $0x8] sm:$0xff]
        %v4832 = vsel %vm4751, %v4828, 0
        %4834 = vmatpush.msra.mxu0 0.0
        %4835 = vmatpush.msra.mxu0 0.0
        %4836 = vmatpush.msra.mxu0 0.0
        %4837 = vmatpush.msra.mxu0 0.0
        %4838 = vmatpush.msra.mxu0 0.0
        %4839 = vmatpush.msra.mxu0 0.0
        %4840 = vmatpush.msra.mxu0 0.0
        %4841 = vmatpush.msra.mxu0 0.0
        %4842 = vmatpush.msra.mxu0 0.0
        %4843 = vmatpush.msra.mxu0 0.0
        %4844 = vmatpush.msra.mxu0 0.0
        %4845 = vmatpush.msra.mxu0 0.0
        %4846 = vmatpush.msra.mxu0 0.0
        %4847 = vmatpush.msra.mxu0 0.0
        %4848 = vmatpush.msra.mxu0 %v4830
        %4849 = vmatpush.msra.mxu0 %v4829
        %4850 = vmatmul.f32.gmra.mxu0 %v4832
        %v4851 = vpop.f32.mrf.mxu0
        %v4852 = vadd.f32 0.0, %v4851
        %4853 = vdwg.mxu0
        %v4854 = vadd.f32 %v4819, %v4852
        %v4855 = vld [vmem:[#allocation5 + $0x9] sm:$0x1]
        %v4856 = vadd.f32 %v4855, 0.0
        %v4857 = vld [vmem:[#allocation5 + $0xa] sm:$0x1]
        %v4858 = vadd.f32 %v4856, %v4857
        %v4859 = vld [vmem:[#allocation5 + $0xf] sm:$0x1]
        %v4860 = vadd.f32 %v4858, %v4859
        %v4861 = vld [vmem:[#allocation5 + $0x10] sm:$0x1]
        %v4862 = vadd.f32 %v4860, %v4861
        %v4863 = vmul.f32 %v4862, 0.25
        %s4864 = scalar_lea.vmem %s5, 16
        %v4865 = vld [vmem:[%s4864] sm:$0xff]
        %v4866 = vld [vmem:[%s4864 + $0x8] sm:$0xff]
        %v4868 = vsel %vm4751, %v4863, 0
        %4870 = vmatpush.msra.mxu0 0.0
        %4871 = vmatpush.msra.mxu0 0.0
        %4872 = vmatpush.msra.mxu0 0.0
        %4873 = vmatpush.msra.mxu0 0.0
        %4874 = vmatpush.msra.mxu0 0.0
        %4875 = vmatpush.msra.mxu0 0.0
        %4876 = vmatpush.msra.mxu0 0.0
        %4877 = vmatpush.msra.mxu0 0.0
        %4878 = vmatpush.msra.mxu0 0.0
        %4879 = vmatpush.msra.mxu0 0.0
        %4880 = vmatpush.msra.mxu0 0.0
        %4881 = vmatpush.msra.mxu0 0.0
        %4882 = vmatpush.msra.mxu0 0.0
        %4883 = vmatpush.msra.mxu0 0.0
        %4884 = vmatpush.msra.mxu0 %v4866
        %4885 = vmatpush.msra.mxu0 %v4865
        %4886 = vmatmul.f32.gmra.mxu0 %v4868
        %v4887 = vpop.f32.mrf.mxu0
        %v4888 = vadd.f32 0.0, %v4887
        %4889 = vdwg.mxu0
        %v4890 = vadd.f32 %v4854, %v4888
        %v4891 = vld [vmem:[#allocation5 + $0x13] sm:$0x1]
        %v4892 = vadd.f32 %v4891, 0.0
        %v4893 = vld [vmem:[#allocation5 + $0x14] sm:$0x1]
        %v4894 = vadd.f32 %v4892, %v4893
        %v4895 = vld [vmem:[#allocation5 + $0x19] sm:$0x1]
        %v4896 = vadd.f32 %v4894, %v4895
        %v4897 = vld [vmem:[#allocation5 + $0x1a] sm:$0x1]
        %v4898 = vadd.f32 %v4896, %v4897
        %v4899 = vmul.f32 %v4898, 0.25
        %s4900 = scalar_lea.vmem %s5, 32
        %v4901 = vld [vmem:[%s4900] sm:$0xff]
        %v4902 = vld [vmem:[%s4900 + $0x8] sm:$0xff]
        %v4904 = vsel %vm4751, %v4899, 0
        %4906 = vmatpush.msra.mxu0 0.0
        %4907 = vmatpush.msra.mxu0 0.0
        %4908 = vmatpush.msra.mxu0 0.0
        %4909 = vmatpush.msra.mxu0 0.0
        %4910 = vmatpush.msra.mxu0 0.0
        %4911 = vmatpush.msra.mxu0 0.0
        %4912 = vmatpush.msra.mxu0 0.0
        %4913 = vmatpush.msra.mxu0 0.0
        %4914 = vmatpush.msra.mxu0 0.0
        %4915 = vmatpush.msra.mxu0 0.0
        %4916 = vmatpush.msra.mxu0 0.0
        %4917 = vmatpush.msra.mxu0 0.0
        %4918 = vmatpush.msra.mxu0 0.0
        %4919 = vmatpush.msra.mxu0 0.0
        %4920 = vmatpush.msra.mxu0 %v4902
        %4921 = vmatpush.msra.mxu0 %v4901
        %4922 = vmatmul.f32.gmra.mxu0 %v4904
        %v4923 = vpop.f32.mrf.mxu0
        %v4924 = vadd.f32 0.0, %v4923
        %4925 = vdwg.mxu0
        %v4926 = vadd.f32 %v4890, %v4924
        %v4927 = vld [vmem:[#allocation5 + $0x15] sm:$0x1]
        %v4928 = vadd.f32 %v4927, 0.0
        %v4929 = vld [vmem:[#allocation5 + $0x16] sm:$0x1]
        %v4930 = vadd.f32 %v4928, %v4929
        %v4931 = vld [vmem:[#allocation5 + $0x1b] sm:$0x1]
        %v4932 = vadd.f32 %v4930, %v4931
        %v4933 = vld [vmem:[#allocation5 + $0x1c] sm:$0x1]
        %v4934 = vadd.f32 %v4932, %v4933
        %v4935 = vmul.f32 %v4934, 0.25
        %s4936 = scalar_lea.vmem %s5, 48
        %v4937 = vld [vmem:[%s4936] sm:$0xff]
        %v4938 = vld [vmem:[%s4936 + $0x8] sm:$0xff]
        %v4940 = vsel %vm4751, %v4935, 0
        %4942 = vmatpush.msra.mxu0 0.0
        %4943 = vmatpush.msra.mxu0 0.0
        %4944 = vmatpush.msra.mxu0 0.0
        %4945 = vmatpush.msra.mxu0 0.0
        %4946 = vmatpush.msra.mxu0 0.0
        %4947 = vmatpush.msra.mxu0 0.0
        %4948 = vmatpush.msra.mxu0 0.0
        %4949 = vmatpush.msra.mxu0 0.0
        %4950 = vmatpush.msra.mxu0 0.0
        %4951 = vmatpush.msra.mxu0 0.0
        %4952 = vmatpush.msra.mxu0 0.0
        %4953 = vmatpush.msra.mxu0 0.0
        %4954 = vmatpush.msra.mxu0 0.0
        %4955 = vmatpush.msra.mxu0 0.0
        %4956 = vmatpush.msra.mxu0 %v4938
        %4957 = vmatpush.msra.mxu0 %v4937
        %4958 = vmatmul.f32.gmra.mxu0 %v4940
        %v4959 = vpop.f32.mrf.mxu0
        %v4960 = vadd.f32 0.0, %v4959
        %4961 = vdwg.mxu0
        %v4962 = vadd.f32 %v4926, %v4960
        %v4963 = vmax.f32 %v4962, 0.0
        %v4964 = vld [vmem:[%s7] sm:$0xff]
        %v4965 = vld [vmem:[%s7 + $0x8] sm:$0xff]
        %v4966 = vld [vmem:[%s8] sm:$0x1]
        %v4968 = vsel %vm4751, %v4963, 0
        %4970 = vmatpush.msra.mxu0 0.0
        %4971 = vmatpush.msra.mxu0 0.0
        %4972 = vmatpush.msra.mxu0 0.0
        %4973 = vmatpush.msra.mxu0 0.0
        %4974 = vmatpush.msra.mxu0 0.0
        %4975 = vmatpush.msra.mxu0 0.0
        %4976 = vmatpush.msra.mxu0 0.0
        %4977 = vmatpush.msra.mxu0 0.0
        %4978 = vmatpush.msra.mxu0 0.0
        %4979 = vmatpush.msra.mxu0 0.0
        %4980 = vmatpush.msra.mxu0 0.0
        %4981 = vmatpush.msra.mxu0 0.0
        %4982 = vmatpush.msra.mxu0 0.0
        %4983 = vmatpush.msra.mxu0 0.0
        %4984 = vmatpush.msra.mxu0 %v4965
        %4985 = vmatpush.msra.mxu0 %v4964
        %4986 = vmatmul.f32.gmra.mxu0 %v4968
        %v4987 = vpop.f32.mrf.mxu0
        %v4988 = vadd.f32 %v4966, %v4987
        %4989 = vdwg.mxu0
        %v4990 = vmul.f32 %v4988, 2.0
        %vm4991 = vcmask 73728
        %4992 = vst.msk [vmem:[%s324] sm:$0x1] %vm4991, %v4990
        %s4993 = sand.u32 %s225, 1
        %s4994 = scalar_lea.sflag [#allocation7], %s4993
        %s4995 = sand.u32 %s225, 1
        %s4996 = scalar_lea.vmem [#allocation6], %s4995
        // Predicated region
        $region57: #{tpu_custom_call.1} parent=55 // pred_check
          %p4997 = pneg %p235
        $region58: #{tpu_custom_call.1} parent=55 // pred_check_branch
          %4999 = sbr.rel (%p4997) target = $region60
        $region59: #{tpu_custom_call.1} parent=55 // pred_region
          %5001 = vsyncadd %s4994, 0
          %s5002 = scalar_lea.hbm %s9, %s23
          %s5004 = sshll.u32 %s4996, 4
          %s5005 = int_to_ptr.vmem [resolvable:$true] %s5004
          %s5006 = sshll.u32 %s5002, 4
          %s5007 = int_to_ptr.hbm [resolvable:$true] %s5006
          %5009 = dma.vmem_to_hbm [thread:$0]  %s5005, 16, %s5007, %s4994
        $region60: #{tpu_custom_call.1} parent=55 // pred_fallthru
          _
      $region56: #{tpu_custom_call.1} parent=5 // pred_fallthru
        _
      %p5010 = scmp.le.s32.totalorder 2, %s18
      // Predicated region
      $region61: #{tpu_custom_call.1} parent=5 // pred_check
        %p5011 = pneg %p5010
      $region62: #{tpu_custom_call.1} parent=5 // pred_check_branch
        %5013 = sbr.rel (%p5011) target = $region64
      $region63: #{tpu_custom_call.1} parent=5 // pred_region
        %s5014 = ssub.s32 %s18, 2
        // Predicated region
        $region65: #{tpu_custom_call.1} parent=63 // pred_check
          %p5015 = pneg %p241
        $region66: #{tpu_custom_call.1} parent=63 // pred_check_branch
          %5017 = sbr.rel (%p5015) target = $region68
        $region67: #{tpu_custom_call.1} parent=63 // pred_region
          %s5018 = sand.u32 %s226, 1
          %s5019 = scalar_lea.sflag [#allocation7], %s5018
          %s5020 = sand.u32 %s226, 1
          %s5021 = scalar_lea.vmem [#allocation6], %s5020
          %5023 = dma.done %s5019, 16
        $region68: #{tpu_custom_call.1} parent=63 // pred_fallthru
          _
      $region64: #{tpu_custom_call.1} parent=5 // pred_fallthru
        _
    $region6: #{tpu_custom_call.1} parent=1 // loop_footer
      %s22 = sadd.s32 1, %s18
    $region7: #{tpu_custom_call.1} parent=1 // loop_footer_branch
      %17 = sbr.rel target = $region3
    $region8: #{tpu_custom_call.1} parent=1 // loop_exit
      _
    %5024 = vsyncpa [#allocation7], 1
    %s5025 = scalar_lea.sflag [#allocation7], 1
    %5026 = vsyncpa %s5025, 1

</llo_original>
